<compile_context>
chip_gen: v5e
topology: v5e:2x2
jax: 0.10.0
libtpu: 0.0.40
codegen_flags: <defaults>
</compile_context>

<pallas_src>
import jax
import jax.numpy as jnp
from jax import lax
from jax.experimental import pallas as pl
from jax.experimental.pallas import tpu as pltpu

EPS = 1e-5      # PyTorch BatchNorm2d default eps
LANE = 128      # TPU lane width


def _round_up(x, m):
    return (x + m - 1) // m * m


# ----------------------------- in-kernel helpers ---------------------------- #

def _bn_relu(y, gamma, beta, relu):
    """Train-mode batch norm over the rows of an (M, C) f32 slab (biased var),
    two-pass mean/var for robustness now that matmul operands are bf16."""
    mean = jnp.mean(y, axis=0, keepdims=True)
    var = jnp.mean(jnp.square(y - mean), axis=0, keepdims=True)
    scale = gamma * lax.rsqrt(var + EPS)          # (1, C)
    out = (y - mean) * scale + beta
    if relu:
        out = jnp.maximum(out, 0.0)
    return out


def _halo_rows(full_extent, s):
    """Rows of the stride-de-interleaved padded scratch that are read by the
    3 conv taps but never written by the y1 scatter -> must be zeroed.
    Returns [(parity, lo, hi), ...] as Python ints (trace-time)."""
    q = full_extent // s                       # scatter-written length / parity
    ranges = []
    for par in range(s):
        taps = [d for d in range(3) if d % s == par]
        if not taps:
            continue
        read_lo = min(d // s for d in taps)
        read_hi = max(d // s for d in taps) + q
        w_lo = 1 if par == 0 else 0            # scatter writes [w_lo, w_lo + q)
        if read_lo < w_lo:
            ranges.append((par, read_lo, w_lo))
        if w_lo + q < read_hi:
            ranges.append((par, w_lo + q, read_hi))
    return ranges


def _make_kernel(N, H, W, Cin_p, Cmid_p, Cout_p, s, proj):
    Hq, Wq = H // s, W // s                    # de-interleaved spatial extents
    Ho, Wo = Hq, Wq                            # conv2 output extents (k=3, p=1)
    M1, Mo = N * H * W, N * Ho * Wo
    Hpq = (H + 2 + s - 1) // s                 # padded, de-interleaved extents
    Wpq = (W + 2 + s - 1) // s
    h_halo = _halo_rows(H, s)
    w_halo = _halo_rows(W, s)

    def kernel(*refs):
        if proj:
            (x_ref, w1_ref, w2_ref, w3_ref, wsc_ref,
             g1_ref, b1_ref, g2_ref, b2_ref, g3_ref, b3_ref,
             gsc_ref, bsc_ref, out_ref, y1p_ref) = refs
        else:
            (x_ref, w1_ref, w2_ref, w3_ref,
             g1_ref, b1_ref, g2_ref, b2_ref, g3_ref, b3_ref,
             out_ref, y1p_ref) = refs
            wsc_ref = gsc_ref = bsc_ref = None

        # ---- stage 1: conv1 (1x1) + bn1 + relu (bf16 MXU, f32 accum) --------
        x2d = x_ref[...].reshape(M1, Cin_p)
        y1 = jnp.dot(x2d.astype(jnp.bfloat16), w1_ref[...],
                     preferred_element_type=jnp.float32)
        y1 = _bn_relu(y1, g1_ref[...], b1_ref[...], relu=True)

        # Zero ONLY the halo border of the padded, de-interleaved scratch.
        for (par, lo, hi) in h_halo:
            y1p_ref[par, :, :, lo:hi, :, :] = jnp.zeros(
                (s, N, hi - lo, Wpq, Cmid_p), jnp.bfloat16)
        for (par, lo, hi) in w_halo:
            y1p_ref[:, par, :, :, lo:hi, :] = jnp.zeros(
                (s, N, Hpq, hi - lo, Cmid_p), jnp.bfloat16)

        # Scatter y1 (bf16, 128-lane dense) into the interior:
        # y1p[ph, pw, n, i, j, c] == y1_padded[n, s*i + ph, s*j + pw, c]
        y1_6d = y1.astype(jnp.bfloat16).reshape(N, s, Hq, s, Wq, Cmid_p)
        for a in range(s):
            pa, oa = (a + 1) % s, (a + 1) // s
            for b in range(s):
                pb, ob = (b + 1) % s, (b + 1) // s
                y1p_ref[pa, pb, :, oa:oa + Hq, ob:ob + Wq, :] = \
                    y1_6d[:, a, :, b, :, :]

        # ---- stage 2: conv2 (3x3, stride s, pad 1) as 3 fused-K matmuls -----
        # Per kernel row dh, the 3 horizontal taps are concatenated along the
        # lane axis into a K = 3*Cmid_p lhs and contracted in one MXU call.
        acc = None
        for dh in range(3):
            slabs = [
                y1p_ref[dh % s, dw % s, :,
                        dh // s:dh // s + Ho,
                        dw // s:dw // s + Wo, :].reshape(Mo, Cmid_p)
                for dw in range(3)
            ]
            lhs = jnp.concatenate(slabs, axis=-1)          # (Mo, 3*Cmid_p) bf16
            part = jnp.dot(lhs, w2_ref[dh], preferred_element_type=jnp.float32)
            acc = part if acc is None else acc + part
        y2 = _bn_relu(acc, g2_ref[...], b2_ref[...], relu=True)

        # ---- stage 3: conv3 (1x1) + bn3, shortcut, add, relu ----------------
        main = jnp.dot(y2.astype(jnp.bfloat16), w3_ref[...],
                       preferred_element_type=jnp.float32)
        main = _bn_relu(main, g3_ref[...], b3_ref[...], relu=False)

        x_sub = x_ref[:, 0, :, 0, :, :].reshape(Mo, Cin_p)   # x[:, ::s, ::s, :]
        if proj:
            sc = jnp.dot(x_sub.astype(jnp.bfloat16), wsc_ref[...],
                         preferred_element_type=jnp.float32)
            sc = _bn_relu(sc, gsc_ref[...], bsc_ref[...], relu=False)
        else:
            sc = x_sub       # identity: Cin_p == Cout_p, padded channels are 0

        out_ref[...] = jnp.maximum(main + sc, 0.0).astype(out_ref.dtype)

    return kernel


# ------------------------------ pallas_call glue ---------------------------- #

def _full_spec(shape):
    """BlockSpec covering a whole (small) array as a single VMEM block."""
    zeros = (0,) * len(shape)
    return pl.BlockSpec(shape, lambda i, z=zeros: z)


def bottleneck_forward(x_nchw, p, stride):
    """Fused Bottleneck forward.  x_nchw: (N, Cin, H, W) f32.  Returns NCHW f32."""
    N, Cin, H, W = x_nchw.shape
    s = int(stride)
    assert H % s == 0 and W % s == 0, "spatial dims must be divisible by stride"
    Cmid = p["w1"].shape[-1]
    Cout = p["w3"].shape[-1]
    proj = (s != 1) or (Cin != Cout)
    if not proj:
        assert Cin == Cout

    Hq, Wq = H // s, W // s
    Ho, Wo = Hq, Wq
    M1, Mo = N * H * W, N * Ho * Wo
    Hpq = (H + 2 + s - 1) // s
    Wpq = (W + 2 + s - 1) // s

    # Lane-dense channel padding; padded channels stay exactly 0 everywhere
    # because weights and BN gamma/beta are zero-padded.
    Cin_p = _round_up(Cin, LANE)
    Cmid_p = _round_up(Cmid, LANE)
    Cout_p = _round_up(Cout, LANE)

    # NCHW -> NHWC, zero-pad channels, stride-de-interleave to
    # (N, s, H/s, s, W/s, Cin_p) so every in-kernel strided access is static.
    x = jnp.transpose(x_nchw, (0, 2, 3, 1))
    x = jnp.pad(x, ((0, 0), (0, 0), (0, 0), (0, Cin_p - Cin)))
    x_r = x.reshape(N, Hq, s, Wq, s, Cin_p).transpose(0, 2, 1, 4, 3, 5)

    def pad2(w, r, c):
        return jnp.pad(w, ((0, r - w.shape[0]), (0, c - w.shape[1])))

    def padv(v, c):
        return jnp.pad(v, ((0, 0), (0, c - v.shape[1])))

    bf16 = jnp.bfloat16
    w1p = pad2(p["w1"], Cin_p, Cmid_p).astype(bf16)
    # conv2 HWIO (3,3,Cmid,Cmid) -> per-kernel-row packed K: (3, 3*Cmid_p, Cmid_p)
    w2p = jnp.zeros((3, 3 * Cmid_p, Cmid_p), jnp.float32)
    for dh in range(3):
        for dw in range(3):
            w2p = w2p.at[dh, dw * Cmid_p:dw * Cmid_p + Cmid, :Cmid].set(
                p["w2"][dh, dw])
    w2p = w2p.astype(bf16)
    w3p = pad2(p["w3"], Cmid_p, Cout_p).astype(bf16)

    inputs = [x_r, w1p, w2p, w3p]
    if proj:
        inputs.append(pad2(p["wsc"], Cin_p, Cout_p).astype(bf16))
    inputs += [padv(p["g1"], Cmid_p), padv(p["b1"], Cmid_p),
               padv(p["g2"], Cmid_p), padv(p["b2"], Cmid_p),
               padv(p["g3"], Cout_p), padv(p["b3"], Cout_p)]
    if proj:
        inputs += [padv(p["gsc"], Cout_p), padv(p["bsc"], Cout_p)]

    flops = 2 * (M1 * Cin_p * Cmid_p + 3 * Mo * (3 * Cmid_p) * Cmid_p
                 + Mo * Cmid_p * Cout_p + (Mo * Cin_p * Cout_p if proj else 0))
    transcendentals = 2 * Cmid_p + Cout_p + (Cout_p if proj else 0)
    bytes_accessed = sum(int(a.size) * a.dtype.itemsize for a in inputs) \
        + Mo * Cout_p * 4

    kernel = _make_kernel(N, H, W, Cin_p, Cmid_p, Cout_p, s, proj)
    out2d = pl.pallas_call(
        kernel,
        out_shape=jax.ShapeDtypeStruct((Mo, Cout_p), jnp.float32),
        grid=(1,),
        in_specs=[_full_spec(a.shape) for a in inputs],
        out_specs=_full_spec((Mo, Cout_p)),
        scratch_shapes=[pltpu.VMEM((s, s, N, Hpq, Wpq, Cmid_p), jnp.bfloat16)],
        compiler_params=pltpu.CompilerParams(
            dimension_semantics=("arbitrary",),
            vmem_limit_bytes=48 * 1024 * 1024),
        cost_estimate=pl.CostEstimate(flops=flops,
                                      transcendentals=transcendentals,
                                      bytes_accessed=bytes_accessed),
    )(*inputs)

    # Host-side epilogue: drop the channel padding, back to NCHW for the
    # PyTorch-facing interface.  (An NHWC consumer could use out2d directly.)
    out = out2d[:, :Cout].reshape(N, Ho, Wo, Cout)
    return jnp.transpose(out, (0, 3, 1, 2))


# ------------------------------ pure-JAX reference -------------------------- #

def ref_forward(x_nchw, p, stride):
    x = jnp.transpose(x_nchw, (0, 2, 3, 1))
    dn = ("NHWC", "HWIO", "NHWC")

    def bn(y, g, b):
        mean = jnp.mean(y, axis=(0, 1, 2), keepdims=True)
        var = jnp.mean((y - mean) ** 2, axis=(0, 1, 2), keepdims=True)
        return (y - mean) * lax.rsqrt(var + EPS) * g.reshape(1, 1, 1, -1) \
            + b.reshape(1, 1, 1, -1)

    y = lax.conv_general_dilated(x, p["w1"].reshape(1, 1, *p["w1"].shape),
                                 (1, 1), "VALID", dimension_numbers=dn)
    y = jax.nn.relu(bn(y, p["g1"], p["b1"]))
    y = lax.conv_general_dilated(y, p["w2"], (stride, stride), ((1, 1), (1, 1)),
                                 dimension_numbers=dn)
    y = jax.nn.relu(bn(y, p["g2"], p["b2"]))
    y = lax.conv_general_dilated(y, p["w3"].reshape(1, 1, *p["w3"].shape),
                                 (1, 1), "VALID", dimension_numbers=dn)
    y = bn(y, p["g3"], p["b3"])

    Cin = x.shape[-1]
    Cout = p["w3"].shape[-1]
    if stride != 1 or Cin != Cout:
        sc = lax.conv_general_dilated(x, p["wsc"].reshape(1, 1, *p["wsc"].shape),
                                      (stride, stride), "VALID",
                                      dimension_numbers=dn)
        sc = bn(sc, p["gsc"], p["bsc"])
    else:
        sc = x
    out = jax.nn.relu(y + sc)
    return jnp.transpose(out, (0, 3, 1, 2))


# ----------------------------------- main ----------------------------------- #

def make_params(key, Cin, Cmid, Cout, proj):
    ks = jax.random.split(key, 12)
    p = {
        "w1": 0.1 * jax.random.normal(ks[0], (Cin, Cmid), jnp.float32),
        "w2": 0.1 * jax.random.normal(ks[1], (3, 3, Cmid, Cmid), jnp.float32),
        "w3": 0.1 * jax.random.normal(ks[2], (Cmid, Cout), jnp.float32),
        "g1": 1.0 + 0.1 * jax.random.normal(ks[3], (1, Cmid), jnp.float32),
        "b1": 0.1 * jax.random.normal(ks[4], (1, Cmid), jnp.float32),
        "g2": 1.0 + 0.1 * jax.random.normal(ks[5], (1, Cmid), jnp.float32),
        "b2": 0.1 * jax.random.normal(ks[6], (1, Cmid), jnp.float32),
        "g3": 1.0 + 0.1 * jax.random.normal(ks[7], (1, Cout), jnp.float32),
        "b3": 0.1 * jax.random.normal(ks[8], (1, Cout), jnp.float32),
    }
    if proj:
        p["wsc"] = 0.1 * jax.random.normal(ks[9], (Cin, Cout), jnp.float32)
        p["gsc"] = 1.0 + 0.1 * jax.random.normal(ks[10], (1, Cout), jnp.float32)
        p["bsc"] = 0.1 * jax.random.normal(ks[11], (1, Cout), jnp.float32)
    return p


if __name__ == "__main__":
    root = jax.random.PRNGKey(0)
    kp1, kx1, kp2, kx2 = jax.random.split(root, 4)

    # bf16 MXU operands vs f32 reference -> relaxed (but still tight) tolerance.
    RTOL = ATOL = 5e-2

    # Case 1: projection shortcut — Bottleneck(in=16, out=8, stride=2),
    # expansion 4 -> Cout = 32; x: (N=2, C=16, H=16, W=16) NCHW.
    N, Cin, H, W, Cmid, stride = 2, 16, 16, 16, 8, 2
    Cout = Cmid * 4
    p = make_params(kp1, Cin, Cmid, Cout, proj=True)
    x = jax.random.normal(kx1, (N, Cin, H, W), jnp.float32)

    out = jax.block_until_ready(bottleneck_forward(x, p, stride))
    ref = jax.block_until_ready(ref_forward(x, p, stride))
    assert out.shape == (N, Cout, H // stride, W // stride), out.shape
    err = float(jnp.max(jnp.abs(out - ref)))
    assert jnp.allclose(out, ref, rtol=RTOL, atol=ATOL), f"case1 max err {err}"

    # Case 2: identity shortcut — stride=1, in_channels == out_channels*4.
    Cin2 = Cout
    p2 = make_params(kp2, Cin2, Cmid, Cout, proj=False)
    x2 = jax.random.normal(kx2, (N, Cin2, H, W), jnp.float32)

    out2 = jax.block_until_ready(bottleneck_forward(x2, p2, 1))
    ref2 = jax.block_until_ready(ref_forward(x2, p2, 1))
    assert out2.shape == (N, Cout, H, W), out2.shape
    err2 = float(jnp.max(jnp.abs(out2 - ref2)))
    assert jnp.allclose(out2, ref2, rtol=RTOL, atol=ATOL), f"case2 max err {err2}"

    print("KERNEL_OK")
</pallas_src>

<mosaic_0001>
module attributes {stable_mosaic.version = 11 : i64} {
  func.func @kernel(%arg0: i32, %arg1: memref<2x2x8x2x8x128xf32, #tpu.memory_space<vmem>>, %arg2: memref<128x128xbf16, #tpu.memory_space<vmem>>, %arg3: memref<3x384x128xbf16, #tpu.memory_space<vmem>>, %arg4: memref<128x128xbf16, #tpu.memory_space<vmem>>, %arg5: memref<128x128xbf16, #tpu.memory_space<vmem>>, %arg6: memref<1x128xf32, #tpu.memory_space<vmem>>, %arg7: memref<1x128xf32, #tpu.memory_space<vmem>>, %arg8: memref<1x128xf32, #tpu.memory_space<vmem>>, %arg9: memref<1x128xf32, #tpu.memory_space<vmem>>, %arg10: memref<1x128xf32, #tpu.memory_space<vmem>>, %arg11: memref<1x128xf32, #tpu.memory_space<vmem>>, %arg12: memref<1x128xf32, #tpu.memory_space<vmem>>, %arg13: memref<1x128xf32, #tpu.memory_space<vmem>>, %arg14: memref<128x128xf32, #tpu.memory_space<vmem>>, %arg15: memref<2x2x2x9x9x128xbf16, #tpu.memory_space<vmem>>) attributes {dimension_semantics = [#tpu.dimension_semantics<arbitrary>], iteration_bounds = array<i64: 1>, scalar_prefetch = 0 : i64, scratch_operands = 1 : i64, tpu.core_type = #tpu.core_type<tc>, window_params = [{pipeline_mode = #tpu.pipeline_mode<synchronous>, transform_indices = @transform_0, window_bounds = array<i64: 2, 2, 8, 2, 8, 128>}, {pipeline_mode = #tpu.pipeline_mode<synchronous>, transform_indices = @transform_1, window_bounds = array<i64: 128, 128>}, {pipeline_mode = #tpu.pipeline_mode<synchronous>, transform_indices = @transform_2, window_bounds = array<i64: 3, 384, 128>}, {pipeline_mode = #tpu.pipeline_mode<synchronous>, transform_indices = @transform_3, window_bounds = array<i64: 128, 128>}, {pipeline_mode = #tpu.pipeline_mode<synchronous>, transform_indices = @transform_4, window_bounds = array<i64: 128, 128>}, {pipeline_mode = #tpu.pipeline_mode<synchronous>, transform_indices = @transform_5, window_bounds = array<i64: 1, 128>}, {pipeline_mode = #tpu.pipeline_mode<synchronous>, transform_indices = @transform_6, window_bounds = array<i64: 1, 128>}, {pipeline_mode = #tpu.pipeline_mode<synchronous>, transform_indices = @transform_7, window_bounds = array<i64: 1, 128>}, {pipeline_mode = #tpu.pipeline_mode<synchronous>, transform_indices = @transform_8, window_bounds = array<i64: 1, 128>}, {pipeline_mode = #tpu.pipeline_mode<synchronous>, transform_indices = @transform_9, window_bounds = array<i64: 1, 128>}, {pipeline_mode = #tpu.pipeline_mode<synchronous>, transform_indices = @transform_10, window_bounds = array<i64: 1, 128>}, {pipeline_mode = #tpu.pipeline_mode<synchronous>, transform_indices = @transform_11, window_bounds = array<i64: 1, 128>}, {pipeline_mode = #tpu.pipeline_mode<synchronous>, transform_indices = @transform_12, window_bounds = array<i64: 1, 128>}, {pipeline_mode = #tpu.pipeline_mode<synchronous>, transform_indices = @transform_13, window_bounds = array<i64: 128, 128>}]} {
    %c0 = arith.constant 0 : index
    %c0_0 = arith.constant 0 : index
    %c0_1 = arith.constant 0 : index
    %c0_2 = arith.constant 0 : index
    %c0_3 = arith.constant 0 : index
    %c0_4 = arith.constant 0 : index
    %0 = vector.load %arg1[%c0, %c0_0, %c0_1, %c0_2, %c0_3, %c0_4] : memref<2x2x8x2x8x128xf32, #tpu.memory_space<vmem>>, vector<2x2x8x2x8x128xf32>
    %1 = vector.shape_cast %0 : vector<2x2x8x2x8x128xf32> to vector<512x128xf32>
    %2 = arith.truncf %1 : vector<512x128xf32> to vector<512x128xbf16>
    %c0_5 = arith.constant 0 : index
    %c0_6 = arith.constant 0 : index
    %3 = vector.load %arg2[%c0_5, %c0_6] : memref<128x128xbf16, #tpu.memory_space<vmem>>, vector<128x128xbf16>
    %cst = arith.constant dense<0.000000e+00> : vector<512x128xf32>
    %4 = tpu.matmul %2, %3, %cst {dimension_numbers = #tpu.dot_dimension_numbers<[1], [0], [0], [1], [0, 0, 1, 1], [], []>} : vector<512x128xbf16>, vector<128x128xbf16>, vector<512x128xf32> -> vector<512x128xf32>
    %c0_7 = arith.constant 0 : index
    %c0_8 = arith.constant 0 : index
    %5 = vector.load %arg6[%c0_7, %c0_8] : memref<1x128xf32, #tpu.memory_space<vmem>>, vector<1x128xf32>
    %c0_9 = arith.constant 0 : index
    %c0_10 = arith.constant 0 : index
    %6 = vector.load %arg7[%c0_9, %c0_10] : memref<1x128xf32, #tpu.memory_space<vmem>>, vector<1x128xf32>
    %cst_11 = arith.constant dense<0.000000e+00> : vector<128xf32>
    %7 = vector.multi_reduction <add>, %4, %cst_11 [0] : vector<512x128xf32> to vector<128xf32>
    %8 = vector.shape_cast %7 : vector<128xf32> to vector<1x128xf32>
    %cst_12 = arith.constant 5.120000e+02 : f32
    %9 = vector.broadcast %cst_12 : f32 to vector<1x128xf32>
    %10 = arith.divf %8, %9 : vector<1x128xf32>
    %11 = vector.broadcast %10 : vector<1x128xf32> to vector<512x128xf32>
    %12 = arith.subf %4, %11 : vector<512x128xf32>
    %13 = arith.mulf %12, %12 : vector<512x128xf32>
    %cst_13 = arith.constant dense<0.000000e+00> : vector<128xf32>
    %14 = vector.multi_reduction <add>, %13, %cst_13 [0] : vector<512x128xf32> to vector<128xf32>
    %15 = vector.shape_cast %14 : vector<128xf32> to vector<1x128xf32>
    %cst_14 = arith.constant 5.120000e+02 : f32
    %16 = vector.broadcast %cst_14 : f32 to vector<1x128xf32>
    %17 = arith.divf %15, %16 : vector<1x128xf32>
    %cst_15 = arith.constant 9.99999974E-6 : f32
    %18 = vector.broadcast %cst_15 : f32 to vector<1x128xf32>
    %19 = arith.addf %17, %18 : vector<1x128xf32>
    %20 = math.rsqrt %19 : vector<1x128xf32>
    %21 = arith.mulf %5, %20 : vector<1x128xf32>
    %22 = vector.broadcast %10 : vector<1x128xf32> to vector<512x128xf32>
    %23 = arith.subf %4, %22 : vector<512x128xf32>
    %24 = vector.broadcast %21 : vector<1x128xf32> to vector<512x128xf32>
    %25 = arith.mulf %23, %24 : vector<512x128xf32>
    %26 = vector.broadcast %6 : vector<1x128xf32> to vector<512x128xf32>
    %27 = arith.addf %25, %26 : vector<512x128xf32>
    %cst_16 = arith.constant 0.000000e+00 : f32
    %28 = vector.broadcast %cst_16 : f32 to vector<512x128xf32>
    %29 = arith.maximumf %27, %28 : vector<512x128xf32>
    %cst_17 = arith.constant 0.000000e+00 : bf16
    %30 = vector.broadcast %cst_17 : bf16 to vector<2x2x1x9x128xbf16>
    %c0_18 = arith.constant 0 : index
    %c0_19 = arith.constant 0 : index
    %c0_20 = arith.constant 0 : index
    %c0_21 = arith.constant 0 : index
    %c0_22 = arith.constant 0 : index
    %c0_23 = arith.constant 0 : index
    %31 = vector.load %arg15[%c0_18, %c0_19, %c0_20, %c0_21, %c0_22, %c0_23] : memref<2x2x2x9x9x128xbf16, #tpu.memory_space<vmem>>, vector<1x2x2x1x9x128xbf16>
    %32 = vector.shape_cast %31 : vector<1x2x2x1x9x128xbf16> to vector<2x2x1x9x128xbf16>
    %33 = vector.shape_cast %30 : vector<2x2x1x9x128xbf16> to vector<1x2x2x1x9x128xbf16>
    tpu.vector_store %arg15[%c0_18, %c0_19, %c0_20, %c0_21, %c0_22, %c0_23], %33 {strides = array<i32>} : memref<2x2x2x9x9x128xbf16, #tpu.memory_space<vmem>>, vector<1x2x2x1x9x128xbf16>,
    %cst_24 = arith.constant 0.000000e+00 : bf16
    %34 = vector.broadcast %cst_24 : bf16 to vector<2x2x9x1x128xbf16>
    %c0_25 = arith.constant 0 : index
    %c0_26 = arith.constant 0 : index
    %c0_27 = arith.constant 0 : index
    %c0_28 = arith.constant 0 : index
    %c0_29 = arith.constant 0 : index
    %c0_30 = arith.constant 0 : index
    %35 = vector.load %arg15[%c0_25, %c0_26, %c0_27, %c0_28, %c0_29, %c0_30] : memref<2x2x2x9x9x128xbf16, #tpu.memory_space<vmem>>, vector<2x1x2x9x1x128xbf16>
    %36 = vector.shape_cast %35 : vector<2x1x2x9x1x128xbf16> to vector<2x2x9x1x128xbf16>
    %37 = vector.shape_cast %34 : vector<2x2x9x1x128xbf16> to vector<2x1x2x9x1x128xbf16>
    tpu.vector_store %arg15[%c0_25, %c0_26, %c0_27, %c0_28, %c0_29, %c0_30], %37 {strides = array<i32>} : memref<2x2x2x9x9x128xbf16, #tpu.memory_space<vmem>>, vector<2x1x2x9x1x128xbf16>,
    %38 = arith.truncf %29 : vector<512x128xf32> to vector<512x128xbf16>
    %39 = vector.shape_cast %38 : vector<512x128xbf16> to vector<2x2x8x2x8x128xbf16>
    %40 = vector.extract_strided_slice %39 {offsets = [0, 0, 0, 0, 0, 0], sizes = [2, 1, 8, 1, 8, 128], strides = [1, 1, 1, 1, 1, 1]} : vector<2x2x8x2x8x128xbf16> to vector<2x1x8x1x8x128xbf16>
    %41 = vector.shape_cast %40 : vector<2x1x8x1x8x128xbf16> to vector<2x8x8x128xbf16>
    %c1 = arith.constant 1 : index
    %c1_31 = arith.constant 1 : index
    %c0_32 = arith.constant 0 : index
    %c0_33 = arith.constant 0 : index
    %c0_34 = arith.constant 0 : index
    %c0_35 = arith.constant 0 : index
    %42 = vector.load %arg15[%c1, %c1_31, %c0_32, %c0_33, %c0_34, %c0_35] : memref<2x2x2x9x9x128xbf16, #tpu.memory_space<vmem>>, vector<1x1x2x8x8x128xbf16>
    %43 = vector.shape_cast %42 : vector<1x1x2x8x8x128xbf16> to vector<2x8x8x128xbf16>
    %44 = vector.shape_cast %41 : vector<2x8x8x128xbf16> to vector<1x1x2x8x8x128xbf16>
    tpu.vector_store %arg15[%c1, %c1_31, %c0_32, %c0_33, %c0_34, %c0_35], %44 {strides = array<i32>} : memref<2x2x2x9x9x128xbf16, #tpu.memory_space<vmem>>, vector<1x1x2x8x8x128xbf16>,
    %45 = vector.extract_strided_slice %39 {offsets = [0, 0, 0, 1, 0, 0], sizes = [2, 1, 8, 1, 8, 128], strides = [1, 1, 1, 1, 1, 1]} : vector<2x2x8x2x8x128xbf16> to vector<2x1x8x1x8x128xbf16>
    %46 = vector.shape_cast %45 : vector<2x1x8x1x8x128xbf16> to vector<2x8x8x128xbf16>
    %c1_36 = arith.constant 1 : index
    %c0_37 = arith.constant 0 : index
    %c0_38 = arith.constant 0 : index
    %c0_39 = arith.constant 0 : index
    %c1_40 = arith.constant 1 : index
    %c0_41 = arith.constant 0 : index
    %47 = vector.load %arg15[%c1_36, %c0_37, %c0_38, %c0_39, %c1_40, %c0_41] : memref<2x2x2x9x9x128xbf16, #tpu.memory_space<vmem>>, vector<1x1x2x8x8x128xbf16>
    %48 = vector.shape_cast %47 : vector<1x1x2x8x8x128xbf16> to vector<2x8x8x128xbf16>
    %49 = vector.shape_cast %46 : vector<2x8x8x128xbf16> to vector<1x1x2x8x8x128xbf16>
    tpu.vector_store %arg15[%c1_36, %c0_37, %c0_38, %c0_39, %c1_40, %c0_41], %49 {strides = array<i32>} : memref<2x2x2x9x9x128xbf16, #tpu.memory_space<vmem>>, vector<1x1x2x8x8x128xbf16>,
    %50 = vector.extract_strided_slice %39 {offsets = [0, 1, 0, 0, 0, 0], sizes = [2, 1, 8, 1, 8, 128], strides = [1, 1, 1, 1, 1, 1]} : vector<2x2x8x2x8x128xbf16> to vector<2x1x8x1x8x128xbf16>
    %51 = vector.shape_cast %50 : vector<2x1x8x1x8x128xbf16> to vector<2x8x8x128xbf16>
    %c0_42 = arith.constant 0 : index
    %c1_43 = arith.constant 1 : index
    %c0_44 = arith.constant 0 : index
    %c1_45 = arith.constant 1 : index
    %c0_46 = arith.constant 0 : index
    %c0_47 = arith.constant 0 : index
    %52 = vector.load %arg15[%c0_42, %c1_43, %c0_44, %c1_45, %c0_46, %c0_47] : memref<2x2x2x9x9x128xbf16, #tpu.memory_space<vmem>>, vector<1x1x2x8x8x128xbf16>
    %53 = vector.shape_cast %52 : vector<1x1x2x8x8x128xbf16> to vector<2x8x8x128xbf16>
    %54 = vector.shape_cast %51 : vector<2x8x8x128xbf16> to vector<1x1x2x8x8x128xbf16>
    tpu.vector_store %arg15[%c0_42, %c1_43, %c0_44, %c1_45, %c0_46, %c0_47], %54 {strides = array<i32>} : memref<2x2x2x9x9x128xbf16, #tpu.memory_space<vmem>>, vector<1x1x2x8x8x128xbf16>,
    %55 = vector.extract_strided_slice %39 {offsets = [0, 1, 0, 1, 0, 0], sizes = [2, 1, 8, 1, 8, 128], strides = [1, 1, 1, 1, 1, 1]} : vector<2x2x8x2x8x128xbf16> to vector<2x1x8x1x8x128xbf16>
    %56 = vector.shape_cast %55 : vector<2x1x8x1x8x128xbf16> to vector<2x8x8x128xbf16>
    %c0_48 = arith.constant 0 : index
    %c0_49 = arith.constant 0 : index
    %c0_50 = arith.constant 0 : index
    %c1_51 = arith.constant 1 : index
    %c1_52 = arith.constant 1 : index
    %c0_53 = arith.constant 0 : index
    %57 = vector.load %arg15[%c0_48, %c0_49, %c0_50, %c1_51, %c1_52, %c0_53] : memref<2x2x2x9x9x128xbf16, #tpu.memory_space<vmem>>, vector<1x1x2x8x8x128xbf16>
    %58 = vector.shape_cast %57 : vector<1x1x2x8x8x128xbf16> to vector<2x8x8x128xbf16>
    %59 = vector.shape_cast %56 : vector<2x8x8x128xbf16> to vector<1x1x2x8x8x128xbf16>
    tpu.vector_store %arg15[%c0_48, %c0_49, %c0_50, %c1_51, %c1_52, %c0_53], %59 {strides = array<i32>} : memref<2x2x2x9x9x128xbf16, #tpu.memory_space<vmem>>, vector<1x1x2x8x8x128xbf16>,
    %c0_54 = arith.constant 0 : index
    %c0_55 = arith.constant 0 : index
    %c0_56 = arith.constant 0 : index
    %c0_57 = arith.constant 0 : index
    %c0_58 = arith.constant 0 : index
    %c0_59 = arith.constant 0 : index
    %60 = vector.load %arg15[%c0_54, %c0_55, %c0_56, %c0_57, %c0_58, %c0_59] : memref<2x2x2x9x9x128xbf16, #tpu.memory_space<vmem>>, vector<1x1x2x8x8x128xbf16>
    %61 = vector.shape_cast %60 : vector<1x1x2x8x8x128xbf16> to vector<2x8x8x128xbf16>
    %62 = vector.shape_cast %61 : vector<2x8x8x128xbf16> to vector<128x128xbf16>
    %c0_60 = arith.constant 0 : index
    %c1_61 = arith.constant 1 : index
    %c0_62 = arith.constant 0 : index
    %c0_63 = arith.constant 0 : index
    %c0_64 = arith.constant 0 : index
    %c0_65 = arith.constant 0 : index
    %63 = vector.load %arg15[%c0_60, %c1_61, %c0_62, %c0_63, %c0_64, %c0_65] : memref<2x2x2x9x9x128xbf16, #tpu.memory_space<vmem>>, vector<1x1x2x8x8x128xbf16>
    %64 = vector.shape_cast %63 : vector<1x1x2x8x8x128xbf16> to vector<2x8x8x128xbf16>
    %65 = vector.shape_cast %64 : vector<2x8x8x128xbf16> to vector<128x128xbf16>
    %c0_66 = arith.constant 0 : index
    %c0_67 = arith.constant 0 : index
    %c0_68 = arith.constant 0 : index
    %c0_69 = arith.constant 0 : index
    %c1_70 = arith.constant 1 : index
    %c0_71 = arith.constant 0 : index
    %66 = vector.load %arg15[%c0_66, %c0_67, %c0_68, %c0_69, %c1_70, %c0_71] : memref<2x2x2x9x9x128xbf16, #tpu.memory_space<vmem>>, vector<1x1x2x8x8x128xbf16>
    %67 = vector.shape_cast %66 : vector<1x1x2x8x8x128xbf16> to vector<2x8x8x128xbf16>
    %68 = vector.shape_cast %67 : vector<2x8x8x128xbf16> to vector<128x128xbf16>
    %69 = tpu.concatenate %62, %65, %68 in 1 : vector<128x128xbf16>, vector<128x128xbf16>, vector<128x128xbf16> -> vector<128x384xbf16>
    %c0_72 = arith.constant 0 : index
    %c0_73 = arith.constant 0 : index
    %c0_74 = arith.constant 0 : index
    %70 = vector.load %arg3[%c0_72, %c0_73, %c0_74] : memref<3x384x128xbf16, #tpu.memory_space<vmem>>, vector<1x384x128xbf16>
    %71 = vector.shape_cast %70 : vector<1x384x128xbf16> to vector<384x128xbf16>
    %cst_75 = arith.constant dense<0.000000e+00> : vector<128x128xf32>
    %72 = tpu.matmul %69, %71, %cst_75 {dimension_numbers = #tpu.dot_dimension_numbers<[1], [0], [0], [1], [0, 0, 1, 1], [], []>} : vector<128x384xbf16>, vector<384x128xbf16>, vector<128x128xf32> -> vector<128x128xf32>
    %c1_76 = arith.constant 1 : index
    %c0_77 = arith.constant 0 : index
    %c0_78 = arith.constant 0 : index
    %c0_79 = arith.constant 0 : index
    %c0_80 = arith.constant 0 : index
    %c0_81 = arith.constant 0 : index
    %73 = vector.load %arg15[%c1_76, %c0_77, %c0_78, %c0_79, %c0_80, %c0_81] : memref<2x2x2x9x9x128xbf16, #tpu.memory_space<vmem>>, vector<1x1x2x8x8x128xbf16>
    %74 = vector.shape_cast %73 : vector<1x1x2x8x8x128xbf16> to vector<2x8x8x128xbf16>
    %75 = vector.shape_cast %74 : vector<2x8x8x128xbf16> to vector<128x128xbf16>
    %c1_82 = arith.constant 1 : index
    %c1_83 = arith.constant 1 : index
    %c0_84 = arith.constant 0 : index
    %c0_85 = arith.constant 0 : index
    %c0_86 = arith.constant 0 : index
    %c0_87 = arith.constant 0 : index
    %76 = vector.load %arg15[%c1_82, %c1_83, %c0_84, %c0_85, %c0_86, %c0_87] : memref<2x2x2x9x9x128xbf16, #tpu.memory_space<vmem>>, vector<1x1x2x8x8x128xbf16>
    %77 = vector.shape_cast %76 : vector<1x1x2x8x8x128xbf16> to vector<2x8x8x128xbf16>
    %78 = vector.shape_cast %77 : vector<2x8x8x128xbf16> to vector<128x128xbf16>
    %c1_88 = arith.constant 1 : index
    %c0_89 = arith.constant 0 : index
    %c0_90 = arith.constant 0 : index
    %c0_91 = arith.constant 0 : index
    %c1_92 = arith.constant 1 : index
    %c0_93 = arith.constant 0 : index
    %79 = vector.load %arg15[%c1_88, %c0_89, %c0_90, %c0_91, %c1_92, %c0_93] : memref<2x2x2x9x9x128xbf16, #tpu.memory_space<vmem>>, vector<1x1x2x8x8x128xbf16>
    %80 = vector.shape_cast %79 : vector<1x1x2x8x8x128xbf16> to vector<2x8x8x128xbf16>
    %81 = vector.shape_cast %80 : vector<2x8x8x128xbf16> to vector<128x128xbf16>
    %82 = tpu.concatenate %75, %78, %81 in 1 : vector<128x128xbf16>, vector<128x128xbf16>, vector<128x128xbf16> -> vector<128x384xbf16>
    %c1_94 = arith.constant 1 : index
    %c0_95 = arith.constant 0 : index
    %c0_96 = arith.constant 0 : index
    %83 = vector.load %arg3[%c1_94, %c0_95, %c0_96] : memref<3x384x128xbf16, #tpu.memory_space<vmem>>, vector<1x384x128xbf16>
    %84 = vector.shape_cast %83 : vector<1x384x128xbf16> to vector<384x128xbf16>
    %cst_97 = arith.constant dense<0.000000e+00> : vector<128x128xf32>
    %85 = tpu.matmul %82, %84, %cst_97 {dimension_numbers = #tpu.dot_dimension_numbers<[1], [0], [0], [1], [0, 0, 1, 1], [], []>} : vector<128x384xbf16>, vector<384x128xbf16>, vector<128x128xf32> -> vector<128x128xf32>
    %86 = arith.addf %72, %85 : vector<128x128xf32>
    %c0_98 = arith.constant 0 : index
    %c0_99 = arith.constant 0 : index
    %c0_100 = arith.constant 0 : index
    %c1_101 = arith.constant 1 : index
    %c0_102 = arith.constant 0 : index
    %c0_103 = arith.constant 0 : index
    %87 = vector.load %arg15[%c0_98, %c0_99, %c0_100, %c1_101, %c0_102, %c0_103] : memref<2x2x2x9x9x128xbf16, #tpu.memory_space<vmem>>, vector<1x1x2x8x8x128xbf16>
    %88 = vector.shape_cast %87 : vector<1x1x2x8x8x128xbf16> to vector<2x8x8x128xbf16>
    %89 = vector.shape_cast %88 : vector<2x8x8x128xbf16> to vector<128x128xbf16>
    %c0_104 = arith.constant 0 : index
    %c1_105 = arith.constant 1 : index
    %c0_106 = arith.constant 0 : index
    %c1_107 = arith.constant 1 : index
    %c0_108 = arith.constant 0 : index
    %c0_109 = arith.constant 0 : index
    %90 = vector.load %arg15[%c0_104, %c1_105, %c0_106, %c1_107, %c0_108, %c0_109] : memref<2x2x2x9x9x128xbf16, #tpu.memory_space<vmem>>, vector<1x1x2x8x8x128xbf16>
    %91 = vector.shape_cast %90 : vector<1x1x2x8x8x128xbf16> to vector<2x8x8x128xbf16>
    %92 = vector.shape_cast %91 : vector<2x8x8x128xbf16> to vector<128x128xbf16>
    %c0_110 = arith.constant 0 : index
    %c0_111 = arith.constant 0 : index
    %c0_112 = arith.constant 0 : index
    %c1_113 = arith.constant 1 : index
    %c1_114 = arith.constant 1 : index
    %c0_115 = arith.constant 0 : index
    %93 = vector.load %arg15[%c0_110, %c0_111, %c0_112, %c1_113, %c1_114, %c0_115] : memref<2x2x2x9x9x128xbf16, #tpu.memory_space<vmem>>, vector<1x1x2x8x8x128xbf16>
    %94 = vector.shape_cast %93 : vector<1x1x2x8x8x128xbf16> to vector<2x8x8x128xbf16>
    %95 = vector.shape_cast %94 : vector<2x8x8x128xbf16> to vector<128x128xbf16>
    %96 = tpu.concatenate %89, %92, %95 in 1 : vector<128x128xbf16>, vector<128x128xbf16>, vector<128x128xbf16> -> vector<128x384xbf16>
    %c2 = arith.constant 2 : index
    %c0_116 = arith.constant 0 : index
    %c0_117 = arith.constant 0 : index
    %97 = vector.load %arg3[%c2, %c0_116, %c0_117] : memref<3x384x128xbf16, #tpu.memory_space<vmem>>, vector<1x384x128xbf16>
    %98 = vector.shape_cast %97 : vector<1x384x128xbf16> to vector<384x128xbf16>
    %cst_118 = arith.constant dense<0.000000e+00> : vector<128x128xf32>
    %99 = tpu.matmul %96, %98, %cst_118 {dimension_numbers = #tpu.dot_dimension_numbers<[1], [0], [0], [1], [0, 0, 1, 1], [], []>} : vector<128x384xbf16>, vector<384x128xbf16>, vector<128x128xf32> -> vector<128x128xf32>
    %100 = arith.addf %86, %99 : vector<128x128xf32>
    %c0_119 = arith.constant 0 : index
    %c0_120 = arith.constant 0 : index
    %101 = vector.load %arg8[%c0_119, %c0_120] : memref<1x128xf32, #tpu.memory_space<vmem>>, vector<1x128xf32>
    %c0_121 = arith.constant 0 : index
    %c0_122 = arith.constant 0 : index
    %102 = vector.load %arg9[%c0_121, %c0_122] : memref<1x128xf32, #tpu.memory_space<vmem>>, vector<1x128xf32>
    %cst_123 = arith.constant dense<0.000000e+00> : vector<128xf32>
    %103 = vector.multi_reduction <add>, %100, %cst_123 [0] : vector<128x128xf32> to vector<128xf32>
    %104 = vector.shape_cast %103 : vector<128xf32> to vector<1x128xf32>
    %cst_124 = arith.constant 1.280000e+02 : f32
    %105 = vector.broadcast %cst_124 : f32 to vector<1x128xf32>
    %106 = arith.divf %104, %105 : vector<1x128xf32>
    %107 = vector.broadcast %106 : vector<1x128xf32> to vector<128x128xf32>
    %108 = arith.subf %100, %107 : vector<128x128xf32>
    %109 = arith.mulf %108, %108 : vector<128x128xf32>
    %cst_125 = arith.constant dense<0.000000e+00> : vector<128xf32>
    %110 = vector.multi_reduction <add>, %109, %cst_125 [0] : vector<128x128xf32> to vector<128xf32>
    %111 = vector.shape_cast %110 : vector<128xf32> to vector<1x128xf32>
    %cst_126 = arith.constant 1.280000e+02 : f32
    %112 = vector.broadcast %cst_126 : f32 to vector<1x128xf32>
    %113 = arith.divf %111, %112 : vector<1x128xf32>
    %cst_127 = arith.constant 9.99999974E-6 : f32
    %114 = vector.broadcast %cst_127 : f32 to vector<1x128xf32>
    %115 = arith.addf %113, %114 : vector<1x128xf32>
    %116 = math.rsqrt %115 : vector<1x128xf32>
    %117 = arith.mulf %101, %116 : vector<1x128xf32>
    %118 = vector.broadcast %106 : vector<1x128xf32> to vector<128x128xf32>
    %119 = arith.subf %100, %118 : vector<128x128xf32>
    %120 = vector.broadcast %117 : vector<1x128xf32> to vector<128x128xf32>
    %121 = arith.mulf %119, %120 : vector<128x128xf32>
    %122 = vector.broadcast %102 : vector<1x128xf32> to vector<128x128xf32>
    %123 = arith.addf %121, %122 : vector<128x128xf32>
    %cst_128 = arith.constant 0.000000e+00 : f32
    %124 = vector.broadcast %cst_128 : f32 to vector<128x128xf32>
    %125 = arith.maximumf %123, %124 : vector<128x128xf32>
    %126 = arith.truncf %125 : vector<128x128xf32> to vector<128x128xbf16>
    %c0_129 = arith.constant 0 : index
    %c0_130 = arith.constant 0 : index
    %127 = vector.load %arg4[%c0_129, %c0_130] : memref<128x128xbf16, #tpu.memory_space<vmem>>, vector<128x128xbf16>
    %cst_131 = arith.constant dense<0.000000e+00> : vector<128x128xf32>
    %128 = tpu.matmul %126, %127, %cst_131 {dimension_numbers = #tpu.dot_dimension_numbers<[1], [0], [0], [1], [0, 0, 1, 1], [], []>} : vector<128x128xbf16>, vector<128x128xbf16>, vector<128x128xf32> -> vector<128x128xf32>
    %c0_132 = arith.constant 0 : index
    %c0_133 = arith.constant 0 : index
    %129 = vector.load %arg10[%c0_132, %c0_133] : memref<1x128xf32, #tpu.memory_space<vmem>>, vector<1x128xf32>
    %c0_134 = arith.constant 0 : index
    %c0_135 = arith.constant 0 : index
    %130 = vector.load %arg11[%c0_134, %c0_135] : memref<1x128xf32, #tpu.memory_space<vmem>>, vector<1x128xf32>
    %cst_136 = arith.constant dense<0.000000e+00> : vector<128xf32>
    %131 = vector.multi_reduction <add>, %128, %cst_136 [0] : vector<128x128xf32> to vector<128xf32>
    %132 = vector.shape_cast %131 : vector<128xf32> to vector<1x128xf32>
    %cst_137 = arith.constant 1.280000e+02 : f32
    %133 = vector.broadcast %cst_137 : f32 to vector<1x128xf32>
    %134 = arith.divf %132, %133 : vector<1x128xf32>
    %135 = vector.broadcast %134 : vector<1x128xf32> to vector<128x128xf32>
    %136 = arith.subf %128, %135 : vector<128x128xf32>
    %137 = arith.mulf %136, %136 : vector<128x128xf32>
    %cst_138 = arith.constant dense<0.000000e+00> : vector<128xf32>
    %138 = vector.multi_reduction <add>, %137, %cst_138 [0] : vector<128x128xf32> to vector<128xf32>
    %139 = vector.shape_cast %138 : vector<128xf32> to vector<1x128xf32>
    %cst_139 = arith.constant 1.280000e+02 : f32
    %140 = vector.broadcast %cst_139 : f32 to vector<1x128xf32>
    %141 = arith.divf %139, %140 : vector<1x128xf32>
    %cst_140 = arith.constant 9.99999974E-6 : f32
    %142 = vector.broadcast %cst_140 : f32 to vector<1x128xf32>
    %143 = arith.addf %141, %142 : vector<1x128xf32>
    %144 = math.rsqrt %143 : vector<1x128xf32>
    %145 = arith.mulf %129, %144 : vector<1x128xf32>
    %146 = vector.broadcast %134 : vector<1x128xf32> to vector<128x128xf32>
    %147 = arith.subf %128, %146 : vector<128x128xf32>
    %148 = vector.broadcast %145 : vector<1x128xf32> to vector<128x128xf32>
    %149 = arith.mulf %147, %148 : vector<128x128xf32>
    %150 = vector.broadcast %130 : vector<1x128xf32> to vector<128x128xf32>
    %151 = arith.addf %149, %150 : vector<128x128xf32>
    %c0_141 = arith.constant 0 : index
    %c0_142 = arith.constant 0 : index
    %c0_143 = arith.constant 0 : index
    %c0_144 = arith.constant 0 : index
    %c0_145 = arith.constant 0 : index
    %c0_146 = arith.constant 0 : index
    %152 = vector.load %arg1[%c0_141, %c0_142, %c0_143, %c0_144, %c0_145, %c0_146] : memref<2x2x8x2x8x128xf32, #tpu.memory_space<vmem>>, vector<2x1x8x1x8x128xf32>
    %153 = vector.shape_cast %152 : vector<2x1x8x1x8x128xf32> to vector<2x8x8x128xf32>
    %154 = vector.shape_cast %153 : vector<2x8x8x128xf32> to vector<128x128xf32>
    %155 = arith.truncf %154 : vector<128x128xf32> to vector<128x128xbf16>
    %c0_147 = arith.constant 0 : index
    %c0_148 = arith.constant 0 : index
    %156 = vector.load %arg5[%c0_147, %c0_148] : memref<128x128xbf16, #tpu.memory_space<vmem>>, vector<128x128xbf16>
    %cst_149 = arith.constant dense<0.000000e+00> : vector<128x128xf32>
    %157 = tpu.matmul %155, %156, %cst_149 {dimension_numbers = #tpu.dot_dimension_numbers<[1], [0], [0], [1], [0, 0, 1, 1], [], []>} : vector<128x128xbf16>, vector<128x128xbf16>, vector<128x128xf32> -> vector<128x128xf32>
    %c0_150 = arith.constant 0 : index
    %c0_151 = arith.constant 0 : index
    %158 = vector.load %arg12[%c0_150, %c0_151] : memref<1x128xf32, #tpu.memory_space<vmem>>, vector<1x128xf32>
    %c0_152 = arith.constant 0 : index
    %c0_153 = arith.constant 0 : index
    %159 = vector.load %arg13[%c0_152, %c0_153] : memref<1x128xf32, #tpu.memory_space<vmem>>, vector<1x128xf32>
    %cst_154 = arith.constant dense<0.000000e+00> : vector<128xf32>
    %160 = vector.multi_reduction <add>, %157, %cst_154 [0] : vector<128x128xf32> to vector<128xf32>
    %161 = vector.shape_cast %160 : vector<128xf32> to vector<1x128xf32>
    %cst_155 = arith.constant 1.280000e+02 : f32
    %162 = vector.broadcast %cst_155 : f32 to vector<1x128xf32>
    %163 = arith.divf %161, %162 : vector<1x128xf32>
    %164 = vector.broadcast %163 : vector<1x128xf32> to vector<128x128xf32>
    %165 = arith.subf %157, %164 : vector<128x128xf32>
    %166 = arith.mulf %165, %165 : vector<128x128xf32>
    %cst_156 = arith.constant dense<0.000000e+00> : vector<128xf32>
    %167 = vector.multi_reduction <add>, %166, %cst_156 [0] : vector<128x128xf32> to vector<128xf32>
    %168 = vector.shape_cast %167 : vector<128xf32> to vector<1x128xf32>
    %cst_157 = arith.constant 1.280000e+02 : f32
    %169 = vector.broadcast %cst_157 : f32 to vector<1x128xf32>
    %170 = arith.divf %168, %169 : vector<1x128xf32>
    %cst_158 = arith.constant 9.99999974E-6 : f32
    %171 = vector.broadcast %cst_158 : f32 to vector<1x128xf32>
    %172 = arith.addf %170, %171 : vector<1x128xf32>
    %173 = math.rsqrt %172 : vector<1x128xf32>
    %174 = arith.mulf %158, %173 : vector<1x128xf32>
    %175 = vector.broadcast %163 : vector<1x128xf32> to vector<128x128xf32>
    %176 = arith.subf %157, %175 : vector<128x128xf32>
    %177 = vector.broadcast %174 : vector<1x128xf32> to vector<128x128xf32>
    %178 = arith.mulf %176, %177 : vector<128x128xf32>
    %179 = vector.broadcast %159 : vector<1x128xf32> to vector<128x128xf32>
    %180 = arith.addf %178, %179 : vector<128x128xf32>
    %181 = arith.addf %151, %180 : vector<128x128xf32>
    %cst_159 = arith.constant 0.000000e+00 : f32
    %182 = vector.broadcast %cst_159 : f32 to vector<128x128xf32>
    %183 = arith.maximumf %181, %182 : vector<128x128xf32>
    %c0_160 = arith.constant 0 : index
    %c0_161 = arith.constant 0 : index
    %184 = vector.load %arg14[%c0_160, %c0_161] : memref<128x128xf32, #tpu.memory_space<vmem>>, vector<128x128xf32>
    tpu.vector_store %arg14[%c0_160, %c0_161], %183 {strides = array<i32>} : memref<128x128xf32, #tpu.memory_space<vmem>>, vector<128x128xf32>,
    return
  }
  func.func @transform_0(%arg0: i32) -> (i32, i32, i32, i32, i32, i32) {
    %c0_i32 = arith.constant 0 : i32
    %c0_i32_0 = arith.constant 0 : i32
    %c0_i32_1 = arith.constant 0 : i32
    %c0_i32_2 = arith.constant 0 : i32
    %c0_i32_3 = arith.constant 0 : i32
    %c0_i32_4 = arith.constant 0 : i32
    %c0_i32_5 = arith.constant 0 : i32
    return %c0_i32, %c0_i32_0, %c0_i32_1, %c0_i32_2, %c0_i32_3, %c0_i32_4 : i32, i32, i32, i32, i32, i32
  }
  func.func @transform_1(%arg0: i32) -> (i32, i32) {
    %c0_i32 = arith.constant 0 : i32
    %c0_i32_0 = arith.constant 0 : i32
    %c0_i32_1 = arith.constant 0 : i32
    return %c0_i32, %c0_i32_0 : i32, i32
  }
  func.func @transform_2(%arg0: i32) -> (i32, i32, i32) {
    %c0_i32 = arith.constant 0 : i32
    %c0_i32_0 = arith.constant 0 : i32
    %c0_i32_1 = arith.constant 0 : i32
    %c0_i32_2 = arith.constant 0 : i32
    return %c0_i32, %c0_i32_0, %c0_i32_1 : i32, i32, i32
  }
  func.func @transform_3(%arg0: i32) -> (i32, i32) {
    %c0_i32 = arith.constant 0 : i32
    %c0_i32_0 = arith.constant 0 : i32
    %c0_i32_1 = arith.constant 0 : i32
    return %c0_i32, %c0_i32_0 : i32, i32
  }
  func.func @transform_4(%arg0: i32) -> (i32, i32) {
    %c0_i32 = arith.constant 0 : i32
    %c0_i32_0 = arith.constant 0 : i32
    %c0_i32_1 = arith.constant 0 : i32
    return %c0_i32, %c0_i32_0 : i32, i32
  }
  func.func @transform_5(%arg0: i32) -> (i32, i32) {
    %c0_i32 = arith.constant 0 : i32
    %c0_i32_0 = arith.constant 0 : i32
    %c0_i32_1 = arith.constant 0 : i32
    return %c0_i32, %c0_i32_0 : i32, i32
  }
  func.func @transform_6(%arg0: i32) -> (i32, i32) {
    %c0_i32 = arith.constant 0 : i32
    %c0_i32_0 = arith.constant 0 : i32
    %c0_i32_1 = arith.constant 0 : i32
    return %c0_i32, %c0_i32_0 : i32, i32
  }
  func.func @transform_7(%arg0: i32) -> (i32, i32) {
    %c0_i32 = arith.constant 0 : i32
    %c0_i32_0 = arith.constant 0 : i32
    %c0_i32_1 = arith.constant 0 : i32
    return %c0_i32, %c0_i32_0 : i32, i32
  }
  func.func @transform_8(%arg0: i32) -> (i32, i32) {
    %c0_i32 = arith.constant 0 : i32
    %c0_i32_0 = arith.constant 0 : i32
    %c0_i32_1 = arith.constant 0 : i32
    return %c0_i32, %c0_i32_0 : i32, i32
  }
  func.func @transform_9(%arg0: i32) -> (i32, i32) {
    %c0_i32 = arith.constant 0 : i32
    %c0_i32_0 = arith.constant 0 : i32
    %c0_i32_1 = arith.constant 0 : i32
    return %c0_i32, %c0_i32_0 : i32, i32
  }
  func.func @transform_10(%arg0: i32) -> (i32, i32) {
    %c0_i32 = arith.constant 0 : i32
    %c0_i32_0 = arith.constant 0 : i32
    %c0_i32_1 = arith.constant 0 : i32
    return %c0_i32, %c0_i32_0 : i32, i32
  }
  func.func @transform_11(%arg0: i32) -> (i32, i32) {
    %c0_i32 = arith.constant 0 : i32
    %c0_i32_0 = arith.constant 0 : i32
    %c0_i32_1 = arith.constant 0 : i32
    return %c0_i32, %c0_i32_0 : i32, i32
  }
  func.func @transform_12(%arg0: i32) -> (i32, i32) {
    %c0_i32 = arith.constant 0 : i32
    %c0_i32_0 = arith.constant 0 : i32
    %c0_i32_1 = arith.constant 0 : i32
    return %c0_i32, %c0_i32_0 : i32, i32
  }
  func.func @transform_13(%arg0: i32) -> (i32, i32) {
    %c0_i32 = arith.constant 0 : i32
    %c0_i32_0 = arith.constant 0 : i32
    %c0_i32_1 = arith.constant 0 : i32
    return %c0_i32, %c0_i32_0 : i32, i32
  }
}

</mosaic_0001>

<llo_original>
// kernel: tpu_custom_call.1
$region0: #{tpu_custom_call.1}
  #allocation0 [shape = 'u32[]', space=smem, size = 0x4, offset = 0x4, fixed_abs, tag = 'smem constant byte address 0x4 - core index']
  #allocation1 [shape = 'u32[72,128]{1,0:T(1,128)}', space=vmem, size = 0x9000, scoped, tag = 'internal scratch']
  #allocation2 [shape = 'bf16[2,2,2,9,9,128]{5,4,3,2,1,0:T(8,128)(2,1)}', space=vmem, size = 0x48000, scoped, tag = 'scratch operand']
  %s0 = inlined_call_operand.hbm [shape: f32[2,2,8,2,8,128], index: 0, kind: input, shape index: {}]
  %s1 = inlined_call_operand.hbm [shape: bf16[128,128], index: 1, kind: input, shape index: {}]
  %s2 = inlined_call_operand.hbm [shape: bf16[3,384,128], index: 2, kind: input, shape index: {}]
  %s3 = inlined_call_operand.hbm [shape: bf16[128,128], index: 3, kind: input, shape index: {}]
  %s4 = inlined_call_operand.hbm [shape: bf16[128,128], index: 4, kind: input, shape index: {}]
  %s5 = inlined_call_operand.vmem [shape: f32[1,128], index: 5, kind: input, shape index: {}]
  %s6 = inlined_call_operand.vmem [shape: f32[1,128], index: 6, kind: input, shape index: {}]
  %s7 = inlined_call_operand.vmem [shape: f32[1,128], index: 7, kind: input, shape index: {}]
  %s8 = inlined_call_operand.vmem [shape: f32[1,128], index: 8, kind: input, shape index: {}]
  %s9 = inlined_call_operand.vmem [shape: f32[1,128], index: 9, kind: input, shape index: {}]
  %s10 = inlined_call_operand.vmem [shape: f32[1,128], index: 10, kind: input, shape index: {}]
  %s11 = inlined_call_operand.vmem [shape: f32[1,128], index: 11, kind: input, shape index: {}]
  %s12 = inlined_call_operand.vmem [shape: f32[1,128], index: 12, kind: input, shape index: {}]
  %s13 = inlined_call_operand.hbm [shape: f32[128,128], index: 13, kind: output, shape index: {}]
  %s14 = sld [smem:[#allocation0]]
  $region82: #{tpu_custom_call.1} parent=0
    _
  %s16 = ssub.s32 1, %s14
  %s17 = scalar_select 0, %s16, %s14
  $region1: #{tpu_custom_call.1} parent=0
    #allocation3 [shape = 'u8[262144]{0}', space=vmem, size = 0x40000, scoped, tag = 'input window, operand 0, single buffered']
    #allocation4 [shape = 's32[1]{0}', space=sflag, size = 0x4, scoped, tag = 'scoped memory for tpu_custom_call.1']
    #allocation5 [shape = 's32[1]{0}', space=sflag, size = 0x4, scoped, tag = 'scoped memory for tpu_custom_call.1']
    #allocation6 [shape = 'u8[32768]{0}', space=vmem, size = 0x8000, scoped, tag = 'input window, operand 1, single buffered']
    #allocation7 [shape = 's32[1]{0}', space=sflag, size = 0x4, scoped, tag = 'scoped memory for tpu_custom_call.1']
    #allocation8 [shape = 'u8[294912]{0}', space=vmem, size = 0x48000, scoped, tag = 'input window, operand 2, single buffered']
    #allocation9 [shape = 'u8[32768]{0}', space=vmem, size = 0x8000, scoped, tag = 'input window, operand 3, single buffered']
    #allocation10 [shape = 's32[1]{0}', space=sflag, size = 0x4, scoped, tag = 'scoped memory for tpu_custom_call.1']
    #allocation11 [shape = 'u8[32768]{0}', space=vmem, size = 0x8000, scoped, tag = 'input window, operand 4, single buffered']
    #allocation12 [shape = 'u8[65536]{0}', space=vmem, size = 0x10000, scoped, tag = 'output window, operand 0, single buffered']
    %18 = vsyncpa [#allocation4], 0
    %19 = vsyncpa [#allocation7], 0
    %20 = vsyncpa [#allocation10], 0
    %21 = vsyncpa [#allocation5], 0
    // Predicated region
    $region2: #{tpu_custom_call.1} parent=1 // pred_check
      _
    $region3: #{tpu_custom_call.1} parent=1 // pred_check_branch
      %23 = sbr.rel (0) target = $region5
    $region4: #{tpu_custom_call.1} parent=1 // pred_region
      %25 = vsyncadd [#allocation4], 0
      %s26 = sshll.u32 %s0, 4
      %s27 = int_to_ptr.hbm [resolvable:$true] %s26
      %s28 = sshll.u32 [#allocation3], 4
      %s29 = int_to_ptr.vmem [resolvable:$true] %s28
      %34 = dma.hbm_to_vmem [thread:$0]  %s27, 8192, %s29, [#allocation4], 128, 128, 8
    $region5: #{tpu_custom_call.1} parent=1 // pred_fallthru
      _
    // Predicated region
    $region6: #{tpu_custom_call.1} parent=1 // pred_check
      _
    $region7: #{tpu_custom_call.1} parent=1 // pred_check_branch
      %36 = sbr.rel (0) target = $region9
    $region8: #{tpu_custom_call.1} parent=1 // pred_region
      %38 = vsyncadd [#allocation7], 0
      %s39 = sshll.u32 %s1, 4
      %s40 = int_to_ptr.hbm [resolvable:$true] %s39
      %s41 = sshll.u32 [#allocation6], 4
      %s42 = int_to_ptr.vmem [resolvable:$true] %s41
      %47 = dma.hbm_to_vmem [thread:$0]  %s40, 1024, %s42, [#allocation7], 64, 64, 4
    $region9: #{tpu_custom_call.1} parent=1 // pred_fallthru
      _
    // Predicated region
    $region10: #{tpu_custom_call.1} parent=1 // pred_check
      _
    $region11: #{tpu_custom_call.1} parent=1 // pred_check_branch
      %49 = sbr.rel (0) target = $region13
    $region12: #{tpu_custom_call.1} parent=1 // pred_region
      %51 = vsyncadd [#allocation7], 0
      %s52 = sshll.u32 %s2, 4
      %s53 = int_to_ptr.hbm [resolvable:$true] %s52
      %s54 = sshll.u32 [#allocation8], 4
      %s55 = int_to_ptr.vmem [resolvable:$true] %s54
      %60 = dma.hbm_to_vmem [thread:$0]  %s53, 9216, %s55, [#allocation7], 64, 64, 4
    $region13: #{tpu_custom_call.1} parent=1 // pred_fallthru
      _
    // Predicated region
    $region14: #{tpu_custom_call.1} parent=1 // pred_check
      _
    $region15: #{tpu_custom_call.1} parent=1 // pred_check_branch
      %62 = sbr.rel (0) target = $region17
    $region16: #{tpu_custom_call.1} parent=1 // pred_region
      %64 = vsyncadd [#allocation10], 0
      %s65 = sshll.u32 %s3, 4
      %s66 = int_to_ptr.hbm [resolvable:$true] %s65
      %s67 = sshll.u32 [#allocation9], 4
      %s68 = int_to_ptr.vmem [resolvable:$true] %s67
      %73 = dma.hbm_to_vmem [thread:$0]  %s66, 1024, %s68, [#allocation10], 64, 64, 4
    $region17: #{tpu_custom_call.1} parent=1 // pred_fallthru
      _
    // Predicated region
    $region18: #{tpu_custom_call.1} parent=1 // pred_check
      _
    $region19: #{tpu_custom_call.1} parent=1 // pred_check_branch
      %75 = sbr.rel (0) target = $region21
    $region20: #{tpu_custom_call.1} parent=1 // pred_region
      %77 = vsyncadd [#allocation10], 0
      %s78 = sshll.u32 %s4, 4
      %s79 = int_to_ptr.hbm [resolvable:$true] %s78
      %s80 = sshll.u32 [#allocation11], 4
      %s81 = int_to_ptr.vmem [resolvable:$true] %s80
      %86 = dma.hbm_to_vmem [thread:$0]  %s79, 1024, %s81, [#allocation10], 64, 64, 4
    $region21: #{tpu_custom_call.1} parent=1 // pred_fallthru
      _
    // Predicated region
    $region22: #{tpu_custom_call.1} parent=1 // pred_check
      _
    $region23: #{tpu_custom_call.1} parent=1 // pred_check_branch
      %88 = sbr.rel (0) target = $region25
    $region24: #{tpu_custom_call.1} parent=1 // pred_region
      _
    $region25: #{tpu_custom_call.1} parent=1 // pred_fallthru
      _
    // Predicated region
    $region26: #{tpu_custom_call.1} parent=1 // pred_check
      _
    $region27: #{tpu_custom_call.1} parent=1 // pred_check_branch
      %90 = sbr.rel (0) target = $region29
    $region28: #{tpu_custom_call.1} parent=1 // pred_region
      _
    $region29: #{tpu_custom_call.1} parent=1 // pred_fallthru
      _
    // Predicated region
    $region30: #{tpu_custom_call.1} parent=1 // pred_check
      _
    $region31: #{tpu_custom_call.1} parent=1 // pred_check_branch
      %92 = sbr.rel (0) target = $region33
    $region32: #{tpu_custom_call.1} parent=1 // pred_region
      _
    $region33: #{tpu_custom_call.1} parent=1 // pred_fallthru
      _
    // Predicated region
    $region34: #{tpu_custom_call.1} parent=1 // pred_check
      _
    $region35: #{tpu_custom_call.1} parent=1 // pred_check_branch
      %94 = sbr.rel (0) target = $region37
    $region36: #{tpu_custom_call.1} parent=1 // pred_region
      _
    $region37: #{tpu_custom_call.1} parent=1 // pred_fallthru
      _
    // Predicated region
    $region38: #{tpu_custom_call.1} parent=1 // pred_check
      _
    $region39: #{tpu_custom_call.1} parent=1 // pred_check_branch
      %96 = sbr.rel (0) target = $region41
    $region40: #{tpu_custom_call.1} parent=1 // pred_region
      _
    $region41: #{tpu_custom_call.1} parent=1 // pred_fallthru
      _
    // Predicated region
    $region42: #{tpu_custom_call.1} parent=1 // pred_check
      _
    $region43: #{tpu_custom_call.1} parent=1 // pred_check_branch
      %98 = sbr.rel (0) target = $region45
    $region44: #{tpu_custom_call.1} parent=1 // pred_region
      _
    $region45: #{tpu_custom_call.1} parent=1 // pred_fallthru
      _
    // Predicated region
    $region46: #{tpu_custom_call.1} parent=1 // pred_check
      _
    $region47: #{tpu_custom_call.1} parent=1 // pred_check_branch
      %100 = sbr.rel (0) target = $region49
    $region48: #{tpu_custom_call.1} parent=1 // pred_region
      _
    $region49: #{tpu_custom_call.1} parent=1 // pred_fallthru
      _
    // Predicated region
    $region50: #{tpu_custom_call.1} parent=1 // pred_check
      _
    $region51: #{tpu_custom_call.1} parent=1 // pred_check_branch
      %102 = sbr.rel (0) target = $region53
    $region52: #{tpu_custom_call.1} parent=1 // pred_region
      _
    $region53: #{tpu_custom_call.1} parent=1 // pred_fallthru
      _
    // Predicated region
    $region54: #{tpu_custom_call.1} parent=1 // pred_check
      _
    $region55: #{tpu_custom_call.1} parent=1 // pred_check_branch
      %104 = sbr.rel (0) target = $region57
    $region56: #{tpu_custom_call.1} parent=1 // pred_region
      %106 = dma.done [#allocation4], 8192
    $region57: #{tpu_custom_call.1} parent=1 // pred_fallthru
      _
    // Predicated region
    $region58: #{tpu_custom_call.1} parent=1 // pred_check
      _
    $region59: #{tpu_custom_call.1} parent=1 // pred_check_branch
      %108 = sbr.rel (0) target = $region61
    $region60: #{tpu_custom_call.1} parent=1 // pred_region
      %110 = dma.done [#allocation7], 1024
    $region61: #{tpu_custom_call.1} parent=1 // pred_fallthru
      _
    // Predicated region
    $region62: #{tpu_custom_call.1} parent=1 // pred_check
      _
    $region63: #{tpu_custom_call.1} parent=1 // pred_check_branch
      %112 = sbr.rel (0) target = $region65
    $region64: #{tpu_custom_call.1} parent=1 // pred_region
      %114 = dma.done [#allocation7], 9216
    $region65: #{tpu_custom_call.1} parent=1 // pred_fallthru
      _
    // Predicated region
    $region66: #{tpu_custom_call.1} parent=1 // pred_check
      _
    $region67: #{tpu_custom_call.1} parent=1 // pred_check_branch
      %116 = sbr.rel (0) target = $region69
    $region68: #{tpu_custom_call.1} parent=1 // pred_region
      %118 = dma.done [#allocation10], 1024
    $region69: #{tpu_custom_call.1} parent=1 // pred_fallthru
      _
    // Predicated region
    $region70: #{tpu_custom_call.1} parent=1 // pred_check
      _
    $region71: #{tpu_custom_call.1} parent=1 // pred_check_branch
      %120 = sbr.rel (0) target = $region73
    $region72: #{tpu_custom_call.1} parent=1 // pred_region
      %122 = dma.done [#allocation10], 1024
    $region73: #{tpu_custom_call.1} parent=1 // pred_fallthru
      _
    %v124 = vld [vmem:[#allocation3] sm:$0xff]
    %v125 = vld [vmem:[#allocation3 + $0x8] sm:$0xff]
    %v126 = vld [vmem:[#allocation3 + $0x10] sm:$0xff]
    %v127 = vld [vmem:[#allocation3 + $0x18] sm:$0xff]
    %v128 = vld [vmem:[#allocation3 + $0x20] sm:$0xff]
    %v129 = vld [vmem:[#allocation3 + $0x28] sm:$0xff]
    %v130 = vld [vmem:[#allocation3 + $0x30] sm:$0xff]
    %v131 = vld [vmem:[#allocation3 + $0x38] sm:$0xff]
    %v132 = vld [vmem:[#allocation3 + $0x40] sm:$0xff]
    %v133 = vld [vmem:[#allocation3 + $0x48] sm:$0xff]
    %v134 = vld [vmem:[#allocation3 + $0x50] sm:$0xff]
    %v135 = vld [vmem:[#allocation3 + $0x58] sm:$0xff]
    %v136 = vld [vmem:[#allocation3 + $0x60] sm:$0xff]
    %v137 = vld [vmem:[#allocation3 + $0x68] sm:$0xff]
    %v138 = vld [vmem:[#allocation3 + $0x70] sm:$0xff]
    %v139 = vld [vmem:[#allocation3 + $0x78] sm:$0xff]
    %v140 = vld [vmem:[#allocation3 + $0x80] sm:$0xff]
    %v141 = vld [vmem:[#allocation3 + $0x88] sm:$0xff]
    %v142 = vld [vmem:[#allocation3 + $0x90] sm:$0xff]
    %v143 = vld [vmem:[#allocation3 + $0x98] sm:$0xff]
    %v144 = vld [vmem:[#allocation3 + $0xa0] sm:$0xff]
    %v145 = vld [vmem:[#allocation3 + $0xa8] sm:$0xff]
    %v146 = vld [vmem:[#allocation3 + $0xb0] sm:$0xff]
    %v147 = vld [vmem:[#allocation3 + $0xb8] sm:$0xff]
    %v148 = vld [vmem:[#allocation3 + $0xc0] sm:$0xff]
    %v149 = vld [vmem:[#allocation3 + $0xc8] sm:$0xff]
    %v150 = vld [vmem:[#allocation3 + $0xd0] sm:$0xff]
    %v151 = vld [vmem:[#allocation3 + $0xd8] sm:$0xff]
    %v152 = vld [vmem:[#allocation3 + $0xe0] sm:$0xff]
    %v153 = vld [vmem:[#allocation3 + $0xe8] sm:$0xff]
    %v154 = vld [vmem:[#allocation3 + $0xf0] sm:$0xff]
    %v155 = vld [vmem:[#allocation3 + $0xf8] sm:$0xff]
    %v156 = vld [vmem:[#allocation3 + $0x100] sm:$0xff]
    %v157 = vld [vmem:[#allocation3 + $0x108] sm:$0xff]
    %v158 = vld [vmem:[#allocation3 + $0x110] sm:$0xff]
    %v159 = vld [vmem:[#allocation3 + $0x118] sm:$0xff]
    %v160 = vld [vmem:[#allocation3 + $0x120] sm:$0xff]
    %v161 = vld [vmem:[#allocation3 + $0x128] sm:$0xff]
    %v162 = vld [vmem:[#allocation3 + $0x130] sm:$0xff]
    %v163 = vld [vmem:[#allocation3 + $0x138] sm:$0xff]
    %v164 = vld [vmem:[#allocation3 + $0x140] sm:$0xff]
    %v165 = vld [vmem:[#allocation3 + $0x148] sm:$0xff]
    %v166 = vld [vmem:[#allocation3 + $0x150] sm:$0xff]
    %v167 = vld [vmem:[#allocation3 + $0x158] sm:$0xff]
    %v168 = vld [vmem:[#allocation3 + $0x160] sm:$0xff]
    %v169 = vld [vmem:[#allocation3 + $0x168] sm:$0xff]
    %v170 = vld [vmem:[#allocation3 + $0x170] sm:$0xff]
    %v171 = vld [vmem:[#allocation3 + $0x178] sm:$0xff]
    %v172 = vld [vmem:[#allocation3 + $0x180] sm:$0xff]
    %v173 = vld [vmem:[#allocation3 + $0x188] sm:$0xff]
    %v174 = vld [vmem:[#allocation3 + $0x190] sm:$0xff]
    %v175 = vld [vmem:[#allocation3 + $0x198] sm:$0xff]
    %v176 = vld [vmem:[#allocation3 + $0x1a0] sm:$0xff]
    %v177 = vld [vmem:[#allocation3 + $0x1a8] sm:$0xff]
    %v178 = vld [vmem:[#allocation3 + $0x1b0] sm:$0xff]
    %v179 = vld [vmem:[#allocation3 + $0x1b8] sm:$0xff]
    %v180 = vld [vmem:[#allocation3 + $0x1c0] sm:$0xff]
    %v181 = vld [vmem:[#allocation3 + $0x1c8] sm:$0xff]
    %v182 = vld [vmem:[#allocation3 + $0x1d0] sm:$0xff]
    %v183 = vld [vmem:[#allocation3 + $0x1d8] sm:$0xff]
    %v184 = vld [vmem:[#allocation3 + $0x1e0] sm:$0xff]
    %v185 = vld [vmem:[#allocation3 + $0x1e8] sm:$0xff]
    %v186 = vld [vmem:[#allocation3 + $0x1f0] sm:$0xff]
    %v187 = vld [vmem:[#allocation3 + $0x1f8] sm:$0xff]
    %v188 = vpack.c.bf16 %v125, %v124
    %v189 = vpack.c.bf16 %v127, %v126
    %v190 = vpack.c.bf16 %v129, %v128
    %v191 = vpack.c.bf16 %v131, %v130
    %v192 = vpack.c.bf16 %v133, %v132
    %v193 = vpack.c.bf16 %v135, %v134
    %v194 = vpack.c.bf16 %v137, %v136
    %v195 = vpack.c.bf16 %v139, %v138
    %v196 = vpack.c.bf16 %v141, %v140
    %v197 = vpack.c.bf16 %v143, %v142
    %v198 = vpack.c.bf16 %v145, %v144
    %v199 = vpack.c.bf16 %v147, %v146
    %v200 = vpack.c.bf16 %v149, %v148
    %v201 = vpack.c.bf16 %v151, %v150
    %v202 = vpack.c.bf16 %v153, %v152
    %v203 = vpack.c.bf16 %v155, %v154
    %v204 = vpack.c.bf16 %v157, %v156
    %v205 = vpack.c.bf16 %v159, %v158
    %v206 = vpack.c.bf16 %v161, %v160
    %v207 = vpack.c.bf16 %v163, %v162
    %v208 = vpack.c.bf16 %v165, %v164
    %v209 = vpack.c.bf16 %v167, %v166
    %v210 = vpack.c.bf16 %v169, %v168
    %v211 = vpack.c.bf16 %v171, %v170
    %v212 = vpack.c.bf16 %v173, %v172
    %v213 = vpack.c.bf16 %v175, %v174
    %v214 = vpack.c.bf16 %v177, %v176
    %v215 = vpack.c.bf16 %v179, %v178
    %v216 = vpack.c.bf16 %v181, %v180
    %v217 = vpack.c.bf16 %v183, %v182
    %v218 = vpack.c.bf16 %v185, %v184
    %v219 = vpack.c.bf16 %v187, %v186
    %v220 = vld [vmem:[#allocation6] sm:$0xf]
    %v221 = vld [vmem:[#allocation6 + $0x4] sm:$0xf]
    %v222 = vld [vmem:[#allocation6 + $0x8] sm:$0xf]
    %v223 = vld [vmem:[#allocation6 + $0xc] sm:$0xf]
    %v224 = vld [vmem:[#allocation6 + $0x10] sm:$0xf]
    %v225 = vld [vmem:[#allocation6 + $0x14] sm:$0xf]
    %v226 = vld [vmem:[#allocation6 + $0x18] sm:$0xf]
    %v227 = vld [vmem:[#allocation6 + $0x1c] sm:$0xf]
    %v228 = vld [vmem:[#allocation6 + $0x20] sm:$0xf]
    %v229 = vld [vmem:[#allocation6 + $0x24] sm:$0xf]
    %v230 = vld [vmem:[#allocation6 + $0x28] sm:$0xf]
    %v231 = vld [vmem:[#allocation6 + $0x2c] sm:$0xf]
    %v232 = vld [vmem:[#allocation6 + $0x30] sm:$0xf]
    %v233 = vld [vmem:[#allocation6 + $0x34] sm:$0xf]
    %v234 = vld [vmem:[#allocation6 + $0x38] sm:$0xf]
    %v235 = vld [vmem:[#allocation6 + $0x3c] sm:$0xf]
    %v252 = vunpack.c.l.b16 %v220
    %v253 = vunpack.c.l.b16 %v221
    %v254 = vunpack.c.l.b16 %v222
    %v255 = vunpack.c.l.b16 %v223
    %v256 = vunpack.c.l.b16 %v224
    %v257 = vunpack.c.l.b16 %v225
    %v258 = vunpack.c.l.b16 %v226
    %v259 = vunpack.c.l.b16 %v227
    %v260 = vunpack.c.l.b16 %v228
    %v261 = vunpack.c.l.b16 %v229
    %v262 = vunpack.c.l.b16 %v230
    %v263 = vunpack.c.l.b16 %v231
    %v264 = vunpack.c.l.b16 %v232
    %v265 = vunpack.c.l.b16 %v233
    %v266 = vunpack.c.l.b16 %v234
    %v267 = vunpack.c.l.b16 %v235
    %v268 = vpack.c.b16 %v253, %v252
    %v269 = vpack.c.b16 %v255, %v254
    %v270 = vpack.c.b16 %v257, %v256
    %v271 = vpack.c.b16 %v259, %v258
    %v272 = vpack.c.b16 %v261, %v260
    %v273 = vpack.c.b16 %v263, %v262
    %v274 = vpack.c.b16 %v265, %v264
    %v275 = vpack.c.b16 %v267, %v266
    %284 = vmatpush.bf16.msra.mxu0 %v275
    %285 = vmatpush.bf16.msra.mxu0 %v274
    %286 = vmatpush.bf16.msra.mxu0 %v273
    %287 = vmatpush.bf16.msra.mxu0 %v272
    %288 = vmatpush.bf16.msra.mxu0 %v271
    %289 = vmatpush.bf16.msra.mxu0 %v270
    %290 = vmatpush.bf16.msra.mxu0 %v269
    %291 = vmatpush.bf16.msra.mxu0 %v268
    %292 = vmatmul.bf16.gmra.mxu0 %v188
    %v293 = vpop.f32.mrf.mxu0
    %v294 = vadd.f32 0.0, %v293
    %v295 = vpop.f32.mrf.mxu0
    %v296 = vadd.f32 0.0, %v295
    %297 = vmatmul.bf16.gmra.mxu0 %v189
    %v298 = vpop.f32.mrf.mxu0
    %v299 = vadd.f32 0.0, %v298
    %v300 = vpop.f32.mrf.mxu0
    %v301 = vadd.f32 0.0, %v300
    %302 = vmatmul.bf16.gmra.mxu0 %v190
    %v303 = vpop.f32.mrf.mxu0
    %v304 = vadd.f32 0.0, %v303
    %v305 = vpop.f32.mrf.mxu0
    %v306 = vadd.f32 0.0, %v305
    %307 = vmatmul.bf16.gmra.mxu0 %v191
    %v308 = vpop.f32.mrf.mxu0
    %v309 = vadd.f32 0.0, %v308
    %v310 = vpop.f32.mrf.mxu0
    %v311 = vadd.f32 0.0, %v310
    %312 = vmatmul.bf16.gmra.mxu0 %v192
    %v313 = vpop.f32.mrf.mxu0
    %v314 = vadd.f32 0.0, %v313
    %v315 = vpop.f32.mrf.mxu0
    %v316 = vadd.f32 0.0, %v315
    %317 = vmatmul.bf16.gmra.mxu0 %v193
    %v318 = vpop.f32.mrf.mxu0
    %v319 = vadd.f32 0.0, %v318
    %v320 = vpop.f32.mrf.mxu0
    %v321 = vadd.f32 0.0, %v320
    %322 = vmatmul.bf16.gmra.mxu0 %v194
    %v323 = vpop.f32.mrf.mxu0
    %v324 = vadd.f32 0.0, %v323
    %v325 = vpop.f32.mrf.mxu0
    %v326 = vadd.f32 0.0, %v325
    %327 = vmatmul.bf16.gmra.mxu0 %v195
    %v328 = vpop.f32.mrf.mxu0
    %v329 = vadd.f32 0.0, %v328
    %v330 = vpop.f32.mrf.mxu0
    %v331 = vadd.f32 0.0, %v330
    %332 = vmatmul.bf16.gmra.mxu0 %v196
    %v333 = vpop.f32.mrf.mxu0
    %v334 = vadd.f32 0.0, %v333
    %v335 = vpop.f32.mrf.mxu0
    %v336 = vadd.f32 0.0, %v335
    %337 = vmatmul.bf16.gmra.mxu0 %v197
    %v338 = vpop.f32.mrf.mxu0
    %v339 = vadd.f32 0.0, %v338
    %v340 = vpop.f32.mrf.mxu0
    %v341 = vadd.f32 0.0, %v340
    %342 = vmatmul.bf16.gmra.mxu0 %v198
    %v343 = vpop.f32.mrf.mxu0
    %v344 = vadd.f32 0.0, %v343
    %v345 = vpop.f32.mrf.mxu0
    %v346 = vadd.f32 0.0, %v345
    %347 = vmatmul.bf16.gmra.mxu0 %v199
    %v348 = vpop.f32.mrf.mxu0
    %v349 = vadd.f32 0.0, %v348
    %v350 = vpop.f32.mrf.mxu0
    %v351 = vadd.f32 0.0, %v350
    %352 = vmatmul.bf16.gmra.mxu0 %v200
    %v353 = vpop.f32.mrf.mxu0
    %v354 = vadd.f32 0.0, %v353
    %v355 = vpop.f32.mrf.mxu0
    %v356 = vadd.f32 0.0, %v355
    %357 = vmatmul.bf16.gmra.mxu0 %v201
    %v358 = vpop.f32.mrf.mxu0
    %v359 = vadd.f32 0.0, %v358
    %v360 = vpop.f32.mrf.mxu0
    %v361 = vadd.f32 0.0, %v360
    %362 = vmatmul.bf16.gmra.mxu0 %v202
    %v363 = vpop.f32.mrf.mxu0
    %v364 = vadd.f32 0.0, %v363
    %v365 = vpop.f32.mrf.mxu0
    %v366 = vadd.f32 0.0, %v365
    %367 = vmatmul.bf16.gmra.mxu0 %v203
    %v368 = vpop.f32.mrf.mxu0
    %v369 = vadd.f32 0.0, %v368
    %v370 = vpop.f32.mrf.mxu0
    %v371 = vadd.f32 0.0, %v370
    %372 = vmatmul.bf16.gmra.mxu0 %v204
    %v373 = vpop.f32.mrf.mxu0
    %v374 = vadd.f32 0.0, %v373
    %v375 = vpop.f32.mrf.mxu0
    %v376 = vadd.f32 0.0, %v375
    %377 = vmatmul.bf16.gmra.mxu0 %v205
    %v378 = vpop.f32.mrf.mxu0
    %v379 = vadd.f32 0.0, %v378
    %v380 = vpop.f32.mrf.mxu0
    %v381 = vadd.f32 0.0, %v380
    %382 = vmatmul.bf16.gmra.mxu0 %v206
    %v383 = vpop.f32.mrf.mxu0
    %v384 = vadd.f32 0.0, %v383
    %v385 = vpop.f32.mrf.mxu0
    %v386 = vadd.f32 0.0, %v385
    %387 = vmatmul.bf16.gmra.mxu0 %v207
    %v388 = vpop.f32.mrf.mxu0
    %v389 = vadd.f32 0.0, %v388
    %v390 = vpop.f32.mrf.mxu0
    %v391 = vadd.f32 0.0, %v390
    %392 = vmatmul.bf16.gmra.mxu0 %v208
    %v393 = vpop.f32.mrf.mxu0
    %v394 = vadd.f32 0.0, %v393
    %v395 = vpop.f32.mrf.mxu0
    %v396 = vadd.f32 0.0, %v395
    %397 = vmatmul.bf16.gmra.mxu0 %v209
    %v398 = vpop.f32.mrf.mxu0
    %v399 = vadd.f32 0.0, %v398
    %v400 = vpop.f32.mrf.mxu0
    %v401 = vadd.f32 0.0, %v400
    %402 = vmatmul.bf16.gmra.mxu0 %v210
    %v403 = vpop.f32.mrf.mxu0
    %v404 = vadd.f32 0.0, %v403
    %v405 = vpop.f32.mrf.mxu0
    %v406 = vadd.f32 0.0, %v405
    %407 = vmatmul.bf16.gmra.mxu0 %v211
    %v408 = vpop.f32.mrf.mxu0
    %v409 = vadd.f32 0.0, %v408
    %v410 = vpop.f32.mrf.mxu0
    %v411 = vadd.f32 0.0, %v410
    %412 = vmatmul.bf16.gmra.mxu0 %v212
    %v413 = vpop.f32.mrf.mxu0
    %v414 = vadd.f32 0.0, %v413
    %v415 = vpop.f32.mrf.mxu0
    %v416 = vadd.f32 0.0, %v415
    %417 = vmatmul.bf16.gmra.mxu0 %v213
    %v418 = vpop.f32.mrf.mxu0
    %v419 = vadd.f32 0.0, %v418
    %v420 = vpop.f32.mrf.mxu0
    %v421 = vadd.f32 0.0, %v420
    %422 = vmatmul.bf16.gmra.mxu0 %v214
    %v423 = vpop.f32.mrf.mxu0
    %v424 = vadd.f32 0.0, %v423
    %v425 = vpop.f32.mrf.mxu0
    %v426 = vadd.f32 0.0, %v425
    %427 = vmatmul.bf16.gmra.mxu0 %v215
    %v428 = vpop.f32.mrf.mxu0
    %v429 = vadd.f32 0.0, %v428
    %v430 = vpop.f32.mrf.mxu0
    %v431 = vadd.f32 0.0, %v430
    %432 = vmatmul.bf16.gmra.mxu0 %v216
    %v433 = vpop.f32.mrf.mxu0
    %v434 = vadd.f32 0.0, %v433
    %v435 = vpop.f32.mrf.mxu0
    %v436 = vadd.f32 0.0, %v435
    %437 = vmatmul.bf16.gmra.mxu0 %v217
    %v438 = vpop.f32.mrf.mxu0
    %v439 = vadd.f32 0.0, %v438
    %v440 = vpop.f32.mrf.mxu0
    %v441 = vadd.f32 0.0, %v440
    %442 = vmatmul.bf16.gmra.mxu0 %v218
    %v443 = vpop.f32.mrf.mxu0
    %v444 = vadd.f32 0.0, %v443
    %v445 = vpop.f32.mrf.mxu0
    %v446 = vadd.f32 0.0, %v445
    %447 = vmatmul.bf16.gmra.mxu0 %v219
    %v448 = vpop.f32.mrf.mxu0
    %v449 = vadd.f32 0.0, %v448
    %v450 = vpop.f32.mrf.mxu0
    %v451 = vadd.f32 0.0, %v450
    %452 = vdwg.mxu0
    %v453 = vld [vmem:[%s5] sm:$0x1]
    %v454 = vld [vmem:[%s6] sm:$0x1]
    %v455 = vadd.f32 %v294, %v296
    %v456 = vadd.f32 %v455, %v299
    %v457 = vadd.f32 %v456, %v301
    %v458 = vadd.f32 %v457, %v304
    %v459 = vadd.f32 %v458, %v306
    %v460 = vadd.f32 %v459, %v309
    %v461 = vadd.f32 %v460, %v311
    %v462 = vadd.f32 %v461, %v314
    %v463 = vadd.f32 %v462, %v316
    %v464 = vadd.f32 %v463, %v319
    %v465 = vadd.f32 %v464, %v321
    %v466 = vadd.f32 %v465, %v324
    %v467 = vadd.f32 %v466, %v326
    %v468 = vadd.f32 %v467, %v329
    %v469 = vadd.f32 %v468, %v331
    %v470 = vadd.f32 %v469, %v334
    %v471 = vadd.f32 %v470, %v336
    %v472 = vadd.f32 %v471, %v339
    %v473 = vadd.f32 %v472, %v341
    %v474 = vadd.f32 %v473, %v344
    %v475 = vadd.f32 %v474, %v346
    %v476 = vadd.f32 %v475, %v349
    %v477 = vadd.f32 %v476, %v351
    %v478 = vadd.f32 %v477, %v354
    %v479 = vadd.f32 %v478, %v356
    %v480 = vadd.f32 %v479, %v359
    %v481 = vadd.f32 %v480, %v361
    %v482 = vadd.f32 %v481, %v364
    %v483 = vadd.f32 %v482, %v366
    %v484 = vadd.f32 %v483, %v369
    %v485 = vadd.f32 %v484, %v371
    %v486 = vadd.f32 %v485, %v374
    %v487 = vadd.f32 %v486, %v376
    %v488 = vadd.f32 %v487, %v379
    %v489 = vadd.f32 %v488, %v381
    %v490 = vadd.f32 %v489, %v384
    %v491 = vadd.f32 %v490, %v386
    %v492 = vadd.f32 %v491, %v389
    %v493 = vadd.f32 %v492, %v391
    %v494 = vadd.f32 %v493, %v394
    %v495 = vadd.f32 %v494, %v396
    %v496 = vadd.f32 %v495, %v399
    %v497 = vadd.f32 %v496, %v401
    %v498 = vadd.f32 %v497, %v404
    %v499 = vadd.f32 %v498, %v406
    %v500 = vadd.f32 %v499, %v409
    %v501 = vadd.f32 %v500, %v411
    %v502 = vadd.f32 %v501, %v414
    %v503 = vadd.f32 %v502, %v416
    %v504 = vadd.f32 %v503, %v419
    %v505 = vadd.f32 %v504, %v421
    %v506 = vadd.f32 %v505, %v424
    %v507 = vadd.f32 %v506, %v426
    %v508 = vadd.f32 %v507, %v429
    %v509 = vadd.f32 %v508, %v431
    %v510 = vadd.f32 %v509, %v434
    %v511 = vadd.f32 %v510, %v436
    %v512 = vadd.f32 %v511, %v439
    %v513 = vadd.f32 %v512, %v441
    %v514 = vadd.f32 %v513, %v444
    %v515 = vadd.f32 %v514, %v446
    %v516 = vadd.f32 %v515, %v449
    %v517 = vadd.f32 %v516, %v451
    %v518 = vrot.slane %v517, 4
    %v519 = vadd.f32 %v517, %v518
    %v520 = vrot.slane %v519, 2
    %v521 = vadd.f32 %v519, %v520
    %v522 = vrot.slane %v521, 1
    %v523 = vadd.f32 %v521, %v522
    %v524 = vrcp.pop 512.0
    %v525 = vmul.f32 512.0, %v524
    %v526 = vsub.f32 1.0, %v525
    %v527 = vmul.f32 %v524, %v526
    %v528 = vadd.f32 %v524, %v527
    %vm529 = vweird.f32 %v524
    %v530 = vsel %vm529, %v524, %v528
    %v531 = vmul.f32 %v523, %v530
    %v532 = vsub.f32 %v294, %v531
    %v533 = vsub.f32 %v296, %v531
    %v534 = vsub.f32 %v299, %v531
    %v535 = vsub.f32 %v301, %v531
    %v536 = vsub.f32 %v304, %v531
    %v537 = vsub.f32 %v306, %v531
    %v538 = vsub.f32 %v309, %v531
    %v539 = vsub.f32 %v311, %v531
    %v540 = vsub.f32 %v314, %v531
    %v541 = vsub.f32 %v316, %v531
    %v542 = vsub.f32 %v319, %v531
    %v543 = vsub.f32 %v321, %v531
    %v544 = vsub.f32 %v324, %v531
    %v545 = vsub.f32 %v326, %v531
    %v546 = vsub.f32 %v329, %v531
    %v547 = vsub.f32 %v331, %v531
    %v548 = vsub.f32 %v334, %v531
    %v549 = vsub.f32 %v336, %v531
    %v550 = vsub.f32 %v339, %v531
    %v551 = vsub.f32 %v341, %v531
    %v552 = vsub.f32 %v344, %v531
    %v553 = vsub.f32 %v346, %v531
    %v554 = vsub.f32 %v349, %v531
    %v555 = vsub.f32 %v351, %v531
    %v556 = vsub.f32 %v354, %v531
    %v557 = vsub.f32 %v356, %v531
    %v558 = vsub.f32 %v359, %v531
    %v559 = vsub.f32 %v361, %v531
    %v560 = vsub.f32 %v364, %v531
    %v561 = vsub.f32 %v366, %v531
    %v562 = vsub.f32 %v369, %v531
    %v563 = vsub.f32 %v371, %v531
    %v564 = vsub.f32 %v374, %v531
    %v565 = vsub.f32 %v376, %v531
    %v566 = vsub.f32 %v379, %v531
    %v567 = vsub.f32 %v381, %v531
    %v568 = vsub.f32 %v384, %v531
    %v569 = vsub.f32 %v386, %v531
    %v570 = vsub.f32 %v389, %v531
    %v571 = vsub.f32 %v391, %v531
    %v572 = vsub.f32 %v394, %v531
    %v573 = vsub.f32 %v396, %v531
    %v574 = vsub.f32 %v399, %v531
    %v575 = vsub.f32 %v401, %v531
    %v576 = vsub.f32 %v404, %v531
    %v577 = vsub.f32 %v406, %v531
    %v578 = vsub.f32 %v409, %v531
    %v579 = vsub.f32 %v411, %v531
    %v580 = vsub.f32 %v414, %v531
    %v581 = vsub.f32 %v416, %v531
    %v582 = vsub.f32 %v419, %v531
    %v583 = vsub.f32 %v421, %v531
    %v584 = vsub.f32 %v424, %v531
    %v585 = vsub.f32 %v426, %v531
    %v586 = vsub.f32 %v429, %v531
    %v587 = vsub.f32 %v431, %v531
    %v588 = vsub.f32 %v434, %v531
    %v589 = vsub.f32 %v436, %v531
    %v590 = vsub.f32 %v439, %v531
    %v591 = vsub.f32 %v441, %v531
    %v592 = vsub.f32 %v444, %v531
    %v593 = vsub.f32 %v446, %v531
    %v594 = vsub.f32 %v449, %v531
    %v595 = vsub.f32 %v451, %v531
    %v596 = vmul.f32 %v532, %v532
    %v597 = vmul.f32 %v533, %v533
    %v598 = vmul.f32 %v534, %v534
    %v599 = vmul.f32 %v535, %v535
    %v600 = vmul.f32 %v536, %v536
    %v601 = vmul.f32 %v537, %v537
    %v602 = vmul.f32 %v538, %v538
    %v603 = vmul.f32 %v539, %v539
    %v604 = vmul.f32 %v540, %v540
    %v605 = vmul.f32 %v541, %v541
    %v606 = vmul.f32 %v542, %v542
    %v607 = vmul.f32 %v543, %v543
    %v608 = vmul.f32 %v544, %v544
    %v609 = vmul.f32 %v545, %v545
    %v610 = vmul.f32 %v546, %v546
    %v611 = vmul.f32 %v547, %v547
    %v612 = vmul.f32 %v548, %v548
    %v613 = vmul.f32 %v549, %v549
    %v614 = vmul.f32 %v550, %v550
    %v615 = vmul.f32 %v551, %v551
    %v616 = vmul.f32 %v552, %v552
    %v617 = vmul.f32 %v553, %v553
    %v618 = vmul.f32 %v554, %v554
    %v619 = vmul.f32 %v555, %v555
    %v620 = vmul.f32 %v556, %v556
    %v621 = vmul.f32 %v557, %v557
    %v622 = vmul.f32 %v558, %v558
    %v623 = vmul.f32 %v559, %v559
    %v624 = vmul.f32 %v560, %v560
    %v625 = vmul.f32 %v561, %v561
    %v626 = vmul.f32 %v562, %v562
    %v627 = vmul.f32 %v563, %v563
    %v628 = vmul.f32 %v564, %v564
    %v629 = vmul.f32 %v565, %v565
    %v630 = vmul.f32 %v566, %v566
    %v631 = vmul.f32 %v567, %v567
    %v632 = vmul.f32 %v568, %v568
    %v633 = vmul.f32 %v569, %v569
    %v634 = vmul.f32 %v570, %v570
    %v635 = vmul.f32 %v571, %v571
    %v636 = vmul.f32 %v572, %v572
    %v637 = vmul.f32 %v573, %v573
    %v638 = vmul.f32 %v574, %v574
    %v639 = vmul.f32 %v575, %v575
    %v640 = vmul.f32 %v576, %v576
    %v641 = vmul.f32 %v577, %v577
    %v642 = vmul.f32 %v578, %v578
    %v643 = vmul.f32 %v579, %v579
    %v644 = vmul.f32 %v580, %v580
    %v645 = vmul.f32 %v581, %v581
    %v646 = vmul.f32 %v582, %v582
    %v647 = vmul.f32 %v583, %v583
    %v648 = vmul.f32 %v584, %v584
    %v649 = vmul.f32 %v585, %v585
    %v650 = vmul.f32 %v586, %v586
    %v651 = vmul.f32 %v587, %v587
    %v652 = vmul.f32 %v588, %v588
    %v653 = vmul.f32 %v589, %v589
    %v654 = vmul.f32 %v590, %v590
    %v655 = vmul.f32 %v591, %v591
    %v656 = vmul.f32 %v592, %v592
    %v657 = vmul.f32 %v593, %v593
    %v658 = vmul.f32 %v594, %v594
    %v659 = vmul.f32 %v595, %v595
    %v660 = vadd.f32 %v596, %v597
    %v661 = vadd.f32 %v660, %v598
    %v662 = vadd.f32 %v661, %v599
    %v663 = vadd.f32 %v662, %v600
    %v664 = vadd.f32 %v663, %v601
    %v665 = vadd.f32 %v664, %v602
    %v666 = vadd.f32 %v665, %v603
    %v667 = vadd.f32 %v666, %v604
    %v668 = vadd.f32 %v667, %v605
    %v669 = vadd.f32 %v668, %v606
    %v670 = vadd.f32 %v669, %v607
    %v671 = vadd.f32 %v670, %v608
    %v672 = vadd.f32 %v671, %v609
    %v673 = vadd.f32 %v672, %v610
    %v674 = vadd.f32 %v673, %v611
    %v675 = vadd.f32 %v674, %v612
    %v676 = vadd.f32 %v675, %v613
    %v677 = vadd.f32 %v676, %v614
    %v678 = vadd.f32 %v677, %v615
    %v679 = vadd.f32 %v678, %v616
    %v680 = vadd.f32 %v679, %v617
    %v681 = vadd.f32 %v680, %v618
    %v682 = vadd.f32 %v681, %v619
    %v683 = vadd.f32 %v682, %v620
    %v684 = vadd.f32 %v683, %v621
    %v685 = vadd.f32 %v684, %v622
    %v686 = vadd.f32 %v685, %v623
    %v687 = vadd.f32 %v686, %v624
    %v688 = vadd.f32 %v687, %v625
    %v689 = vadd.f32 %v688, %v626
    %v690 = vadd.f32 %v689, %v627
    %v691 = vadd.f32 %v690, %v628
    %v692 = vadd.f32 %v691, %v629
    %v693 = vadd.f32 %v692, %v630
    %v694 = vadd.f32 %v693, %v631
    %v695 = vadd.f32 %v694, %v632
    %v696 = vadd.f32 %v695, %v633
    %v697 = vadd.f32 %v696, %v634
    %v698 = vadd.f32 %v697, %v635
    %v699 = vadd.f32 %v698, %v636
    %v700 = vadd.f32 %v699, %v637
    %v701 = vadd.f32 %v700, %v638
    %v702 = vadd.f32 %v701, %v639
    %v703 = vadd.f32 %v702, %v640
    %v704 = vadd.f32 %v703, %v641
    %v705 = vadd.f32 %v704, %v642
    %v706 = vadd.f32 %v705, %v643
    %v707 = vadd.f32 %v706, %v644
    %v708 = vadd.f32 %v707, %v645
    %v709 = vadd.f32 %v708, %v646
    %v710 = vadd.f32 %v709, %v647
    %v711 = vadd.f32 %v710, %v648
    %v712 = vadd.f32 %v711, %v649
    %v713 = vadd.f32 %v712, %v650
    %v714 = vadd.f32 %v713, %v651
    %v715 = vadd.f32 %v714, %v652
    %v716 = vadd.f32 %v715, %v653
    %v717 = vadd.f32 %v716, %v654
    %v718 = vadd.f32 %v717, %v655
    %v719 = vadd.f32 %v718, %v656
    %v720 = vadd.f32 %v719, %v657
    %v721 = vadd.f32 %v720, %v658
    %v722 = vadd.f32 %v721, %v659
    %v723 = vrot.slane %v722, 4
    %v724 = vadd.f32 %v722, %v723
    %v725 = vrot.slane %v724, 2
    %v726 = vadd.f32 %v724, %v725
    %v727 = vrot.slane %v726, 1
    %v728 = vadd.f32 %v726, %v727
    %v729 = vmul.f32 %v728, %v530
    %v730 = vadd.f32 %v729, 1e-05
    %v731 = vrsqrt.pop %v730
    %v732 = vmul.f32 %v731, %v730
    %v733 = vmul.f32 %v732, %v731
    %v734 = vmul.f32 0.5, %v733
    %v735 = vsub.f32 1.5, %v734
    %v736 = vmul.f32 %v731, %v735
    %vm737 = vweird.f32 %v730
    %vm738 = vweird.f32 %v731
    %vm739 = vmor %vm737, %vm738
    %v740 = vsel %vm739, %v731, %v736
    %v741 = vmul.f32 %v453, %v740
    %v743 = vperm.slane %v741, 0
    %v745 = vmul.f32 %v532, %v743
    %v746 = vmul.f32 %v533, %v743
    %v747 = vmul.f32 %v534, %v743
    %v748 = vmul.f32 %v535, %v743
    %v749 = vmul.f32 %v536, %v743
    %v750 = vmul.f32 %v537, %v743
    %v751 = vmul.f32 %v538, %v743
    %v752 = vmul.f32 %v539, %v743
    %v753 = vmul.f32 %v540, %v743
    %v754 = vmul.f32 %v541, %v743
    %v755 = vmul.f32 %v542, %v743
    %v756 = vmul.f32 %v543, %v743
    %v757 = vmul.f32 %v544, %v743
    %v758 = vmul.f32 %v545, %v743
    %v759 = vmul.f32 %v546, %v743
    %v760 = vmul.f32 %v547, %v743
    %v761 = vmul.f32 %v548, %v743
    %v762 = vmul.f32 %v549, %v743
    %v763 = vmul.f32 %v550, %v743
    %v764 = vmul.f32 %v551, %v743
    %v765 = vmul.f32 %v552, %v743
    %v766 = vmul.f32 %v553, %v743
    %v767 = vmul.f32 %v554, %v743
    %v768 = vmul.f32 %v555, %v743
    %v769 = vmul.f32 %v556, %v743
    %v770 = vmul.f32 %v557, %v743
    %v771 = vmul.f32 %v558, %v743
    %v772 = vmul.f32 %v559, %v743
    %v773 = vmul.f32 %v560, %v743
    %v774 = vmul.f32 %v561, %v743
    %v775 = vmul.f32 %v562, %v743
    %v776 = vmul.f32 %v563, %v743
    %v777 = vmul.f32 %v564, %v743
    %v778 = vmul.f32 %v565, %v743
    %v779 = vmul.f32 %v566, %v743
    %v780 = vmul.f32 %v567, %v743
    %v781 = vmul.f32 %v568, %v743
    %v782 = vmul.f32 %v569, %v743
    %v783 = vmul.f32 %v570, %v743
    %v784 = vmul.f32 %v571, %v743
    %v785 = vmul.f32 %v572, %v743
    %v786 = vmul.f32 %v573, %v743
    %v787 = vmul.f32 %v574, %v743
    %v788 = vmul.f32 %v575, %v743
    %v789 = vmul.f32 %v576, %v743
    %v790 = vmul.f32 %v577, %v743
    %v791 = vmul.f32 %v578, %v743
    %v792 = vmul.f32 %v579, %v743
    %v793 = vmul.f32 %v580, %v743
    %v794 = vmul.f32 %v581, %v743
    %v795 = vmul.f32 %v582, %v743
    %v796 = vmul.f32 %v583, %v743
    %v797 = vmul.f32 %v584, %v743
    %v798 = vmul.f32 %v585, %v743
    %v799 = vmul.f32 %v586, %v743
    %v800 = vmul.f32 %v587, %v743
    %v801 = vmul.f32 %v588, %v743
    %v802 = vmul.f32 %v589, %v743
    %v803 = vmul.f32 %v590, %v743
    %v804 = vmul.f32 %v591, %v743
    %v805 = vmul.f32 %v592, %v743
    %v806 = vmul.f32 %v593, %v743
    %v807 = vmul.f32 %v594, %v743
    %v808 = vmul.f32 %v595, %v743
    %v810 = vperm.slane %v454, 0
    %v812 = vadd.f32 %v745, %v810
    %v813 = vadd.f32 %v746, %v810
    %v814 = vadd.f32 %v747, %v810
    %v815 = vadd.f32 %v748, %v810
    %v816 = vadd.f32 %v749, %v810
    %v817 = vadd.f32 %v750, %v810
    %v818 = vadd.f32 %v751, %v810
    %v819 = vadd.f32 %v752, %v810
    %v820 = vadd.f32 %v753, %v810
    %v821 = vadd.f32 %v754, %v810
    %v822 = vadd.f32 %v755, %v810
    %v823 = vadd.f32 %v756, %v810
    %v824 = vadd.f32 %v757, %v810
    %v825 = vadd.f32 %v758, %v810
    %v826 = vadd.f32 %v759, %v810
    %v827 = vadd.f32 %v760, %v810
    %v828 = vadd.f32 %v761, %v810
    %v829 = vadd.f32 %v762, %v810
    %v830 = vadd.f32 %v763, %v810
    %v831 = vadd.f32 %v764, %v810
    %v832 = vadd.f32 %v765, %v810
    %v833 = vadd.f32 %v766, %v810
    %v834 = vadd.f32 %v767, %v810
    %v835 = vadd.f32 %v768, %v810
    %v836 = vadd.f32 %v769, %v810
    %v837 = vadd.f32 %v770, %v810
    %v838 = vadd.f32 %v771, %v810
    %v839 = vadd.f32 %v772, %v810
    %v840 = vadd.f32 %v773, %v810
    %v841 = vadd.f32 %v774, %v810
    %v842 = vadd.f32 %v775, %v810
    %v843 = vadd.f32 %v776, %v810
    %v844 = vadd.f32 %v777, %v810
    %v845 = vadd.f32 %v778, %v810
    %v846 = vadd.f32 %v779, %v810
    %v847 = vadd.f32 %v780, %v810
    %v848 = vadd.f32 %v781, %v810
    %v849 = vadd.f32 %v782, %v810
    %v850 = vadd.f32 %v783, %v810
    %v851 = vadd.f32 %v784, %v810
    %v852 = vadd.f32 %v785, %v810
    %v853 = vadd.f32 %v786, %v810
    %v854 = vadd.f32 %v787, %v810
    %v855 = vadd.f32 %v788, %v810
    %v856 = vadd.f32 %v789, %v810
    %v857 = vadd.f32 %v790, %v810
    %v858 = vadd.f32 %v791, %v810
    %v859 = vadd.f32 %v792, %v810
    %v860 = vadd.f32 %v793, %v810
    %v861 = vadd.f32 %v794, %v810
    %v862 = vadd.f32 %v795, %v810
    %v863 = vadd.f32 %v796, %v810
    %v864 = vadd.f32 %v797, %v810
    %v865 = vadd.f32 %v798, %v810
    %v866 = vadd.f32 %v799, %v810
    %v867 = vadd.f32 %v800, %v810
    %v868 = vadd.f32 %v801, %v810
    %v869 = vadd.f32 %v802, %v810
    %v870 = vadd.f32 %v803, %v810
    %v871 = vadd.f32 %v804, %v810
    %v872 = vadd.f32 %v805, %v810
    %v873 = vadd.f32 %v806, %v810
    %v874 = vadd.f32 %v807, %v810
    %v875 = vadd.f32 %v808, %v810
    %v876 = vmax.f32 %v812, 0.0
    %v877 = vmax.f32 %v813, 0.0
    %v878 = vmax.f32 %v814, 0.0
    %v879 = vmax.f32 %v815, 0.0
    %v880 = vmax.f32 %v816, 0.0
    %v881 = vmax.f32 %v817, 0.0
    %v882 = vmax.f32 %v818, 0.0
    %v883 = vmax.f32 %v819, 0.0
    %v884 = vmax.f32 %v820, 0.0
    %v885 = vmax.f32 %v821, 0.0
    %v886 = vmax.f32 %v822, 0.0
    %v887 = vmax.f32 %v823, 0.0
    %v888 = vmax.f32 %v824, 0.0
    %v889 = vmax.f32 %v825, 0.0
    %v890 = vmax.f32 %v826, 0.0
    %v891 = vmax.f32 %v827, 0.0
    %v892 = vmax.f32 %v828, 0.0
    %v893 = vmax.f32 %v829, 0.0
    %v894 = vmax.f32 %v830, 0.0
    %v895 = vmax.f32 %v831, 0.0
    %v896 = vmax.f32 %v832, 0.0
    %v897 = vmax.f32 %v833, 0.0
    %v898 = vmax.f32 %v834, 0.0
    %v899 = vmax.f32 %v835, 0.0
    %v900 = vmax.f32 %v836, 0.0
    %v901 = vmax.f32 %v837, 0.0
    %v902 = vmax.f32 %v838, 0.0
    %v903 = vmax.f32 %v839, 0.0
    %v904 = vmax.f32 %v840, 0.0
    %v905 = vmax.f32 %v841, 0.0
    %v906 = vmax.f32 %v842, 0.0
    %v907 = vmax.f32 %v843, 0.0
    %v908 = vmax.f32 %v844, 0.0
    %v909 = vmax.f32 %v845, 0.0
    %v910 = vmax.f32 %v846, 0.0
    %v911 = vmax.f32 %v847, 0.0
    %v912 = vmax.f32 %v848, 0.0
    %v913 = vmax.f32 %v849, 0.0
    %v914 = vmax.f32 %v850, 0.0
    %v915 = vmax.f32 %v851, 0.0
    %v916 = vmax.f32 %v852, 0.0
    %v917 = vmax.f32 %v853, 0.0
    %v918 = vmax.f32 %v854, 0.0
    %v919 = vmax.f32 %v855, 0.0
    %v920 = vmax.f32 %v856, 0.0
    %v921 = vmax.f32 %v857, 0.0
    %v922 = vmax.f32 %v858, 0.0
    %v923 = vmax.f32 %v859, 0.0
    %v924 = vmax.f32 %v860, 0.0
    %v925 = vmax.f32 %v861, 0.0
    %v926 = vmax.f32 %v862, 0.0
    %v927 = vmax.f32 %v863, 0.0
    %v928 = vmax.f32 %v864, 0.0
    %v929 = vmax.f32 %v865, 0.0
    %v930 = vmax.f32 %v866, 0.0
    %v931 = vmax.f32 %v867, 0.0
    %v932 = vmax.f32 %v868, 0.0
    %v933 = vmax.f32 %v869, 0.0
    %v934 = vmax.f32 %v870, 0.0
    %v935 = vmax.f32 %v871, 0.0
    %v936 = vmax.f32 %v872, 0.0
    %v937 = vmax.f32 %v873, 0.0
    %v938 = vmax.f32 %v874, 0.0
    %v939 = vmax.f32 %v875, 0.0
    %940 = vst [vmem:[#allocation2] sm:$0xf] 0
    %vm941 = vcmask 1040384
    %vm942 = vsmask.f32 256
    %vm943 = vmand %vm941, %vm942
    %v944 = vld [vmem:[#allocation2 + $0x4] sm:$0x1]
    %v945 = vsel %vm943, 0, %v944
    %946 = vst [vmem:[#allocation2 + $0x4] sm:$0x1] %v945
    %947 = vst [vmem:[#allocation2 + $0x48] sm:$0xf] 0
    %v948 = vld [vmem:[#allocation2 + $0x4c] sm:$0x1]
    %v949 = vsel %vm943, 0, %v948
    %950 = vst [vmem:[#allocation2 + $0x4c] sm:$0x1] %v949
    %951 = vst [vmem:[#allocation2 + $0x90] sm:$0xf] 0
    %v952 = vld [vmem:[#allocation2 + $0x94] sm:$0x1]
    %v953 = vsel %vm943, 0, %v952
    %954 = vst [vmem:[#allocation2 + $0x94] sm:$0x1] %v953
    %955 = vst [vmem:[#allocation2 + $0xd8] sm:$0xf] 0
    %v956 = vld [vmem:[#allocation2 + $0xdc] sm:$0x1]
    %v957 = vsel %vm943, 0, %v956
    %958 = vst [vmem:[#allocation2 + $0xdc] sm:$0x1] %v957
    %v959 = vld [vmem:[#allocation2] sm:$0x1]
    %v960 = vsel %vm943, 0, %v959
    %961 = vst [vmem:[#allocation2] sm:$0x1] %v960
    %v962 = vld [vmem:[#allocation2 + $0x8] sm:$0x1]
    %v963 = vsel %vm943, 0, %v962
    %964 = vst [vmem:[#allocation2 + $0x8] sm:$0x1] %v963
    %v965 = vld [vmem:[#allocation2 + $0x10] sm:$0x1]
    %v966 = vsel %vm943, 0, %v965
    %967 = vst [vmem:[#allocation2 + $0x10] sm:$0x1] %v966
    %v968 = vld [vmem:[#allocation2 + $0x18] sm:$0x1]
    %v969 = vsel %vm943, 0, %v968
    %970 = vst [vmem:[#allocation2 + $0x18] sm:$0x1] %v969
    %v971 = vld [vmem:[#allocation2 + $0x20] sm:$0x1]
    %v972 = vsel %vm943, 0, %v971
    %973 = vst [vmem:[#allocation2 + $0x20] sm:$0x1] %v972
    %v974 = vld [vmem:[#allocation2 + $0x28] sm:$0x1]
    %v975 = vsel %vm943, 0, %v974
    %976 = vst [vmem:[#allocation2 + $0x28] sm:$0x1] %v975
    %v977 = vld [vmem:[#allocation2 + $0x30] sm:$0x1]
    %v978 = vsel %vm943, 0, %v977
    %979 = vst [vmem:[#allocation2 + $0x30] sm:$0x1] %v978
    %v980 = vld [vmem:[#allocation2 + $0x38] sm:$0x1]
    %v981 = vsel %vm943, 0, %v980
    %982 = vst [vmem:[#allocation2 + $0x38] sm:$0x1] %v981
    %v983 = vld [vmem:[#allocation2 + $0x40] sm:$0x1]
    %v984 = vsel %vm943, 0, %v983
    %985 = vst [vmem:[#allocation2 + $0x40] sm:$0x1] %v984
    %v986 = vld [vmem:[#allocation2 + $0x48] sm:$0x1]
    %v987 = vsel %vm943, 0, %v986
    %988 = vst [vmem:[#allocation2 + $0x48] sm:$0x1] %v987
    %v989 = vld [vmem:[#allocation2 + $0x50] sm:$0x1]
    %v990 = vsel %vm943, 0, %v989
    %991 = vst [vmem:[#allocation2 + $0x50] sm:$0x1] %v990
    %v992 = vld [vmem:[#allocation2 + $0x58] sm:$0x1]
    %v993 = vsel %vm943, 0, %v992
    %994 = vst [vmem:[#allocation2 + $0x58] sm:$0x1] %v993
    %v995 = vld [vmem:[#allocation2 + $0x60] sm:$0x1]
    %v996 = vsel %vm943, 0, %v995
    %997 = vst [vmem:[#allocation2 + $0x60] sm:$0x1] %v996
    %v998 = vld [vmem:[#allocation2 + $0x68] sm:$0x1]
    %v999 = vsel %vm943, 0, %v998
    %1000 = vst [vmem:[#allocation2 + $0x68] sm:$0x1] %v999
    %v1001 = vld [vmem:[#allocation2 + $0x70] sm:$0x1]
    %v1002 = vsel %vm943, 0, %v1001
    %1003 = vst [vmem:[#allocation2 + $0x70] sm:$0x1] %v1002
    %v1004 = vld [vmem:[#allocation2 + $0x78] sm:$0x1]
    %v1005 = vsel %vm943, 0, %v1004
    %1006 = vst [vmem:[#allocation2 + $0x78] sm:$0x1] %v1005
    %v1007 = vld [vmem:[#allocation2 + $0x80] sm:$0x1]
    %v1008 = vsel %vm943, 0, %v1007
    %1009 = vst [vmem:[#allocation2 + $0x80] sm:$0x1] %v1008
    %v1010 = vld [vmem:[#allocation2 + $0x88] sm:$0x1]
    %v1011 = vsel %vm943, 0, %v1010
    %1012 = vst [vmem:[#allocation2 + $0x88] sm:$0x1] %v1011
    %v1013 = vld [vmem:[#allocation2 + $0x120] sm:$0x1]
    %v1014 = vsel %vm943, 0, %v1013
    %1015 = vst [vmem:[#allocation2 + $0x120] sm:$0x1] %v1014
    %v1016 = vld [vmem:[#allocation2 + $0x128] sm:$0x1]
    %v1017 = vsel %vm943, 0, %v1016
    %1018 = vst [vmem:[#allocation2 + $0x128] sm:$0x1] %v1017
    %v1019 = vld [vmem:[#allocation2 + $0x130] sm:$0x1]
    %v1020 = vsel %vm943, 0, %v1019
    %1021 = vst [vmem:[#allocation2 + $0x130] sm:$0x1] %v1020
    %v1022 = vld [vmem:[#allocation2 + $0x138] sm:$0x1]
    %v1023 = vsel %vm943, 0, %v1022
    %1024 = vst [vmem:[#allocation2 + $0x138] sm:$0x1] %v1023
    %v1025 = vld [vmem:[#allocation2 + $0x140] sm:$0x1]
    %v1026 = vsel %vm943, 0, %v1025
    %1027 = vst [vmem:[#allocation2 + $0x140] sm:$0x1] %v1026
    %v1028 = vld [vmem:[#allocation2 + $0x148] sm:$0x1]
    %v1029 = vsel %vm943, 0, %v1028
    %1030 = vst [vmem:[#allocation2 + $0x148] sm:$0x1] %v1029
    %v1031 = vld [vmem:[#allocation2 + $0x150] sm:$0x1]
    %v1032 = vsel %vm943, 0, %v1031
    %1033 = vst [vmem:[#allocation2 + $0x150] sm:$0x1] %v1032
    %v1034 = vld [vmem:[#allocation2 + $0x158] sm:$0x1]
    %v1035 = vsel %vm943, 0, %v1034
    %1036 = vst [vmem:[#allocation2 + $0x158] sm:$0x1] %v1035
    %v1037 = vld [vmem:[#allocation2 + $0x160] sm:$0x1]
    %v1038 = vsel %vm943, 0, %v1037
    %1039 = vst [vmem:[#allocation2 + $0x160] sm:$0x1] %v1038
    %v1040 = vld [vmem:[#allocation2 + $0x168] sm:$0x1]
    %v1041 = vsel %vm943, 0, %v1040
    %1042 = vst [vmem:[#allocation2 + $0x168] sm:$0x1] %v1041
    %v1043 = vld [vmem:[#allocation2 + $0x170] sm:$0x1]
    %v1044 = vsel %vm943, 0, %v1043
    %1045 = vst [vmem:[#allocation2 + $0x170] sm:$0x1] %v1044
    %v1046 = vld [vmem:[#allocation2 + $0x178] sm:$0x1]
    %v1047 = vsel %vm943, 0, %v1046
    %1048 = vst [vmem:[#allocation2 + $0x178] sm:$0x1] %v1047
    %v1049 = vld [vmem:[#allocation2 + $0x180] sm:$0x1]
    %v1050 = vsel %vm943, 0, %v1049
    %1051 = vst [vmem:[#allocation2 + $0x180] sm:$0x1] %v1050
    %v1052 = vld [vmem:[#allocation2 + $0x188] sm:$0x1]
    %v1053 = vsel %vm943, 0, %v1052
    %1054 = vst [vmem:[#allocation2 + $0x188] sm:$0x1] %v1053
    %v1055 = vld [vmem:[#allocation2 + $0x190] sm:$0x1]
    %v1056 = vsel %vm943, 0, %v1055
    %1057 = vst [vmem:[#allocation2 + $0x190] sm:$0x1] %v1056
    %v1058 = vld [vmem:[#allocation2 + $0x198] sm:$0x1]
    %v1059 = vsel %vm943, 0, %v1058
    %1060 = vst [vmem:[#allocation2 + $0x198] sm:$0x1] %v1059
    %v1061 = vld [vmem:[#allocation2 + $0x1a0] sm:$0x1]
    %v1062 = vsel %vm943, 0, %v1061
    %1063 = vst [vmem:[#allocation2 + $0x1a0] sm:$0x1] %v1062
    %v1064 = vld [vmem:[#allocation2 + $0x1a8] sm:$0x1]
    %v1065 = vsel %vm943, 0, %v1064
    %1066 = vst [vmem:[#allocation2 + $0x1a8] sm:$0x1] %v1065
    %v1067 = vpack.c.bf16 %v876, %v876
    %v1068 = vpack.c.bf16 %v877, %v877
    %v1069 = vpack.c.bf16 %v878, %v878
    %v1070 = vpack.c.bf16 %v879, %v879
    %v1071 = vpack.c.bf16 %v880, %v880
    %v1072 = vpack.c.bf16 %v881, %v881
    %v1073 = vpack.c.bf16 %v882, %v882
    %v1074 = vpack.c.bf16 %v883, %v883
    %v1075 = vpack.c.bf16 %v884, %v884
    %v1076 = vpack.c.bf16 %v885, %v885
    %v1077 = vpack.c.bf16 %v886, %v886
    %v1078 = vpack.c.bf16 %v887, %v887
    %v1079 = vpack.c.bf16 %v888, %v888
    %v1080 = vpack.c.bf16 %v889, %v889
    %v1081 = vpack.c.bf16 %v890, %v890
    %v1082 = vpack.c.bf16 %v891, %v891
    %v1083 = vpack.c.bf16 %v892, %v892
    %v1084 = vpack.c.bf16 %v893, %v893
    %v1085 = vpack.c.bf16 %v894, %v894
    %v1086 = vpack.c.bf16 %v895, %v895
    %v1087 = vpack.c.bf16 %v896, %v896
    %v1088 = vpack.c.bf16 %v897, %v897
    %v1089 = vpack.c.bf16 %v898, %v898
    %v1090 = vpack.c.bf16 %v899, %v899
    %v1091 = vpack.c.bf16 %v900, %v900
    %v1092 = vpack.c.bf16 %v901, %v901
    %v1093 = vpack.c.bf16 %v902, %v902
    %v1094 = vpack.c.bf16 %v903, %v903
    %v1095 = vpack.c.bf16 %v904, %v904
    %v1096 = vpack.c.bf16 %v905, %v905
    %v1097 = vpack.c.bf16 %v906, %v906
    %v1098 = vpack.c.bf16 %v907, %v907
    %v1099 = vpack.c.bf16 %v908, %v908
    %v1100 = vpack.c.bf16 %v909, %v909
    %v1101 = vpack.c.bf16 %v910, %v910
    %v1102 = vpack.c.bf16 %v911, %v911
    %v1103 = vpack.c.bf16 %v912, %v912
    %v1104 = vpack.c.bf16 %v913, %v913
    %v1105 = vpack.c.bf16 %v914, %v914
    %v1106 = vpack.c.bf16 %v915, %v915
    %v1107 = vpack.c.bf16 %v916, %v916
    %v1108 = vpack.c.bf16 %v917, %v917
    %v1109 = vpack.c.bf16 %v918, %v918
    %v1110 = vpack.c.bf16 %v919, %v919
    %v1111 = vpack.c.bf16 %v920, %v920
    %v1112 = vpack.c.bf16 %v921, %v921
    %v1113 = vpack.c.bf16 %v922, %v922
    %v1114 = vpack.c.bf16 %v923, %v923
    %v1115 = vpack.c.bf16 %v924, %v924
    %v1116 = vpack.c.bf16 %v925, %v925
    %v1117 = vpack.c.bf16 %v926, %v926
    %v1118 = vpack.c.bf16 %v927, %v927
    %v1119 = vpack.c.bf16 %v928, %v928
    %v1120 = vpack.c.bf16 %v929, %v929
    %v1121 = vpack.c.bf16 %v930, %v930
    %v1122 = vpack.c.bf16 %v931, %v931
    %v1123 = vpack.c.bf16 %v932, %v932
    %v1124 = vpack.c.bf16 %v933, %v933
    %v1125 = vpack.c.bf16 %v934, %v934
    %v1126 = vpack.c.bf16 %v935, %v935
    %v1127 = vpack.c.bf16 %v936, %v936
    %v1128 = vpack.c.bf16 %v937, %v937
    %v1129 = vpack.c.bf16 %v938, %v938
    %v1130 = vpack.c.bf16 %v939, %v939
    %s1131 = scalar_lea.vmem [#allocation2], 432
    %1132 = vst [vmem:[%s1131] sm:$0xf] %v1067
    %1133 = vst [vmem:[%s1131 + $0x8] sm:$0xf] %v1069
    %1134 = vst [vmem:[%s1131 + $0x10] sm:$0xf] %v1071
    %1135 = vst [vmem:[%s1131 + $0x18] sm:$0xf] %v1073
    %1136 = vst [vmem:[%s1131 + $0x20] sm:$0xf] %v1075
    %1137 = vst [vmem:[%s1131 + $0x28] sm:$0xf] %v1077
    %1138 = vst [vmem:[%s1131 + $0x30] sm:$0xf] %v1079
    %1139 = vst [vmem:[%s1131 + $0x38] sm:$0xf] %v1081
    %1140 = vst [vmem:[%s1131 + $0x48] sm:$0xf] %v1099
    %1141 = vst [vmem:[%s1131 + $0x50] sm:$0xf] %v1101
    %1142 = vst [vmem:[%s1131 + $0x58] sm:$0xf] %v1103
    %1143 = vst [vmem:[%s1131 + $0x60] sm:$0xf] %v1105
    %1144 = vst [vmem:[%s1131 + $0x68] sm:$0xf] %v1107
    %1145 = vst [vmem:[%s1131 + $0x70] sm:$0xf] %v1109
    %1146 = vst [vmem:[%s1131 + $0x78] sm:$0xf] %v1111
    %1147 = vst [vmem:[%s1131 + $0x80] sm:$0xf] %v1113
    %v1149 = vshrl.u32 %v1068, 16
    %v1151 = vrot.slane %v1149, 7
    %v1152 = vshll.u32 %v1068, 16
    %v1154 = vor.u32 %v1151, %v1152
    %v1155 = vrot.slane %v1151, 4
    %v1157 = vshrl.u32 %v1070, 16
    %v1159 = vrot.slane %v1157, 7
    %v1160 = vshll.u32 %v1070, 16
    %v1162 = vor.u32 %v1159, %v1160
    %v1163 = vrot.slane %v1159, 4
    %v1165 = vshrl.u32 %v1072, 16
    %v1167 = vrot.slane %v1165, 7
    %v1168 = vshll.u32 %v1072, 16
    %v1170 = vor.u32 %v1167, %v1168
    %v1171 = vrot.slane %v1167, 4
    %v1173 = vshrl.u32 %v1074, 16
    %v1175 = vrot.slane %v1173, 7
    %v1176 = vshll.u32 %v1074, 16
    %v1178 = vor.u32 %v1175, %v1176
    %v1179 = vrot.slane %v1175, 4
    %v1181 = vshrl.u32 %v1076, 16
    %v1183 = vrot.slane %v1181, 7
    %v1184 = vshll.u32 %v1076, 16
    %v1186 = vor.u32 %v1183, %v1184
    %v1187 = vrot.slane %v1183, 4
    %v1189 = vshrl.u32 %v1078, 16
    %v1191 = vrot.slane %v1189, 7
    %v1192 = vshll.u32 %v1078, 16
    %v1194 = vor.u32 %v1191, %v1192
    %v1195 = vrot.slane %v1191, 4
    %v1197 = vshrl.u32 %v1080, 16
    %v1199 = vrot.slane %v1197, 7
    %v1200 = vshll.u32 %v1080, 16
    %v1202 = vor.u32 %v1199, %v1200
    %v1203 = vrot.slane %v1199, 4
    %v1205 = vshrl.u32 %v1082, 16
    %v1207 = vrot.slane %v1205, 7
    %v1208 = vshll.u32 %v1082, 16
    %v1210 = vor.u32 %v1207, %v1208
    %v1211 = vrot.slane %v1207, 4
    %v1213 = vshrl.u32 %v1100, 16
    %v1215 = vrot.slane %v1213, 7
    %v1216 = vshll.u32 %v1100, 16
    %v1218 = vor.u32 %v1215, %v1216
    %v1219 = vrot.slane %v1215, 4
    %v1221 = vshrl.u32 %v1102, 16
    %v1223 = vrot.slane %v1221, 7
    %v1224 = vshll.u32 %v1102, 16
    %v1226 = vor.u32 %v1223, %v1224
    %v1227 = vrot.slane %v1223, 4
    %v1229 = vshrl.u32 %v1104, 16
    %v1231 = vrot.slane %v1229, 7
    %v1232 = vshll.u32 %v1104, 16
    %v1234 = vor.u32 %v1231, %v1232
    %v1235 = vrot.slane %v1231, 4
    %v1237 = vshrl.u32 %v1106, 16
    %v1239 = vrot.slane %v1237, 7
    %v1240 = vshll.u32 %v1106, 16
    %v1242 = vor.u32 %v1239, %v1240
    %v1243 = vrot.slane %v1239, 4
    %v1245 = vshrl.u32 %v1108, 16
    %v1247 = vrot.slane %v1245, 7
    %v1248 = vshll.u32 %v1108, 16
    %v1250 = vor.u32 %v1247, %v1248
    %v1251 = vrot.slane %v1247, 4
    %v1253 = vshrl.u32 %v1110, 16
    %v1255 = vrot.slane %v1253, 7
    %v1256 = vshll.u32 %v1110, 16
    %v1258 = vor.u32 %v1255, %v1256
    %v1259 = vrot.slane %v1255, 4
    %v1261 = vshrl.u32 %v1112, 16
    %v1263 = vrot.slane %v1261, 7
    %v1264 = vshll.u32 %v1112, 16
    %v1266 = vor.u32 %v1263, %v1264
    %v1267 = vrot.slane %v1263, 4
    %v1269 = vshrl.u32 %v1114, 16
    %v1271 = vrot.slane %v1269, 7
    %v1272 = vshll.u32 %v1114, 16
    %v1274 = vor.u32 %v1271, %v1272
    %v1275 = vrot.slane %v1271, 4
    %s1308 = scalar_lea.vmem [#allocation2], 288
    %vm1309 = vcmask 1043456
    %vm1310 = vsmask.f32 7938
    %vm1311 = vmand %vm1309, %vm1310
    %v1312 = vld [vmem:[%s1308] sm:$0xf]
    %v1313 = vsel %vm1311, %v1154, %v1312
    %1314 = vst [vmem:[%s1308] sm:$0xf] %v1313
    %v1315 = vld [vmem:[%s1308 + $0x4] sm:$0x1]
    %v1316 = vsel %vm943, %v1155, %v1315
    %1317 = vst [vmem:[%s1308 + $0x4] sm:$0x1] %v1316
    %v1318 = vld [vmem:[%s1308 + $0x8] sm:$0xf]
    %v1319 = vsel %vm1311, %v1162, %v1318
    %1320 = vst [vmem:[%s1308 + $0x8] sm:$0xf] %v1319
    %v1321 = vld [vmem:[%s1308 + $0xc] sm:$0x1]
    %v1322 = vsel %vm943, %v1163, %v1321
    %1323 = vst [vmem:[%s1308 + $0xc] sm:$0x1] %v1322
    %v1324 = vld [vmem:[%s1308 + $0x10] sm:$0xf]
    %v1325 = vsel %vm1311, %v1170, %v1324
    %1326 = vst [vmem:[%s1308 + $0x10] sm:$0xf] %v1325
    %v1327 = vld [vmem:[%s1308 + $0x14] sm:$0x1]
    %v1328 = vsel %vm943, %v1171, %v1327
    %1329 = vst [vmem:[%s1308 + $0x14] sm:$0x1] %v1328
    %v1330 = vld [vmem:[%s1308 + $0x18] sm:$0xf]
    %v1331 = vsel %vm1311, %v1178, %v1330
    %1332 = vst [vmem:[%s1308 + $0x18] sm:$0xf] %v1331
    %v1333 = vld [vmem:[%s1308 + $0x1c] sm:$0x1]
    %v1334 = vsel %vm943, %v1179, %v1333
    %1335 = vst [vmem:[%s1308 + $0x1c] sm:$0x1] %v1334
    %v1336 = vld [vmem:[%s1308 + $0x20] sm:$0xf]
    %v1337 = vsel %vm1311, %v1186, %v1336
    %1338 = vst [vmem:[%s1308 + $0x20] sm:$0xf] %v1337
    %v1339 = vld [vmem:[%s1308 + $0x24] sm:$0x1]
    %v1340 = vsel %vm943, %v1187, %v1339
    %1341 = vst [vmem:[%s1308 + $0x24] sm:$0x1] %v1340
    %v1342 = vld [vmem:[%s1308 + $0x28] sm:$0xf]
    %v1343 = vsel %vm1311, %v1194, %v1342
    %1344 = vst [vmem:[%s1308 + $0x28] sm:$0xf] %v1343
    %v1345 = vld [vmem:[%s1308 + $0x2c] sm:$0x1]
    %v1346 = vsel %vm943, %v1195, %v1345
    %1347 = vst [vmem:[%s1308 + $0x2c] sm:$0x1] %v1346
    %v1348 = vld [vmem:[%s1308 + $0x30] sm:$0xf]
    %v1349 = vsel %vm1311, %v1202, %v1348
    %1350 = vst [vmem:[%s1308 + $0x30] sm:$0xf] %v1349
    %v1351 = vld [vmem:[%s1308 + $0x34] sm:$0x1]
    %v1352 = vsel %vm943, %v1203, %v1351
    %1353 = vst [vmem:[%s1308 + $0x34] sm:$0x1] %v1352
    %v1354 = vld [vmem:[%s1308 + $0x38] sm:$0xf]
    %v1355 = vsel %vm1311, %v1210, %v1354
    %1356 = vst [vmem:[%s1308 + $0x38] sm:$0xf] %v1355
    %v1357 = vld [vmem:[%s1308 + $0x3c] sm:$0x1]
    %v1358 = vsel %vm943, %v1211, %v1357
    %1359 = vst [vmem:[%s1308 + $0x3c] sm:$0x1] %v1358
    %v1360 = vld [vmem:[%s1308 + $0x48] sm:$0xf]
    %v1361 = vsel %vm1311, %v1218, %v1360
    %1362 = vst [vmem:[%s1308 + $0x48] sm:$0xf] %v1361
    %v1363 = vld [vmem:[%s1308 + $0x4c] sm:$0x1]
    %v1364 = vsel %vm943, %v1219, %v1363
    %1365 = vst [vmem:[%s1308 + $0x4c] sm:$0x1] %v1364
    %v1366 = vld [vmem:[%s1308 + $0x50] sm:$0xf]
    %v1367 = vsel %vm1311, %v1226, %v1366
    %1368 = vst [vmem:[%s1308 + $0x50] sm:$0xf] %v1367
    %v1369 = vld [vmem:[%s1308 + $0x54] sm:$0x1]
    %v1370 = vsel %vm943, %v1227, %v1369
    %1371 = vst [vmem:[%s1308 + $0x54] sm:$0x1] %v1370
    %v1372 = vld [vmem:[%s1308 + $0x58] sm:$0xf]
    %v1373 = vsel %vm1311, %v1234, %v1372
    %1374 = vst [vmem:[%s1308 + $0x58] sm:$0xf] %v1373
    %v1375 = vld [vmem:[%s1308 + $0x5c] sm:$0x1]
    %v1376 = vsel %vm943, %v1235, %v1375
    %1377 = vst [vmem:[%s1308 + $0x5c] sm:$0x1] %v1376
    %v1378 = vld [vmem:[%s1308 + $0x60] sm:$0xf]
    %v1379 = vsel %vm1311, %v1242, %v1378
    %1380 = vst [vmem:[%s1308 + $0x60] sm:$0xf] %v1379
    %v1381 = vld [vmem:[%s1308 + $0x64] sm:$0x1]
    %v1382 = vsel %vm943, %v1243, %v1381
    %1383 = vst [vmem:[%s1308 + $0x64] sm:$0x1] %v1382
    %v1384 = vld [vmem:[%s1308 + $0x68] sm:$0xf]
    %v1385 = vsel %vm1311, %v1250, %v1384
    %1386 = vst [vmem:[%s1308 + $0x68] sm:$0xf] %v1385
    %v1387 = vld [vmem:[%s1308 + $0x6c] sm:$0x1]
    %v1388 = vsel %vm943, %v1251, %v1387
    %1389 = vst [vmem:[%s1308 + $0x6c] sm:$0x1] %v1388
    %v1390 = vld [vmem:[%s1308 + $0x70] sm:$0xf]
    %v1391 = vsel %vm1311, %v1258, %v1390
    %1392 = vst [vmem:[%s1308 + $0x70] sm:$0xf] %v1391
    %v1393 = vld [vmem:[%s1308 + $0x74] sm:$0x1]
    %v1394 = vsel %vm943, %v1259, %v1393
    %1395 = vst [vmem:[%s1308 + $0x74] sm:$0x1] %v1394
    %v1396 = vld [vmem:[%s1308 + $0x78] sm:$0xf]
    %v1397 = vsel %vm1311, %v1266, %v1396
    %1398 = vst [vmem:[%s1308 + $0x78] sm:$0xf] %v1397
    %v1399 = vld [vmem:[%s1308 + $0x7c] sm:$0x1]
    %v1400 = vsel %vm943, %v1267, %v1399
    %1401 = vst [vmem:[%s1308 + $0x7c] sm:$0x1] %v1400
    %v1402 = vld [vmem:[%s1308 + $0x80] sm:$0xf]
    %v1403 = vsel %vm1311, %v1274, %v1402
    %1404 = vst [vmem:[%s1308 + $0x80] sm:$0xf] %v1403
    %v1405 = vld [vmem:[%s1308 + $0x84] sm:$0x1]
    %v1406 = vsel %vm943, %v1275, %v1405
    %1407 = vst [vmem:[%s1308 + $0x84] sm:$0x1] %v1406
    %s1408 = scalar_lea.vmem [#allocation2], 152
    %1409 = vst [vmem:[%s1408] sm:$0xf] %v1083
    %1410 = vst [vmem:[%s1408 + $0x8] sm:$0xf] %v1085
    %1411 = vst [vmem:[%s1408 + $0x10] sm:$0xf] %v1087
    %1412 = vst [vmem:[%s1408 + $0x18] sm:$0xf] %v1089
    %1413 = vst [vmem:[%s1408 + $0x20] sm:$0xf] %v1091
    %1414 = vst [vmem:[%s1408 + $0x28] sm:$0xf] %v1093
    %1415 = vst [vmem:[%s1408 + $0x30] sm:$0xf] %v1095
    %1416 = vst [vmem:[%s1408 + $0x38] sm:$0xf] %v1097
    %1417 = vst [vmem:[%s1408 + $0x48] sm:$0xf] %v1115
    %1418 = vst [vmem:[%s1408 + $0x50] sm:$0xf] %v1117
    %1419 = vst [vmem:[%s1408 + $0x58] sm:$0xf] %v1119
    %1420 = vst [vmem:[%s1408 + $0x60] sm:$0xf] %v1121
    %1421 = vst [vmem:[%s1408 + $0x68] sm:$0xf] %v1123
    %1422 = vst [vmem:[%s1408 + $0x70] sm:$0xf] %v1125
    %1423 = vst [vmem:[%s1408 + $0x78] sm:$0xf] %v1127
    %1424 = vst [vmem:[%s1408 + $0x80] sm:$0xf] %v1129
    %v1426 = vshrl.u32 %v1084, 16
    %v1428 = vrot.slane %v1426, 7
    %v1429 = vshll.u32 %v1084, 16
    %v1431 = vor.u32 %v1428, %v1429
    %v1432 = vrot.slane %v1428, 4
    %v1434 = vshrl.u32 %v1086, 16
    %v1436 = vrot.slane %v1434, 7
    %v1437 = vshll.u32 %v1086, 16
    %v1439 = vor.u32 %v1436, %v1437
    %v1440 = vrot.slane %v1436, 4
    %v1442 = vshrl.u32 %v1088, 16
    %v1444 = vrot.slane %v1442, 7
    %v1445 = vshll.u32 %v1088, 16
    %v1447 = vor.u32 %v1444, %v1445
    %v1448 = vrot.slane %v1444, 4
    %v1450 = vshrl.u32 %v1090, 16
    %v1452 = vrot.slane %v1450, 7
    %v1453 = vshll.u32 %v1090, 16
    %v1455 = vor.u32 %v1452, %v1453
    %v1456 = vrot.slane %v1452, 4
    %v1458 = vshrl.u32 %v1092, 16
    %v1460 = vrot.slane %v1458, 7
    %v1461 = vshll.u32 %v1092, 16
    %v1463 = vor.u32 %v1460, %v1461
    %v1464 = vrot.slane %v1460, 4
    %v1466 = vshrl.u32 %v1094, 16
    %v1468 = vrot.slane %v1466, 7
    %v1469 = vshll.u32 %v1094, 16
    %v1471 = vor.u32 %v1468, %v1469
    %v1472 = vrot.slane %v1468, 4
    %v1474 = vshrl.u32 %v1096, 16
    %v1476 = vrot.slane %v1474, 7
    %v1477 = vshll.u32 %v1096, 16
    %v1479 = vor.u32 %v1476, %v1477
    %v1480 = vrot.slane %v1476, 4
    %v1482 = vshrl.u32 %v1098, 16
    %v1484 = vrot.slane %v1482, 7
    %v1485 = vshll.u32 %v1098, 16
    %v1487 = vor.u32 %v1484, %v1485
    %v1488 = vrot.slane %v1484, 4
    %v1490 = vshrl.u32 %v1116, 16
    %v1492 = vrot.slane %v1490, 7
    %v1493 = vshll.u32 %v1116, 16
    %v1495 = vor.u32 %v1492, %v1493
    %v1496 = vrot.slane %v1492, 4
    %v1498 = vshrl.u32 %v1118, 16
    %v1500 = vrot.slane %v1498, 7
    %v1501 = vshll.u32 %v1118, 16
    %v1503 = vor.u32 %v1500, %v1501
    %v1504 = vrot.slane %v1500, 4
    %v1506 = vshrl.u32 %v1120, 16
    %v1508 = vrot.slane %v1506, 7
    %v1509 = vshll.u32 %v1120, 16
    %v1511 = vor.u32 %v1508, %v1509
    %v1512 = vrot.slane %v1508, 4
    %v1514 = vshrl.u32 %v1122, 16
    %v1516 = vrot.slane %v1514, 7
    %v1517 = vshll.u32 %v1122, 16
    %v1519 = vor.u32 %v1516, %v1517
    %v1520 = vrot.slane %v1516, 4
    %v1522 = vshrl.u32 %v1124, 16
    %v1524 = vrot.slane %v1522, 7
    %v1525 = vshll.u32 %v1124, 16
    %v1527 = vor.u32 %v1524, %v1525
    %v1528 = vrot.slane %v1524, 4
    %v1530 = vshrl.u32 %v1126, 16
    %v1532 = vrot.slane %v1530, 7
    %v1533 = vshll.u32 %v1126, 16
    %v1535 = vor.u32 %v1532, %v1533
    %v1536 = vrot.slane %v1532, 4
    %v1538 = vshrl.u32 %v1128, 16
    %v1540 = vrot.slane %v1538, 7
    %v1541 = vshll.u32 %v1128, 16
    %v1543 = vor.u32 %v1540, %v1541
    %v1544 = vrot.slane %v1540, 4
    %v1546 = vshrl.u32 %v1130, 16
    %v1548 = vrot.slane %v1546, 7
    %v1549 = vshll.u32 %v1130, 16
    %v1551 = vor.u32 %v1548, %v1549
    %v1552 = vrot.slane %v1548, 4
    %s1585 = scalar_lea.vmem [#allocation2], 8
    %v1586 = vld [vmem:[%s1585] sm:$0xf]
    %v1587 = vsel %vm1311, %v1431, %v1586
    %1588 = vst [vmem:[%s1585] sm:$0xf] %v1587
    %v1589 = vld [vmem:[%s1585 + $0x4] sm:$0x1]
    %v1590 = vsel %vm943, %v1432, %v1589
    %1591 = vst [vmem:[%s1585 + $0x4] sm:$0x1] %v1590
    %v1592 = vld [vmem:[%s1585 + $0x8] sm:$0xf]
    %v1593 = vsel %vm1311, %v1439, %v1592
    %1594 = vst [vmem:[%s1585 + $0x8] sm:$0xf] %v1593
    %v1595 = vld [vmem:[%s1585 + $0xc] sm:$0x1]
    %v1596 = vsel %vm943, %v1440, %v1595
    %1597 = vst [vmem:[%s1585 + $0xc] sm:$0x1] %v1596
    %v1598 = vld [vmem:[%s1585 + $0x10] sm:$0xf]
    %v1599 = vsel %vm1311, %v1447, %v1598
    %1600 = vst [vmem:[%s1585 + $0x10] sm:$0xf] %v1599
    %v1601 = vld [vmem:[%s1585 + $0x14] sm:$0x1]
    %v1602 = vsel %vm943, %v1448, %v1601
    %1603 = vst [vmem:[%s1585 + $0x14] sm:$0x1] %v1602
    %v1604 = vld [vmem:[%s1585 + $0x18] sm:$0xf]
    %v1605 = vsel %vm1311, %v1455, %v1604
    %1606 = vst [vmem:[%s1585 + $0x18] sm:$0xf] %v1605
    %v1607 = vld [vmem:[%s1585 + $0x1c] sm:$0x1]
    %v1608 = vsel %vm943, %v1456, %v1607
    %1609 = vst [vmem:[%s1585 + $0x1c] sm:$0x1] %v1608
    %v1610 = vld [vmem:[%s1585 + $0x20] sm:$0xf]
    %v1611 = vsel %vm1311, %v1463, %v1610
    %1612 = vst [vmem:[%s1585 + $0x20] sm:$0xf] %v1611
    %v1613 = vld [vmem:[%s1585 + $0x24] sm:$0x1]
    %v1614 = vsel %vm943, %v1464, %v1613
    %1615 = vst [vmem:[%s1585 + $0x24] sm:$0x1] %v1614
    %v1616 = vld [vmem:[%s1585 + $0x28] sm:$0xf]
    %v1617 = vsel %vm1311, %v1471, %v1616
    %1618 = vst [vmem:[%s1585 + $0x28] sm:$0xf] %v1617
    %v1619 = vld [vmem:[%s1585 + $0x2c] sm:$0x1]
    %v1620 = vsel %vm943, %v1472, %v1619
    %1621 = vst [vmem:[%s1585 + $0x2c] sm:$0x1] %v1620
    %v1622 = vld [vmem:[%s1585 + $0x30] sm:$0xf]
    %v1623 = vsel %vm1311, %v1479, %v1622
    %1624 = vst [vmem:[%s1585 + $0x30] sm:$0xf] %v1623
    %v1625 = vld [vmem:[%s1585 + $0x34] sm:$0x1]
    %v1626 = vsel %vm943, %v1480, %v1625
    %1627 = vst [vmem:[%s1585 + $0x34] sm:$0x1] %v1626
    %v1628 = vld [vmem:[%s1585 + $0x38] sm:$0xf]
    %v1629 = vsel %vm1311, %v1487, %v1628
    %1630 = vst [vmem:[%s1585 + $0x38] sm:$0xf] %v1629
    %v1631 = vld [vmem:[%s1585 + $0x3c] sm:$0x1]
    %v1632 = vsel %vm943, %v1488, %v1631
    %1633 = vst [vmem:[%s1585 + $0x3c] sm:$0x1] %v1632
    %v1634 = vld [vmem:[%s1585 + $0x48] sm:$0xf]
    %v1635 = vsel %vm1311, %v1495, %v1634
    %1636 = vst [vmem:[%s1585 + $0x48] sm:$0xf] %v1635
    %v1637 = vld [vmem:[%s1585 + $0x4c] sm:$0x1]
    %v1638 = vsel %vm943, %v1496, %v1637
    %1639 = vst [vmem:[%s1585 + $0x4c] sm:$0x1] %v1638
    %v1640 = vld [vmem:[%s1585 + $0x50] sm:$0xf]
    %v1641 = vsel %vm1311, %v1503, %v1640
    %1642 = vst [vmem:[%s1585 + $0x50] sm:$0xf] %v1641
    %v1643 = vld [vmem:[%s1585 + $0x54] sm:$0x1]
    %v1644 = vsel %vm943, %v1504, %v1643
    %1645 = vst [vmem:[%s1585 + $0x54] sm:$0x1] %v1644
    %v1646 = vld [vmem:[%s1585 + $0x58] sm:$0xf]
    %v1647 = vsel %vm1311, %v1511, %v1646
    %1648 = vst [vmem:[%s1585 + $0x58] sm:$0xf] %v1647
    %v1649 = vld [vmem:[%s1585 + $0x5c] sm:$0x1]
    %v1650 = vsel %vm943, %v1512, %v1649
    %1651 = vst [vmem:[%s1585 + $0x5c] sm:$0x1] %v1650
    %v1652 = vld [vmem:[%s1585 + $0x60] sm:$0xf]
    %v1653 = vsel %vm1311, %v1519, %v1652
    %1654 = vst [vmem:[%s1585 + $0x60] sm:$0xf] %v1653
    %v1655 = vld [vmem:[%s1585 + $0x64] sm:$0x1]
    %v1656 = vsel %vm943, %v1520, %v1655
    %1657 = vst [vmem:[%s1585 + $0x64] sm:$0x1] %v1656
    %v1658 = vld [vmem:[%s1585 + $0x68] sm:$0xf]
    %v1659 = vsel %vm1311, %v1527, %v1658
    %1660 = vst [vmem:[%s1585 + $0x68] sm:$0xf] %v1659
    %v1661 = vld [vmem:[%s1585 + $0x6c] sm:$0x1]
    %v1662 = vsel %vm943, %v1528, %v1661
    %1663 = vst [vmem:[%s1585 + $0x6c] sm:$0x1] %v1662
    %v1664 = vld [vmem:[%s1585 + $0x70] sm:$0xf]
    %v1665 = vsel %vm1311, %v1535, %v1664
    %1666 = vst [vmem:[%s1585 + $0x70] sm:$0xf] %v1665
    %v1667 = vld [vmem:[%s1585 + $0x74] sm:$0x1]
    %v1668 = vsel %vm943, %v1536, %v1667
    %1669 = vst [vmem:[%s1585 + $0x74] sm:$0x1] %v1668
    %v1670 = vld [vmem:[%s1585 + $0x78] sm:$0xf]
    %v1671 = vsel %vm1311, %v1543, %v1670
    %1672 = vst [vmem:[%s1585 + $0x78] sm:$0xf] %v1671
    %v1673 = vld [vmem:[%s1585 + $0x7c] sm:$0x1]
    %v1674 = vsel %vm943, %v1544, %v1673
    %1675 = vst [vmem:[%s1585 + $0x7c] sm:$0x1] %v1674
    %v1676 = vld [vmem:[%s1585 + $0x80] sm:$0xf]
    %v1677 = vsel %vm1311, %v1551, %v1676
    %1678 = vst [vmem:[%s1585 + $0x80] sm:$0xf] %v1677
    %v1679 = vld [vmem:[%s1585 + $0x84] sm:$0x1]
    %v1680 = vsel %vm943, %v1552, %v1679
    %1681 = vst [vmem:[%s1585 + $0x84] sm:$0x1] %v1680
    %v1682 = vld [vmem:[#allocation2] sm:$0xf]
    %v1683 = vld [vmem:[#allocation2 + $0x8] sm:$0xf]
    %v1684 = vld [vmem:[#allocation2 + $0x10] sm:$0xf]
    %v1685 = vld [vmem:[#allocation2 + $0x18] sm:$0xf]
    %v1686 = vld [vmem:[#allocation2 + $0x20] sm:$0xf]
    %v1687 = vld [vmem:[#allocation2 + $0x28] sm:$0xf]
    %v1688 = vld [vmem:[#allocation2 + $0x30] sm:$0xf]
    %v1689 = vld [vmem:[#allocation2 + $0x38] sm:$0xf]
    %v1690 = vld [vmem:[#allocation2 + $0x48] sm:$0xf]
    %v1691 = vld [vmem:[#allocation2 + $0x50] sm:$0xf]
    %v1692 = vld [vmem:[#allocation2 + $0x58] sm:$0xf]
    %v1693 = vld [vmem:[#allocation2 + $0x60] sm:$0xf]
    %v1694 = vld [vmem:[#allocation2 + $0x68] sm:$0xf]
    %v1695 = vld [vmem:[#allocation2 + $0x70] sm:$0xf]
    %v1696 = vld [vmem:[#allocation2 + $0x78] sm:$0xf]
    %v1697 = vld [vmem:[#allocation2 + $0x80] sm:$0xf]
    %s1698 = scalar_lea.vmem [#allocation2], 144
    %v1699 = vld [vmem:[%s1698] sm:$0xf]
    %v1700 = vld [vmem:[%s1698 + $0x8] sm:$0xf]
    %v1701 = vld [vmem:[%s1698 + $0x10] sm:$0xf]
    %v1702 = vld [vmem:[%s1698 + $0x18] sm:$0xf]
    %v1703 = vld [vmem:[%s1698 + $0x20] sm:$0xf]
    %v1704 = vld [vmem:[%s1698 + $0x28] sm:$0xf]
    %v1705 = vld [vmem:[%s1698 + $0x30] sm:$0xf]
    %v1706 = vld [vmem:[%s1698 + $0x38] sm:$0xf]
    %v1707 = vld [vmem:[%s1698 + $0x48] sm:$0xf]
    %v1708 = vld [vmem:[%s1698 + $0x50] sm:$0xf]
    %v1709 = vld [vmem:[%s1698 + $0x58] sm:$0xf]
    %v1710 = vld [vmem:[%s1698 + $0x60] sm:$0xf]
    %v1711 = vld [vmem:[%s1698 + $0x68] sm:$0xf]
    %v1712 = vld [vmem:[%s1698 + $0x70] sm:$0xf]
    %v1713 = vld [vmem:[%s1698 + $0x78] sm:$0xf]
    %v1714 = vld [vmem:[%s1698 + $0x80] sm:$0xf]
    %v1715 = vld [vmem:[#allocation2 + $0x4] sm:$0x1]
    %v1716 = vld [vmem:[#allocation2 + $0xc] sm:$0x1]
    %v1717 = vld [vmem:[#allocation2 + $0x14] sm:$0x1]
    %v1718 = vld [vmem:[#allocation2 + $0x1c] sm:$0x1]
    %v1719 = vld [vmem:[#allocation2 + $0x24] sm:$0x1]
    %v1720 = vld [vmem:[#allocation2 + $0x2c] sm:$0x1]
    %v1721 = vld [vmem:[#allocation2 + $0x34] sm:$0x1]
    %v1722 = vld [vmem:[#allocation2 + $0x3c] sm:$0x1]
    %v1723 = vld [vmem:[#allocation2 + $0x4c] sm:$0x1]
    %v1724 = vld [vmem:[#allocation2 + $0x54] sm:$0x1]
    %v1725 = vld [vmem:[#allocation2 + $0x5c] sm:$0x1]
    %v1726 = vld [vmem:[#allocation2 + $0x64] sm:$0x1]
    %v1727 = vld [vmem:[#allocation2 + $0x6c] sm:$0x1]
    %v1728 = vld [vmem:[#allocation2 + $0x74] sm:$0x1]
    %v1729 = vld [vmem:[#allocation2 + $0x7c] sm:$0x1]
    %v1730 = vld [vmem:[#allocation2 + $0x84] sm:$0x1]
    %vm1731 = vsmask.f32 3328
    %vm1732 = vsmask.f32 7440
    %vm1733 = vmor %vm1731, %vm1732
    %v1735 = vshrl.u32 %v1682, 16
    %v1737 = vrot.slane %v1735, 4
    %v1738 = vshll.u32 %v1682, 16
    %v1740 = vrot.slane %v1738, 5
    %v1741 = vor.u32 %v1737, %v1740
    %v1742 = vrot.slane %v1741, 4
    %v1744 = vshll.u32 %v1715, 16
    %v1746 = vrot.slane %v1744, 5
    %v1747 = vsel %vm1733, %v1742, %v1746
    %v1749 = vshrl.u32 %v1683, 16
    %v1751 = vrot.slane %v1749, 4
    %v1752 = vshll.u32 %v1683, 16
    %v1754 = vrot.slane %v1752, 5
    %v1755 = vor.u32 %v1751, %v1754
    %v1756 = vrot.slane %v1755, 4
    %v1758 = vshll.u32 %v1716, 16
    %v1760 = vrot.slane %v1758, 5
    %v1761 = vsel %vm1733, %v1756, %v1760
    %v1763 = vshrl.u32 %v1684, 16
    %v1765 = vrot.slane %v1763, 4
    %v1766 = vshll.u32 %v1684, 16
    %v1768 = vrot.slane %v1766, 5
    %v1769 = vor.u32 %v1765, %v1768
    %v1770 = vrot.slane %v1769, 4
    %v1772 = vshll.u32 %v1717, 16
    %v1774 = vrot.slane %v1772, 5
    %v1775 = vsel %vm1733, %v1770, %v1774
    %v1777 = vshrl.u32 %v1685, 16
    %v1779 = vrot.slane %v1777, 4
    %v1780 = vshll.u32 %v1685, 16
    %v1782 = vrot.slane %v1780, 5
    %v1783 = vor.u32 %v1779, %v1782
    %v1784 = vrot.slane %v1783, 4
    %v1786 = vshll.u32 %v1718, 16
    %v1788 = vrot.slane %v1786, 5
    %v1789 = vsel %vm1733, %v1784, %v1788
    %v1791 = vshrl.u32 %v1686, 16
    %v1793 = vrot.slane %v1791, 4
    %v1794 = vshll.u32 %v1686, 16
    %v1796 = vrot.slane %v1794, 5
    %v1797 = vor.u32 %v1793, %v1796
    %v1798 = vrot.slane %v1797, 4
    %v1800 = vshll.u32 %v1719, 16
    %v1802 = vrot.slane %v1800, 5
    %v1803 = vsel %vm1733, %v1798, %v1802
    %v1805 = vshrl.u32 %v1687, 16
    %v1807 = vrot.slane %v1805, 4
    %v1808 = vshll.u32 %v1687, 16
    %v1810 = vrot.slane %v1808, 5
    %v1811 = vor.u32 %v1807, %v1810
    %v1812 = vrot.slane %v1811, 4
    %v1814 = vshll.u32 %v1720, 16
    %v1816 = vrot.slane %v1814, 5
    %v1817 = vsel %vm1733, %v1812, %v1816
    %v1819 = vshrl.u32 %v1688, 16
    %v1821 = vrot.slane %v1819, 4
    %v1822 = vshll.u32 %v1688, 16
    %v1824 = vrot.slane %v1822, 5
    %v1825 = vor.u32 %v1821, %v1824
    %v1826 = vrot.slane %v1825, 4
    %v1828 = vshll.u32 %v1721, 16
    %v1830 = vrot.slane %v1828, 5
    %v1831 = vsel %vm1733, %v1826, %v1830
    %v1833 = vshrl.u32 %v1689, 16
    %v1835 = vrot.slane %v1833, 4
    %v1836 = vshll.u32 %v1689, 16
    %v1838 = vrot.slane %v1836, 5
    %v1839 = vor.u32 %v1835, %v1838
    %v1840 = vrot.slane %v1839, 4
    %v1842 = vshll.u32 %v1722, 16
    %v1844 = vrot.slane %v1842, 5
    %v1845 = vsel %vm1733, %v1840, %v1844
    %v1847 = vshrl.u32 %v1690, 16
    %v1849 = vrot.slane %v1847, 4
    %v1850 = vshll.u32 %v1690, 16
    %v1852 = vrot.slane %v1850, 5
    %v1853 = vor.u32 %v1849, %v1852
    %v1854 = vrot.slane %v1853, 4
    %v1856 = vshll.u32 %v1723, 16
    %v1858 = vrot.slane %v1856, 5
    %v1859 = vsel %vm1733, %v1854, %v1858
    %v1861 = vshrl.u32 %v1691, 16
    %v1863 = vrot.slane %v1861, 4
    %v1864 = vshll.u32 %v1691, 16
    %v1866 = vrot.slane %v1864, 5
    %v1867 = vor.u32 %v1863, %v1866
    %v1868 = vrot.slane %v1867, 4
    %v1870 = vshll.u32 %v1724, 16
    %v1872 = vrot.slane %v1870, 5
    %v1873 = vsel %vm1733, %v1868, %v1872
    %v1875 = vshrl.u32 %v1692, 16
    %v1877 = vrot.slane %v1875, 4
    %v1878 = vshll.u32 %v1692, 16
    %v1880 = vrot.slane %v1878, 5
    %v1881 = vor.u32 %v1877, %v1880
    %v1882 = vrot.slane %v1881, 4
    %v1884 = vshll.u32 %v1725, 16
    %v1886 = vrot.slane %v1884, 5
    %v1887 = vsel %vm1733, %v1882, %v1886
    %v1889 = vshrl.u32 %v1693, 16
    %v1891 = vrot.slane %v1889, 4
    %v1892 = vshll.u32 %v1693, 16
    %v1894 = vrot.slane %v1892, 5
    %v1895 = vor.u32 %v1891, %v1894
    %v1896 = vrot.slane %v1895, 4
    %v1898 = vshll.u32 %v1726, 16
    %v1900 = vrot.slane %v1898, 5
    %v1901 = vsel %vm1733, %v1896, %v1900
    %v1903 = vshrl.u32 %v1694, 16
    %v1905 = vrot.slane %v1903, 4
    %v1906 = vshll.u32 %v1694, 16
    %v1908 = vrot.slane %v1906, 5
    %v1909 = vor.u32 %v1905, %v1908
    %v1910 = vrot.slane %v1909, 4
    %v1912 = vshll.u32 %v1727, 16
    %v1914 = vrot.slane %v1912, 5
    %v1915 = vsel %vm1733, %v1910, %v1914
    %v1917 = vshrl.u32 %v1695, 16
    %v1919 = vrot.slane %v1917, 4
    %v1920 = vshll.u32 %v1695, 16
    %v1922 = vrot.slane %v1920, 5
    %v1923 = vor.u32 %v1919, %v1922
    %v1924 = vrot.slane %v1923, 4
    %v1926 = vshll.u32 %v1728, 16
    %v1928 = vrot.slane %v1926, 5
    %v1929 = vsel %vm1733, %v1924, %v1928
    %v1931 = vshrl.u32 %v1696, 16
    %v1933 = vrot.slane %v1931, 4
    %v1934 = vshll.u32 %v1696, 16
    %v1936 = vrot.slane %v1934, 5
    %v1937 = vor.u32 %v1933, %v1936
    %v1938 = vrot.slane %v1937, 4
    %v1940 = vshll.u32 %v1729, 16
    %v1942 = vrot.slane %v1940, 5
    %v1943 = vsel %vm1733, %v1938, %v1942
    %v1945 = vshrl.u32 %v1697, 16
    %v1947 = vrot.slane %v1945, 4
    %v1948 = vshll.u32 %v1697, 16
    %v1950 = vrot.slane %v1948, 5
    %v1951 = vor.u32 %v1947, %v1950
    %v1952 = vrot.slane %v1951, 4
    %v1954 = vshll.u32 %v1730, 16
    %v1956 = vrot.slane %v1954, 5
    %v1957 = vsel %vm1733, %v1952, %v1956
    %v1974 = vunpack.c.l.b16 %v1682
    %v1975 = vunpack.c.l.b16 %v1683
    %v1976 = vunpack.c.l.b16 %v1684
    %v1977 = vunpack.c.l.b16 %v1685
    %v1978 = vunpack.c.l.b16 %v1686
    %v1979 = vunpack.c.l.b16 %v1687
    %v1980 = vunpack.c.l.b16 %v1688
    %v1981 = vunpack.c.l.b16 %v1689
    %v1982 = vunpack.c.l.b16 %v1690
    %v1983 = vunpack.c.l.b16 %v1691
    %v1984 = vunpack.c.l.b16 %v1692
    %v1985 = vunpack.c.l.b16 %v1693
    %v1986 = vunpack.c.l.b16 %v1694
    %v1987 = vunpack.c.l.b16 %v1695
    %v1988 = vunpack.c.l.b16 %v1696
    %v1989 = vunpack.c.l.b16 %v1697
    %v1990 = vpack.c.b16 %v1975, %v1974
    %v1991 = vpack.c.b16 %v1977, %v1976
    %v1992 = vpack.c.b16 %v1979, %v1978
    %v1993 = vpack.c.b16 %v1981, %v1980
    %v1994 = vpack.c.b16 %v1983, %v1982
    %v1995 = vpack.c.b16 %v1985, %v1984
    %v1996 = vpack.c.b16 %v1987, %v1986
    %v1997 = vpack.c.b16 %v1989, %v1988
    %v2022 = vunpack.c.l.b16 %v1699
    %v2023 = vunpack.c.l.b16 %v1700
    %v2024 = vunpack.c.l.b16 %v1701
    %v2025 = vunpack.c.l.b16 %v1702
    %v2026 = vunpack.c.l.b16 %v1703
    %v2027 = vunpack.c.l.b16 %v1704
    %v2028 = vunpack.c.l.b16 %v1705
    %v2029 = vunpack.c.l.b16 %v1706
    %v2030 = vunpack.c.l.b16 %v1707
    %v2031 = vunpack.c.l.b16 %v1708
    %v2032 = vunpack.c.l.b16 %v1709
    %v2033 = vunpack.c.l.b16 %v1710
    %v2034 = vunpack.c.l.b16 %v1711
    %v2035 = vunpack.c.l.b16 %v1712
    %v2036 = vunpack.c.l.b16 %v1713
    %v2037 = vunpack.c.l.b16 %v1714
    %v2038 = vpack.c.b16 %v2023, %v2022
    %v2039 = vpack.c.b16 %v2025, %v2024
    %v2040 = vpack.c.b16 %v2027, %v2026
    %v2041 = vpack.c.b16 %v2029, %v2028
    %v2042 = vpack.c.b16 %v2031, %v2030
    %v2043 = vpack.c.b16 %v2033, %v2032
    %v2044 = vpack.c.b16 %v2035, %v2034
    %v2045 = vpack.c.b16 %v2037, %v2036
    %v2054 = vunpack.c.l.b16 %v1747
    %v2055 = vunpack.c.l.b16 %v1761
    %v2056 = vunpack.c.l.b16 %v1775
    %v2057 = vunpack.c.l.b16 %v1789
    %v2058 = vunpack.c.l.b16 %v1803
    %v2059 = vunpack.c.l.b16 %v1817
    %v2060 = vunpack.c.l.b16 %v1831
    %v2061 = vunpack.c.l.b16 %v1845
    %v2062 = vunpack.c.l.b16 %v1859
    %v2063 = vunpack.c.l.b16 %v1873
    %v2064 = vunpack.c.l.b16 %v1887
    %v2065 = vunpack.c.l.b16 %v1901
    %v2066 = vunpack.c.l.b16 %v1915
    %v2067 = vunpack.c.l.b16 %v1929
    %v2068 = vunpack.c.l.b16 %v1943
    %v2069 = vunpack.c.l.b16 %v1957
    %v2070 = vpack.c.b16 %v2055, %v2054
    %v2071 = vpack.c.b16 %v2057, %v2056
    %v2072 = vpack.c.b16 %v2059, %v2058
    %v2073 = vpack.c.b16 %v2061, %v2060
    %v2074 = vpack.c.b16 %v2063, %v2062
    %v2075 = vpack.c.b16 %v2065, %v2064
    %v2076 = vpack.c.b16 %v2067, %v2066
    %v2077 = vpack.c.b16 %v2069, %v2068
    %v2086 = vld [vmem:[#allocation8] sm:$0xf]
    %v2087 = vld [vmem:[#allocation8 + $0x4] sm:$0xf]
    %v2088 = vld [vmem:[#allocation8 + $0x8] sm:$0xf]
    %v2089 = vld [vmem:[#allocation8 + $0xc] sm:$0xf]
    %v2090 = vld [vmem:[#allocation8 + $0x10] sm:$0xf]
    %v2091 = vld [vmem:[#allocation8 + $0x14] sm:$0xf]
    %v2092 = vld [vmem:[#allocation8 + $0x18] sm:$0xf]
    %v2093 = vld [vmem:[#allocation8 + $0x1c] sm:$0xf]
    %v2094 = vld [vmem:[#allocation8 + $0x20] sm:$0xf]
    %v2095 = vld [vmem:[#allocation8 + $0x24] sm:$0xf]
    %v2096 = vld [vmem:[#allocation8 + $0x28] sm:$0xf]
    %v2097 = vld [vmem:[#allocation8 + $0x2c] sm:$0xf]
    %v2098 = vld [vmem:[#allocation8 + $0x30] sm:$0xf]
    %v2099 = vld [vmem:[#allocation8 + $0x34] sm:$0xf]
    %v2100 = vld [vmem:[#allocation8 + $0x38] sm:$0xf]
    %v2101 = vld [vmem:[#allocation8 + $0x3c] sm:$0xf]
    %v2102 = vld [vmem:[#allocation8 + $0x40] sm:$0xf]
    %v2103 = vld [vmem:[#allocation8 + $0x44] sm:$0xf]
    %v2104 = vld [vmem:[#allocation8 + $0x48] sm:$0xf]
    %v2105 = vld [vmem:[#allocation8 + $0x4c] sm:$0xf]
    %v2106 = vld [vmem:[#allocation8 + $0x50] sm:$0xf]
    %v2107 = vld [vmem:[#allocation8 + $0x54] sm:$0xf]
    %v2108 = vld [vmem:[#allocation8 + $0x58] sm:$0xf]
    %v2109 = vld [vmem:[#allocation8 + $0x5c] sm:$0xf]
    %v2110 = vld [vmem:[#allocation8 + $0x60] sm:$0xf]
    %v2111 = vld [vmem:[#allocation8 + $0x64] sm:$0xf]
    %v2112 = vld [vmem:[#allocation8 + $0x68] sm:$0xf]
    %v2113 = vld [vmem:[#allocation8 + $0x6c] sm:$0xf]
    %v2114 = vld [vmem:[#allocation8 + $0x70] sm:$0xf]
    %v2115 = vld [vmem:[#allocation8 + $0x74] sm:$0xf]
    %v2116 = vld [vmem:[#allocation8 + $0x78] sm:$0xf]
    %v2117 = vld [vmem:[#allocation8 + $0x7c] sm:$0xf]
    %v2118 = vld [vmem:[#allocation8 + $0x80] sm:$0xf]
    %v2119 = vld [vmem:[#allocation8 + $0x84] sm:$0xf]
    %v2120 = vld [vmem:[#allocation8 + $0x88] sm:$0xf]
    %v2121 = vld [vmem:[#allocation8 + $0x8c] sm:$0xf]
    %v2122 = vld [vmem:[#allocation8 + $0x90] sm:$0xf]
    %v2123 = vld [vmem:[#allocation8 + $0x94] sm:$0xf]
    %v2124 = vld [vmem:[#allocation8 + $0x98] sm:$0xf]
    %v2125 = vld [vmem:[#allocation8 + $0x9c] sm:$0xf]
    %v2126 = vld [vmem:[#allocation8 + $0xa0] sm:$0xf]
    %v2127 = vld [vmem:[#allocation8 + $0xa4] sm:$0xf]
    %v2128 = vld [vmem:[#allocation8 + $0xa8] sm:$0xf]
    %v2129 = vld [vmem:[#allocation8 + $0xac] sm:$0xf]
    %v2130 = vld [vmem:[#allocation8 + $0xb0] sm:$0xf]
    %v2131 = vld [vmem:[#allocation8 + $0xb4] sm:$0xf]
    %v2132 = vld [vmem:[#allocation8 + $0xb8] sm:$0xf]
    %v2133 = vld [vmem:[#allocation8 + $0xbc] sm:$0xf]
    %v2134 = vld [vmem:[%s1308] sm:$0xf]
    %v2135 = vld [vmem:[%s1308 + $0x8] sm:$0xf]
    %v2136 = vld [vmem:[%s1308 + $0x10] sm:$0xf]
    %v2137 = vld [vmem:[%s1308 + $0x18] sm:$0xf]
    %v2138 = vld [vmem:[%s1308 + $0x20] sm:$0xf]
    %v2139 = vld [vmem:[%s1308 + $0x28] sm:$0xf]
    %v2140 = vld [vmem:[%s1308 + $0x30] sm:$0xf]
    %v2141 = vld [vmem:[%s1308 + $0x38] sm:$0xf]
    %v2142 = vld [vmem:[%s1308 + $0x48] sm:$0xf]
    %v2143 = vld [vmem:[%s1308 + $0x50] sm:$0xf]
    %v2144 = vld [vmem:[%s1308 + $0x58] sm:$0xf]
    %v2145 = vld [vmem:[%s1308 + $0x60] sm:$0xf]
    %v2146 = vld [vmem:[%s1308 + $0x68] sm:$0xf]
    %v2147 = vld [vmem:[%s1308 + $0x70] sm:$0xf]
    %v2148 = vld [vmem:[%s1308 + $0x78] sm:$0xf]
    %v2149 = vld [vmem:[%s1308 + $0x80] sm:$0xf]
    %v2150 = vld [vmem:[%s1131] sm:$0xf]
    %v2151 = vld [vmem:[%s1131 + $0x8] sm:$0xf]
    %v2152 = vld [vmem:[%s1131 + $0x10] sm:$0xf]
    %v2153 = vld [vmem:[%s1131 + $0x18] sm:$0xf]
    %v2154 = vld [vmem:[%s1131 + $0x20] sm:$0xf]
    %v2155 = vld [vmem:[%s1131 + $0x28] sm:$0xf]
    %v2156 = vld [vmem:[%s1131 + $0x30] sm:$0xf]
    %v2157 = vld [vmem:[%s1131 + $0x38] sm:$0xf]
    %v2158 = vld [vmem:[%s1131 + $0x48] sm:$0xf]
    %v2159 = vld [vmem:[%s1131 + $0x50] sm:$0xf]
    %v2160 = vld [vmem:[%s1131 + $0x58] sm:$0xf]
    %v2161 = vld [vmem:[%s1131 + $0x60] sm:$0xf]
    %v2162 = vld [vmem:[%s1131 + $0x68] sm:$0xf]
    %v2163 = vld [vmem:[%s1131 + $0x70] sm:$0xf]
    %v2164 = vld [vmem:[%s1131 + $0x78] sm:$0xf]
    %v2165 = vld [vmem:[%s1131 + $0x80] sm:$0xf]
    %v2166 = vld [vmem:[%s1308 + $0x4] sm:$0x1]
    %v2167 = vld [vmem:[%s1308 + $0xc] sm:$0x1]
    %v2168 = vld [vmem:[%s1308 + $0x14] sm:$0x1]
    %v2169 = vld [vmem:[%s1308 + $0x1c] sm:$0x1]
    %v2170 = vld [vmem:[%s1308 + $0x24] sm:$0x1]
    %v2171 = vld [vmem:[%s1308 + $0x2c] sm:$0x1]
    %v2172 = vld [vmem:[%s1308 + $0x34] sm:$0x1]
    %v2173 = vld [vmem:[%s1308 + $0x3c] sm:$0x1]
    %v2174 = vld [vmem:[%s1308 + $0x4c] sm:$0x1]
    %v2175 = vld [vmem:[%s1308 + $0x54] sm:$0x1]
    %v2176 = vld [vmem:[%s1308 + $0x5c] sm:$0x1]
    %v2177 = vld [vmem:[%s1308 + $0x64] sm:$0x1]
    %v2178 = vld [vmem:[%s1308 + $0x6c] sm:$0x1]
    %v2179 = vld [vmem:[%s1308 + $0x74] sm:$0x1]
    %v2180 = vld [vmem:[%s1308 + $0x7c] sm:$0x1]
    %v2181 = vld [vmem:[%s1308 + $0x84] sm:$0x1]
    %v2183 = vshrl.u32 %v2134, 16
    %v2185 = vrot.slane %v2183, 4
    %v2186 = vshll.u32 %v2134, 16
    %v2188 = vrot.slane %v2186, 5
    %v2189 = vor.u32 %v2185, %v2188
    %v2190 = vrot.slane %v2189, 4
    %v2192 = vshll.u32 %v2166, 16
    %v2194 = vrot.slane %v2192, 5
    %v2195 = vsel %vm1733, %v2190, %v2194
    %v2197 = vshrl.u32 %v2135, 16
    %v2199 = vrot.slane %v2197, 4
    %v2200 = vshll.u32 %v2135, 16
    %v2202 = vrot.slane %v2200, 5
    %v2203 = vor.u32 %v2199, %v2202
    %v2204 = vrot.slane %v2203, 4
    %v2206 = vshll.u32 %v2167, 16
    %v2208 = vrot.slane %v2206, 5
    %v2209 = vsel %vm1733, %v2204, %v2208
    %v2211 = vshrl.u32 %v2136, 16
    %v2213 = vrot.slane %v2211, 4
    %v2214 = vshll.u32 %v2136, 16
    %v2216 = vrot.slane %v2214, 5
    %v2217 = vor.u32 %v2213, %v2216
    %v2218 = vrot.slane %v2217, 4
    %v2220 = vshll.u32 %v2168, 16
    %v2222 = vrot.slane %v2220, 5
    %v2223 = vsel %vm1733, %v2218, %v2222
    %v2225 = vshrl.u32 %v2137, 16
    %v2227 = vrot.slane %v2225, 4
    %v2228 = vshll.u32 %v2137, 16
    %v2230 = vrot.slane %v2228, 5
    %v2231 = vor.u32 %v2227, %v2230
    %v2232 = vrot.slane %v2231, 4
    %v2234 = vshll.u32 %v2169, 16
    %v2236 = vrot.slane %v2234, 5
    %v2237 = vsel %vm1733, %v2232, %v2236
    %v2239 = vshrl.u32 %v2138, 16
    %v2241 = vrot.slane %v2239, 4
    %v2242 = vshll.u32 %v2138, 16
    %v2244 = vrot.slane %v2242, 5
    %v2245 = vor.u32 %v2241, %v2244
    %v2246 = vrot.slane %v2245, 4
    %v2248 = vshll.u32 %v2170, 16
    %v2250 = vrot.slane %v2248, 5
    %v2251 = vsel %vm1733, %v2246, %v2250
    %v2253 = vshrl.u32 %v2139, 16
    %v2255 = vrot.slane %v2253, 4
    %v2256 = vshll.u32 %v2139, 16
    %v2258 = vrot.slane %v2256, 5
    %v2259 = vor.u32 %v2255, %v2258
    %v2260 = vrot.slane %v2259, 4
    %v2262 = vshll.u32 %v2171, 16
    %v2264 = vrot.slane %v2262, 5
    %v2265 = vsel %vm1733, %v2260, %v2264
    %v2267 = vshrl.u32 %v2140, 16
    %v2269 = vrot.slane %v2267, 4
    %v2270 = vshll.u32 %v2140, 16
    %v2272 = vrot.slane %v2270, 5
    %v2273 = vor.u32 %v2269, %v2272
    %v2274 = vrot.slane %v2273, 4
    %v2276 = vshll.u32 %v2172, 16
    %v2278 = vrot.slane %v2276, 5
    %v2279 = vsel %vm1733, %v2274, %v2278
    %v2281 = vshrl.u32 %v2141, 16
    %v2283 = vrot.slane %v2281, 4
    %v2284 = vshll.u32 %v2141, 16
    %v2286 = vrot.slane %v2284, 5
    %v2287 = vor.u32 %v2283, %v2286
    %v2288 = vrot.slane %v2287, 4
    %v2290 = vshll.u32 %v2173, 16
    %v2292 = vrot.slane %v2290, 5
    %v2293 = vsel %vm1733, %v2288, %v2292
    %v2295 = vshrl.u32 %v2142, 16
    %v2297 = vrot.slane %v2295, 4
    %v2298 = vshll.u32 %v2142, 16
    %v2300 = vrot.slane %v2298, 5
    %v2301 = vor.u32 %v2297, %v2300
    %v2302 = vrot.slane %v2301, 4
    %v2304 = vshll.u32 %v2174, 16
    %v2306 = vrot.slane %v2304, 5
    %v2307 = vsel %vm1733, %v2302, %v2306
    %v2309 = vshrl.u32 %v2143, 16
    %v2311 = vrot.slane %v2309, 4
    %v2312 = vshll.u32 %v2143, 16
    %v2314 = vrot.slane %v2312, 5
    %v2315 = vor.u32 %v2311, %v2314
    %v2316 = vrot.slane %v2315, 4
    %v2318 = vshll.u32 %v2175, 16
    %v2320 = vrot.slane %v2318, 5
    %v2321 = vsel %vm1733, %v2316, %v2320
    %v2323 = vshrl.u32 %v2144, 16
    %v2325 = vrot.slane %v2323, 4
    %v2326 = vshll.u32 %v2144, 16
    %v2328 = vrot.slane %v2326, 5
    %v2329 = vor.u32 %v2325, %v2328
    %v2330 = vrot.slane %v2329, 4
    %v2332 = vshll.u32 %v2176, 16
    %v2334 = vrot.slane %v2332, 5
    %v2335 = vsel %vm1733, %v2330, %v2334
    %v2337 = vshrl.u32 %v2145, 16
    %v2339 = vrot.slane %v2337, 4
    %v2340 = vshll.u32 %v2145, 16
    %v2342 = vrot.slane %v2340, 5
    %v2343 = vor.u32 %v2339, %v2342
    %v2344 = vrot.slane %v2343, 4
    %v2346 = vshll.u32 %v2177, 16
    %v2348 = vrot.slane %v2346, 5
    %v2349 = vsel %vm1733, %v2344, %v2348
    %v2351 = vshrl.u32 %v2146, 16
    %v2353 = vrot.slane %v2351, 4
    %v2354 = vshll.u32 %v2146, 16
    %v2356 = vrot.slane %v2354, 5
    %v2357 = vor.u32 %v2353, %v2356
    %v2358 = vrot.slane %v2357, 4
    %v2360 = vshll.u32 %v2178, 16
    %v2362 = vrot.slane %v2360, 5
    %v2363 = vsel %vm1733, %v2358, %v2362
    %v2365 = vshrl.u32 %v2147, 16
    %v2367 = vrot.slane %v2365, 4
    %v2368 = vshll.u32 %v2147, 16
    %v2370 = vrot.slane %v2368, 5
    %v2371 = vor.u32 %v2367, %v2370
    %v2372 = vrot.slane %v2371, 4
    %v2374 = vshll.u32 %v2179, 16
    %v2376 = vrot.slane %v2374, 5
    %v2377 = vsel %vm1733, %v2372, %v2376
    %v2379 = vshrl.u32 %v2148, 16
    %v2381 = vrot.slane %v2379, 4
    %v2382 = vshll.u32 %v2148, 16
    %v2384 = vrot.slane %v2382, 5
    %v2385 = vor.u32 %v2381, %v2384
    %v2386 = vrot.slane %v2385, 4
    %v2388 = vshll.u32 %v2180, 16
    %v2390 = vrot.slane %v2388, 5
    %v2391 = vsel %vm1733, %v2386, %v2390
    %v2393 = vshrl.u32 %v2149, 16
    %v2395 = vrot.slane %v2393, 4
    %v2396 = vshll.u32 %v2149, 16
    %v2398 = vrot.slane %v2396, 5
    %v2399 = vor.u32 %v2395, %v2398
    %v2400 = vrot.slane %v2399, 4
    %v2402 = vshll.u32 %v2181, 16
    %v2404 = vrot.slane %v2402, 5
    %v2405 = vsel %vm1733, %v2400, %v2404
    %v2422 = vunpack.c.l.b16 %v2134
    %v2423 = vunpack.c.l.b16 %v2135
    %v2424 = vunpack.c.l.b16 %v2136
    %v2425 = vunpack.c.l.b16 %v2137
    %v2426 = vunpack.c.l.b16 %v2138
    %v2427 = vunpack.c.l.b16 %v2139
    %v2428 = vunpack.c.l.b16 %v2140
    %v2429 = vunpack.c.l.b16 %v2141
    %v2430 = vunpack.c.l.b16 %v2142
    %v2431 = vunpack.c.l.b16 %v2143
    %v2432 = vunpack.c.l.b16 %v2144
    %v2433 = vunpack.c.l.b16 %v2145
    %v2434 = vunpack.c.l.b16 %v2146
    %v2435 = vunpack.c.l.b16 %v2147
    %v2436 = vunpack.c.l.b16 %v2148
    %v2437 = vunpack.c.l.b16 %v2149
    %v2438 = vpack.c.b16 %v2423, %v2422
    %v2439 = vpack.c.b16 %v2425, %v2424
    %v2440 = vpack.c.b16 %v2427, %v2426
    %v2441 = vpack.c.b16 %v2429, %v2428
    %v2442 = vpack.c.b16 %v2431, %v2430
    %v2443 = vpack.c.b16 %v2433, %v2432
    %v2444 = vpack.c.b16 %v2435, %v2434
    %v2445 = vpack.c.b16 %v2437, %v2436
    %v2470 = vunpack.c.l.b16 %v2150
    %v2471 = vunpack.c.l.b16 %v2151
    %v2472 = vunpack.c.l.b16 %v2152
    %v2473 = vunpack.c.l.b16 %v2153
    %v2474 = vunpack.c.l.b16 %v2154
    %v2475 = vunpack.c.l.b16 %v2155
    %v2476 = vunpack.c.l.b16 %v2156
    %v2477 = vunpack.c.l.b16 %v2157
    %v2478 = vunpack.c.l.b16 %v2158
    %v2479 = vunpack.c.l.b16 %v2159
    %v2480 = vunpack.c.l.b16 %v2160
    %v2481 = vunpack.c.l.b16 %v2161
    %v2482 = vunpack.c.l.b16 %v2162
    %v2483 = vunpack.c.l.b16 %v2163
    %v2484 = vunpack.c.l.b16 %v2164
    %v2485 = vunpack.c.l.b16 %v2165
    %v2486 = vpack.c.b16 %v2471, %v2470
    %v2487 = vpack.c.b16 %v2473, %v2472
    %v2488 = vpack.c.b16 %v2475, %v2474
    %v2489 = vpack.c.b16 %v2477, %v2476
    %v2490 = vpack.c.b16 %v2479, %v2478
    %v2491 = vpack.c.b16 %v2481, %v2480
    %v2492 = vpack.c.b16 %v2483, %v2482
    %v2493 = vpack.c.b16 %v2485, %v2484
    %v2502 = vunpack.c.l.b16 %v2195
    %v2503 = vunpack.c.l.b16 %v2209
    %v2504 = vunpack.c.l.b16 %v2223
    %v2505 = vunpack.c.l.b16 %v2237
    %v2506 = vunpack.c.l.b16 %v2251
    %v2507 = vunpack.c.l.b16 %v2265
    %v2508 = vunpack.c.l.b16 %v2279
    %v2509 = vunpack.c.l.b16 %v2293
    %v2510 = vunpack.c.l.b16 %v2307
    %v2511 = vunpack.c.l.b16 %v2321
    %v2512 = vunpack.c.l.b16 %v2335
    %v2513 = vunpack.c.l.b16 %v2349
    %v2514 = vunpack.c.l.b16 %v2363
    %v2515 = vunpack.c.l.b16 %v2377
    %v2516 = vunpack.c.l.b16 %v2391
    %v2517 = vunpack.c.l.b16 %v2405
    %v2518 = vpack.c.b16 %v2503, %v2502
    %v2519 = vpack.c.b16 %v2505, %v2504
    %v2520 = vpack.c.b16 %v2507, %v2506
    %v2521 = vpack.c.b16 %v2509, %v2508
    %v2522 = vpack.c.b16 %v2511, %v2510
    %v2523 = vpack.c.b16 %v2513, %v2512
    %v2524 = vpack.c.b16 %v2515, %v2514
    %v2525 = vpack.c.b16 %v2517, %v2516
    %s2534 = scalar_lea.vmem [#allocation8], 192
    %v2535 = vld [vmem:[%s2534] sm:$0xf]
    %v2536 = vld [vmem:[%s2534 + $0x4] sm:$0xf]
    %v2537 = vld [vmem:[%s2534 + $0x8] sm:$0xf]
    %v2538 = vld [vmem:[%s2534 + $0xc] sm:$0xf]
    %v2539 = vld [vmem:[%s2534 + $0x10] sm:$0xf]
    %v2540 = vld [vmem:[%s2534 + $0x14] sm:$0xf]
    %v2541 = vld [vmem:[%s2534 + $0x18] sm:$0xf]
    %v2542 = vld [vmem:[%s2534 + $0x1c] sm:$0xf]
    %v2543 = vld [vmem:[%s2534 + $0x20] sm:$0xf]
    %v2544 = vld [vmem:[%s2534 + $0x24] sm:$0xf]
    %v2545 = vld [vmem:[%s2534 + $0x28] sm:$0xf]
    %v2546 = vld [vmem:[%s2534 + $0x2c] sm:$0xf]
    %v2547 = vld [vmem:[%s2534 + $0x30] sm:$0xf]
    %v2548 = vld [vmem:[%s2534 + $0x34] sm:$0xf]
    %v2549 = vld [vmem:[%s2534 + $0x38] sm:$0xf]
    %v2550 = vld [vmem:[%s2534 + $0x3c] sm:$0xf]
    %v2551 = vld [vmem:[%s2534 + $0x40] sm:$0xf]
    %v2552 = vld [vmem:[%s2534 + $0x44] sm:$0xf]
    %v2553 = vld [vmem:[%s2534 + $0x48] sm:$0xf]
    %v2554 = vld [vmem:[%s2534 + $0x4c] sm:$0xf]
    %v2555 = vld [vmem:[%s2534 + $0x50] sm:$0xf]
    %v2556 = vld [vmem:[%s2534 + $0x54] sm:$0xf]
    %v2557 = vld [vmem:[%s2534 + $0x58] sm:$0xf]
    %v2558 = vld [vmem:[%s2534 + $0x5c] sm:$0xf]
    %v2559 = vld [vmem:[%s2534 + $0x60] sm:$0xf]
    %v2560 = vld [vmem:[%s2534 + $0x64] sm:$0xf]
    %v2561 = vld [vmem:[%s2534 + $0x68] sm:$0xf]
    %v2562 = vld [vmem:[%s2534 + $0x6c] sm:$0xf]
    %v2563 = vld [vmem:[%s2534 + $0x70] sm:$0xf]
    %v2564 = vld [vmem:[%s2534 + $0x74] sm:$0xf]
    %v2565 = vld [vmem:[%s2534 + $0x78] sm:$0xf]
    %v2566 = vld [vmem:[%s2534 + $0x7c] sm:$0xf]
    %v2567 = vld [vmem:[%s2534 + $0x80] sm:$0xf]
    %v2568 = vld [vmem:[%s2534 + $0x84] sm:$0xf]
    %v2569 = vld [vmem:[%s2534 + $0x88] sm:$0xf]
    %v2570 = vld [vmem:[%s2534 + $0x8c] sm:$0xf]
    %v2571 = vld [vmem:[%s2534 + $0x90] sm:$0xf]
    %v2572 = vld [vmem:[%s2534 + $0x94] sm:$0xf]
    %v2573 = vld [vmem:[%s2534 + $0x98] sm:$0xf]
    %v2574 = vld [vmem:[%s2534 + $0x9c] sm:$0xf]
    %v2575 = vld [vmem:[%s2534 + $0xa0] sm:$0xf]
    %v2576 = vld [vmem:[%s2534 + $0xa4] sm:$0xf]
    %v2577 = vld [vmem:[%s2534 + $0xa8] sm:$0xf]
    %v2578 = vld [vmem:[%s2534 + $0xac] sm:$0xf]
    %v2579 = vld [vmem:[%s2534 + $0xb0] sm:$0xf]
    %v2580 = vld [vmem:[%s2534 + $0xb4] sm:$0xf]
    %v2581 = vld [vmem:[%s2534 + $0xb8] sm:$0xf]
    %v2582 = vld [vmem:[%s2534 + $0xbc] sm:$0xf]
    %v2631 = vunpack.c.l.b16 %v2535
    %v2632 = vunpack.c.l.b16 %v2536
    %v2633 = vunpack.c.l.b16 %v2537
    %v2634 = vunpack.c.l.b16 %v2538
    %v2635 = vunpack.c.l.b16 %v2539
    %v2636 = vunpack.c.l.b16 %v2540
    %v2637 = vunpack.c.l.b16 %v2541
    %v2638 = vunpack.c.l.b16 %v2542
    %v2639 = vunpack.c.l.b16 %v2543
    %v2640 = vunpack.c.l.b16 %v2544
    %v2641 = vunpack.c.l.b16 %v2545
    %v2642 = vunpack.c.l.b16 %v2546
    %v2643 = vunpack.c.l.b16 %v2547
    %v2644 = vunpack.c.l.b16 %v2548
    %v2645 = vunpack.c.l.b16 %v2549
    %v2646 = vunpack.c.l.b16 %v2550
    %v2647 = vunpack.c.l.b16 %v2551
    %v2648 = vunpack.c.l.b16 %v2552
    %v2649 = vunpack.c.l.b16 %v2553
    %v2650 = vunpack.c.l.b16 %v2554
    %v2651 = vunpack.c.l.b16 %v2555
    %v2652 = vunpack.c.l.b16 %v2556
    %v2653 = vunpack.c.l.b16 %v2557
    %v2654 = vunpack.c.l.b16 %v2558
    %v2655 = vunpack.c.l.b16 %v2559
    %v2656 = vunpack.c.l.b16 %v2560
    %v2657 = vunpack.c.l.b16 %v2561
    %v2658 = vunpack.c.l.b16 %v2562
    %v2659 = vunpack.c.l.b16 %v2563
    %v2660 = vunpack.c.l.b16 %v2564
    %v2661 = vunpack.c.l.b16 %v2565
    %v2662 = vunpack.c.l.b16 %v2566
    %v2663 = vunpack.c.l.b16 %v2567
    %v2664 = vunpack.c.l.b16 %v2568
    %v2665 = vunpack.c.l.b16 %v2569
    %v2666 = vunpack.c.l.b16 %v2570
    %v2667 = vunpack.c.l.b16 %v2571
    %v2668 = vunpack.c.l.b16 %v2572
    %v2669 = vunpack.c.l.b16 %v2573
    %v2670 = vunpack.c.l.b16 %v2574
    %v2671 = vunpack.c.l.b16 %v2575
    %v2672 = vunpack.c.l.b16 %v2576
    %v2673 = vunpack.c.l.b16 %v2577
    %v2674 = vunpack.c.l.b16 %v2578
    %v2675 = vunpack.c.l.b16 %v2579
    %v2676 = vunpack.c.l.b16 %v2580
    %v2677 = vunpack.c.l.b16 %v2581
    %v2678 = vunpack.c.l.b16 %v2582
    %v2679 = vpack.c.b16 %v2632, %v2631
    %v2680 = vpack.c.b16 %v2634, %v2633
    %v2681 = vpack.c.b16 %v2636, %v2635
    %v2682 = vpack.c.b16 %v2638, %v2637
    %v2683 = vpack.c.b16 %v2640, %v2639
    %v2684 = vpack.c.b16 %v2642, %v2641
    %v2685 = vpack.c.b16 %v2644, %v2643
    %v2686 = vpack.c.b16 %v2646, %v2645
    %v2687 = vpack.c.b16 %v2648, %v2647
    %v2688 = vpack.c.b16 %v2650, %v2649
    %v2689 = vpack.c.b16 %v2652, %v2651
    %v2690 = vpack.c.b16 %v2654, %v2653
    %v2691 = vpack.c.b16 %v2656, %v2655
    %v2692 = vpack.c.b16 %v2658, %v2657
    %v2693 = vpack.c.b16 %v2660, %v2659
    %v2694 = vpack.c.b16 %v2662, %v2661
    %v2695 = vpack.c.b16 %v2664, %v2663
    %v2696 = vpack.c.b16 %v2666, %v2665
    %v2697 = vpack.c.b16 %v2668, %v2667
    %v2698 = vpack.c.b16 %v2670, %v2669
    %v2699 = vpack.c.b16 %v2672, %v2671
    %v2700 = vpack.c.b16 %v2674, %v2673
    %v2701 = vpack.c.b16 %v2676, %v2675
    %v2702 = vpack.c.b16 %v2678, %v2677
    %2727 = vmatpush.bf16.msra.mxu0 %v2686
    %2728 = vmatpush.bf16.msra.mxu0 %v2685
    %2729 = vmatpush.bf16.msra.mxu0 %v2684
    %2730 = vmatpush.bf16.msra.mxu0 %v2683
    %2731 = vmatpush.bf16.msra.mxu0 %v2682
    %2732 = vmatpush.bf16.msra.mxu0 %v2681
    %2733 = vmatpush.bf16.msra.mxu0 %v2680
    %2734 = vmatpush.bf16.msra.mxu0 %v2679
    %2735 = vmatmul.bf16.gmra.mxu0 %v2438
    %v2736 = vpop.f32.mrf.mxu0
    %v2737 = vadd.f32 0.0, %v2736
    %v2738 = vpop.f32.mrf.mxu0
    %v2739 = vadd.f32 0.0, %v2738
    %2740 = vmatmul.bf16.gmra.mxu0 %v2439
    %v2741 = vpop.f32.mrf.mxu0
    %v2742 = vadd.f32 0.0, %v2741
    %v2743 = vpop.f32.mrf.mxu0
    %v2744 = vadd.f32 0.0, %v2743
    %2745 = vmatmul.bf16.gmra.mxu0 %v2440
    %v2746 = vpop.f32.mrf.mxu0
    %v2747 = vadd.f32 0.0, %v2746
    %v2748 = vpop.f32.mrf.mxu0
    %v2749 = vadd.f32 0.0, %v2748
    %2750 = vmatmul.bf16.gmra.mxu0 %v2441
    %v2751 = vpop.f32.mrf.mxu0
    %v2752 = vadd.f32 0.0, %v2751
    %v2753 = vpop.f32.mrf.mxu0
    %v2754 = vadd.f32 0.0, %v2753
    %2755 = vmatmul.bf16.gmra.mxu0 %v2442
    %v2756 = vpop.f32.mrf.mxu0
    %v2757 = vadd.f32 0.0, %v2756
    %v2758 = vpop.f32.mrf.mxu0
    %v2759 = vadd.f32 0.0, %v2758
    %2760 = vmatmul.bf16.gmra.mxu0 %v2443
    %v2761 = vpop.f32.mrf.mxu0
    %v2762 = vadd.f32 0.0, %v2761
    %v2763 = vpop.f32.mrf.mxu0
    %v2764 = vadd.f32 0.0, %v2763
    %2765 = vmatmul.bf16.gmra.mxu0 %v2444
    %v2766 = vpop.f32.mrf.mxu0
    %v2767 = vadd.f32 0.0, %v2766
    %v2768 = vpop.f32.mrf.mxu0
    %v2769 = vadd.f32 0.0, %v2768
    %2770 = vmatmul.bf16.gmra.mxu0 %v2445
    %v2771 = vpop.f32.mrf.mxu0
    %v2772 = vadd.f32 0.0, %v2771
    %v2773 = vpop.f32.mrf.mxu0
    %v2774 = vadd.f32 0.0, %v2773
    %2775 = vdwg.mxu0
    %2776 = vmatpush.bf16.msra.mxu0 %v2694
    %2777 = vmatpush.bf16.msra.mxu0 %v2693
    %2778 = vmatpush.bf16.msra.mxu0 %v2692
    %2779 = vmatpush.bf16.msra.mxu0 %v2691
    %2780 = vmatpush.bf16.msra.mxu0 %v2690
    %2781 = vmatpush.bf16.msra.mxu0 %v2689
    %2782 = vmatpush.bf16.msra.mxu0 %v2688
    %2783 = vmatpush.bf16.msra.mxu0 %v2687
    %2784 = vmatmul.bf16.gmra.mxu0 %v2486
    %v2785 = vpop.f32.mrf.mxu0
    %v2786 = vadd.f32 %v2737, %v2785
    %v2787 = vpop.f32.mrf.mxu0
    %v2788 = vadd.f32 %v2739, %v2787
    %2789 = vmatmul.bf16.gmra.mxu0 %v2487
    %v2790 = vpop.f32.mrf.mxu0
    %v2791 = vadd.f32 %v2742, %v2790
    %v2792 = vpop.f32.mrf.mxu0
    %v2793 = vadd.f32 %v2744, %v2792
    %2794 = vmatmul.bf16.gmra.mxu0 %v2488
    %v2795 = vpop.f32.mrf.mxu0
    %v2796 = vadd.f32 %v2747, %v2795
    %v2797 = vpop.f32.mrf.mxu0
    %v2798 = vadd.f32 %v2749, %v2797
    %2799 = vmatmul.bf16.gmra.mxu0 %v2489
    %v2800 = vpop.f32.mrf.mxu0
    %v2801 = vadd.f32 %v2752, %v2800
    %v2802 = vpop.f32.mrf.mxu0
    %v2803 = vadd.f32 %v2754, %v2802
    %2804 = vmatmul.bf16.gmra.mxu0 %v2490
    %v2805 = vpop.f32.mrf.mxu0
    %v2806 = vadd.f32 %v2757, %v2805
    %v2807 = vpop.f32.mrf.mxu0
    %v2808 = vadd.f32 %v2759, %v2807
    %2809 = vmatmul.bf16.gmra.mxu0 %v2491
    %v2810 = vpop.f32.mrf.mxu0
    %v2811 = vadd.f32 %v2762, %v2810
    %v2812 = vpop.f32.mrf.mxu0
    %v2813 = vadd.f32 %v2764, %v2812
    %2814 = vmatmul.bf16.gmra.mxu0 %v2492
    %v2815 = vpop.f32.mrf.mxu0
    %v2816 = vadd.f32 %v2767, %v2815
    %v2817 = vpop.f32.mrf.mxu0
    %v2818 = vadd.f32 %v2769, %v2817
    %2819 = vmatmul.bf16.gmra.mxu0 %v2493
    %v2820 = vpop.f32.mrf.mxu0
    %v2821 = vadd.f32 %v2772, %v2820
    %v2822 = vpop.f32.mrf.mxu0
    %v2823 = vadd.f32 %v2774, %v2822
    %2824 = vdwg.mxu0
    %2825 = vmatpush.bf16.msra.mxu0 %v2702
    %2826 = vmatpush.bf16.msra.mxu0 %v2701
    %2827 = vmatpush.bf16.msra.mxu0 %v2700
    %2828 = vmatpush.bf16.msra.mxu0 %v2699
    %2829 = vmatpush.bf16.msra.mxu0 %v2698
    %2830 = vmatpush.bf16.msra.mxu0 %v2697
    %2831 = vmatpush.bf16.msra.mxu0 %v2696
    %2832 = vmatpush.bf16.msra.mxu0 %v2695
    %2833 = vmatmul.bf16.gmra.mxu0 %v2518
    %v2834 = vpop.f32.mrf.mxu0
    %v2835 = vadd.f32 %v2786, %v2834
    %v2836 = vpop.f32.mrf.mxu0
    %v2837 = vadd.f32 %v2788, %v2836
    %2838 = vmatmul.bf16.gmra.mxu0 %v2519
    %v2839 = vpop.f32.mrf.mxu0
    %v2840 = vadd.f32 %v2791, %v2839
    %v2841 = vpop.f32.mrf.mxu0
    %v2842 = vadd.f32 %v2793, %v2841
    %2843 = vmatmul.bf16.gmra.mxu0 %v2520
    %v2844 = vpop.f32.mrf.mxu0
    %v2845 = vadd.f32 %v2796, %v2844
    %v2846 = vpop.f32.mrf.mxu0
    %v2847 = vadd.f32 %v2798, %v2846
    %2848 = vmatmul.bf16.gmra.mxu0 %v2521
    %v2849 = vpop.f32.mrf.mxu0
    %v2850 = vadd.f32 %v2801, %v2849
    %v2851 = vpop.f32.mrf.mxu0
    %v2852 = vadd.f32 %v2803, %v2851
    %2853 = vmatmul.bf16.gmra.mxu0 %v2522
    %v2854 = vpop.f32.mrf.mxu0
    %v2855 = vadd.f32 %v2806, %v2854
    %v2856 = vpop.f32.mrf.mxu0
    %v2857 = vadd.f32 %v2808, %v2856
    %2858 = vmatmul.bf16.gmra.mxu0 %v2523
    %v2859 = vpop.f32.mrf.mxu0
    %v2860 = vadd.f32 %v2811, %v2859
    %v2861 = vpop.f32.mrf.mxu0
    %v2862 = vadd.f32 %v2813, %v2861
    %2863 = vmatmul.bf16.gmra.mxu0 %v2524
    %v2864 = vpop.f32.mrf.mxu0
    %v2865 = vadd.f32 %v2816, %v2864
    %v2866 = vpop.f32.mrf.mxu0
    %v2867 = vadd.f32 %v2818, %v2866
    %2868 = vmatmul.bf16.gmra.mxu0 %v2525
    %v2869 = vpop.f32.mrf.mxu0
    %v2870 = vadd.f32 %v2821, %v2869
    %v2871 = vpop.f32.mrf.mxu0
    %v2872 = vadd.f32 %v2823, %v2871
    %2873 = vdwg.mxu0
    %v2922 = vunpack.c.l.b16 %v2086
    %v2923 = vunpack.c.l.b16 %v2087
    %v2924 = vunpack.c.l.b16 %v2088
    %v2925 = vunpack.c.l.b16 %v2089
    %v2926 = vunpack.c.l.b16 %v2090
    %v2927 = vunpack.c.l.b16 %v2091
    %v2928 = vunpack.c.l.b16 %v2092
    %v2929 = vunpack.c.l.b16 %v2093
    %v2930 = vunpack.c.l.b16 %v2094
    %v2931 = vunpack.c.l.b16 %v2095
    %v2932 = vunpack.c.l.b16 %v2096
    %v2933 = vunpack.c.l.b16 %v2097
    %v2934 = vunpack.c.l.b16 %v2098
    %v2935 = vunpack.c.l.b16 %v2099
    %v2936 = vunpack.c.l.b16 %v2100
    %v2937 = vunpack.c.l.b16 %v2101
    %v2938 = vunpack.c.l.b16 %v2102
    %v2939 = vunpack.c.l.b16 %v2103
    %v2940 = vunpack.c.l.b16 %v2104
    %v2941 = vunpack.c.l.b16 %v2105
    %v2942 = vunpack.c.l.b16 %v2106
    %v2943 = vunpack.c.l.b16 %v2107
    %v2944 = vunpack.c.l.b16 %v2108
    %v2945 = vunpack.c.l.b16 %v2109
    %v2946 = vunpack.c.l.b16 %v2110
    %v2947 = vunpack.c.l.b16 %v2111
    %v2948 = vunpack.c.l.b16 %v2112
    %v2949 = vunpack.c.l.b16 %v2113
    %v2950 = vunpack.c.l.b16 %v2114
    %v2951 = vunpack.c.l.b16 %v2115
    %v2952 = vunpack.c.l.b16 %v2116
    %v2953 = vunpack.c.l.b16 %v2117
    %v2954 = vunpack.c.l.b16 %v2118
    %v2955 = vunpack.c.l.b16 %v2119
    %v2956 = vunpack.c.l.b16 %v2120
    %v2957 = vunpack.c.l.b16 %v2121
    %v2958 = vunpack.c.l.b16 %v2122
    %v2959 = vunpack.c.l.b16 %v2123
    %v2960 = vunpack.c.l.b16 %v2124
    %v2961 = vunpack.c.l.b16 %v2125
    %v2962 = vunpack.c.l.b16 %v2126
    %v2963 = vunpack.c.l.b16 %v2127
    %v2964 = vunpack.c.l.b16 %v2128
    %v2965 = vunpack.c.l.b16 %v2129
    %v2966 = vunpack.c.l.b16 %v2130
    %v2967 = vunpack.c.l.b16 %v2131
    %v2968 = vunpack.c.l.b16 %v2132
    %v2969 = vunpack.c.l.b16 %v2133
    %v2970 = vpack.c.b16 %v2923, %v2922
    %v2971 = vpack.c.b16 %v2925, %v2924
    %v2972 = vpack.c.b16 %v2927, %v2926
    %v2973 = vpack.c.b16 %v2929, %v2928
    %v2974 = vpack.c.b16 %v2931, %v2930
    %v2975 = vpack.c.b16 %v2933, %v2932
    %v2976 = vpack.c.b16 %v2935, %v2934
    %v2977 = vpack.c.b16 %v2937, %v2936
    %v2978 = vpack.c.b16 %v2939, %v2938
    %v2979 = vpack.c.b16 %v2941, %v2940
    %v2980 = vpack.c.b16 %v2943, %v2942
    %v2981 = vpack.c.b16 %v2945, %v2944
    %v2982 = vpack.c.b16 %v2947, %v2946
    %v2983 = vpack.c.b16 %v2949, %v2948
    %v2984 = vpack.c.b16 %v2951, %v2950
    %v2985 = vpack.c.b16 %v2953, %v2952
    %v2986 = vpack.c.b16 %v2955, %v2954
    %v2987 = vpack.c.b16 %v2957, %v2956
    %v2988 = vpack.c.b16 %v2959, %v2958
    %v2989 = vpack.c.b16 %v2961, %v2960
    %v2990 = vpack.c.b16 %v2963, %v2962
    %v2991 = vpack.c.b16 %v2965, %v2964
    %v2992 = vpack.c.b16 %v2967, %v2966
    %v2993 = vpack.c.b16 %v2969, %v2968
    %3018 = vmatpush.bf16.msra.mxu0 %v2977
    %3019 = vmatpush.bf16.msra.mxu0 %v2976
    %3020 = vmatpush.bf16.msra.mxu0 %v2975
    %3021 = vmatpush.bf16.msra.mxu0 %v2974
    %3022 = vmatpush.bf16.msra.mxu0 %v2973
    %3023 = vmatpush.bf16.msra.mxu0 %v2972
    %3024 = vmatpush.bf16.msra.mxu0 %v2971
    %3025 = vmatpush.bf16.msra.mxu0 %v2970
    %3026 = vmatmul.bf16.gmra.mxu0 %v1990
    %v3027 = vpop.f32.mrf.mxu0
    %v3028 = vadd.f32 %v2835, %v3027
    %v3029 = vpop.f32.mrf.mxu0
    %v3030 = vadd.f32 %v2837, %v3029
    %3031 = vmatmul.bf16.gmra.mxu0 %v1991
    %v3032 = vpop.f32.mrf.mxu0
    %v3033 = vadd.f32 %v2840, %v3032
    %v3034 = vpop.f32.mrf.mxu0
    %v3035 = vadd.f32 %v2842, %v3034
    %3036 = vmatmul.bf16.gmra.mxu0 %v1992
    %v3037 = vpop.f32.mrf.mxu0
    %v3038 = vadd.f32 %v2845, %v3037
    %v3039 = vpop.f32.mrf.mxu0
    %v3040 = vadd.f32 %v2847, %v3039
    %3041 = vmatmul.bf16.gmra.mxu0 %v1993
    %v3042 = vpop.f32.mrf.mxu0
    %v3043 = vadd.f32 %v2850, %v3042
    %v3044 = vpop.f32.mrf.mxu0
    %v3045 = vadd.f32 %v2852, %v3044
    %3046 = vmatmul.bf16.gmra.mxu0 %v1994
    %v3047 = vpop.f32.mrf.mxu0
    %v3048 = vadd.f32 %v2855, %v3047
    %v3049 = vpop.f32.mrf.mxu0
    %v3050 = vadd.f32 %v2857, %v3049
    %3051 = vmatmul.bf16.gmra.mxu0 %v1995
    %v3052 = vpop.f32.mrf.mxu0
    %v3053 = vadd.f32 %v2860, %v3052
    %v3054 = vpop.f32.mrf.mxu0
    %v3055 = vadd.f32 %v2862, %v3054
    %3056 = vmatmul.bf16.gmra.mxu0 %v1996
    %v3057 = vpop.f32.mrf.mxu0
    %v3058 = vadd.f32 %v2865, %v3057
    %v3059 = vpop.f32.mrf.mxu0
    %v3060 = vadd.f32 %v2867, %v3059
    %3061 = vmatmul.bf16.gmra.mxu0 %v1997
    %v3062 = vpop.f32.mrf.mxu0
    %v3063 = vadd.f32 %v2870, %v3062
    %v3064 = vpop.f32.mrf.mxu0
    %v3065 = vadd.f32 %v2872, %v3064
    %3066 = vdwg.mxu0
    %3067 = vmatpush.bf16.msra.mxu0 %v2985
    %3068 = vmatpush.bf16.msra.mxu0 %v2984
    %3069 = vmatpush.bf16.msra.mxu0 %v2983
    %3070 = vmatpush.bf16.msra.mxu0 %v2982
    %3071 = vmatpush.bf16.msra.mxu0 %v2981
    %3072 = vmatpush.bf16.msra.mxu0 %v2980
    %3073 = vmatpush.bf16.msra.mxu0 %v2979
    %3074 = vmatpush.bf16.msra.mxu0 %v2978
    %3075 = vmatmul.bf16.gmra.mxu0 %v2038
    %v3076 = vpop.f32.mrf.mxu0
    %v3077 = vadd.f32 %v3028, %v3076
    %v3078 = vpop.f32.mrf.mxu0
    %v3079 = vadd.f32 %v3030, %v3078
    %3080 = vmatmul.bf16.gmra.mxu0 %v2039
    %v3081 = vpop.f32.mrf.mxu0
    %v3082 = vadd.f32 %v3033, %v3081
    %v3083 = vpop.f32.mrf.mxu0
    %v3084 = vadd.f32 %v3035, %v3083
    %3085 = vmatmul.bf16.gmra.mxu0 %v2040
    %v3086 = vpop.f32.mrf.mxu0
    %v3087 = vadd.f32 %v3038, %v3086
    %v3088 = vpop.f32.mrf.mxu0
    %v3089 = vadd.f32 %v3040, %v3088
    %3090 = vmatmul.bf16.gmra.mxu0 %v2041
    %v3091 = vpop.f32.mrf.mxu0
    %v3092 = vadd.f32 %v3043, %v3091
    %v3093 = vpop.f32.mrf.mxu0
    %v3094 = vadd.f32 %v3045, %v3093
    %3095 = vmatmul.bf16.gmra.mxu0 %v2042
    %v3096 = vpop.f32.mrf.mxu0
    %v3097 = vadd.f32 %v3048, %v3096
    %v3098 = vpop.f32.mrf.mxu0
    %v3099 = vadd.f32 %v3050, %v3098
    %3100 = vmatmul.bf16.gmra.mxu0 %v2043
    %v3101 = vpop.f32.mrf.mxu0
    %v3102 = vadd.f32 %v3053, %v3101
    %v3103 = vpop.f32.mrf.mxu0
    %v3104 = vadd.f32 %v3055, %v3103
    %3105 = vmatmul.bf16.gmra.mxu0 %v2044
    %v3106 = vpop.f32.mrf.mxu0
    %v3107 = vadd.f32 %v3058, %v3106
    %v3108 = vpop.f32.mrf.mxu0
    %v3109 = vadd.f32 %v3060, %v3108
    %3110 = vmatmul.bf16.gmra.mxu0 %v2045
    %v3111 = vpop.f32.mrf.mxu0
    %v3112 = vadd.f32 %v3063, %v3111
    %v3113 = vpop.f32.mrf.mxu0
    %v3114 = vadd.f32 %v3065, %v3113
    %3115 = vdwg.mxu0
    %3116 = vmatpush.bf16.msra.mxu0 %v2993
    %3117 = vmatpush.bf16.msra.mxu0 %v2992
    %3118 = vmatpush.bf16.msra.mxu0 %v2991
    %3119 = vmatpush.bf16.msra.mxu0 %v2990
    %3120 = vmatpush.bf16.msra.mxu0 %v2989
    %3121 = vmatpush.bf16.msra.mxu0 %v2988
    %3122 = vmatpush.bf16.msra.mxu0 %v2987
    %3123 = vmatpush.bf16.msra.mxu0 %v2986
    %3124 = vmatmul.bf16.gmra.mxu0 %v2070
    %v3125 = vpop.f32.mrf.mxu0
    %v3126 = vadd.f32 %v3077, %v3125
    %v3127 = vpop.f32.mrf.mxu0
    %v3128 = vadd.f32 %v3079, %v3127
    %3129 = vmatmul.bf16.gmra.mxu0 %v2071
    %v3130 = vpop.f32.mrf.mxu0
    %v3131 = vadd.f32 %v3082, %v3130
    %v3132 = vpop.f32.mrf.mxu0
    %v3133 = vadd.f32 %v3084, %v3132
    %3134 = vmatmul.bf16.gmra.mxu0 %v2072
    %v3135 = vpop.f32.mrf.mxu0
    %v3136 = vadd.f32 %v3087, %v3135
    %v3137 = vpop.f32.mrf.mxu0
    %v3138 = vadd.f32 %v3089, %v3137
    %3139 = vmatmul.bf16.gmra.mxu0 %v2073
    %v3140 = vpop.f32.mrf.mxu0
    %v3141 = vadd.f32 %v3092, %v3140
    %v3142 = vpop.f32.mrf.mxu0
    %v3143 = vadd.f32 %v3094, %v3142
    %3144 = vmatmul.bf16.gmra.mxu0 %v2074
    %v3145 = vpop.f32.mrf.mxu0
    %v3146 = vadd.f32 %v3097, %v3145
    %v3147 = vpop.f32.mrf.mxu0
    %v3148 = vadd.f32 %v3099, %v3147
    %3149 = vmatmul.bf16.gmra.mxu0 %v2075
    %v3150 = vpop.f32.mrf.mxu0
    %v3151 = vadd.f32 %v3102, %v3150
    %v3152 = vpop.f32.mrf.mxu0
    %v3153 = vadd.f32 %v3104, %v3152
    %3154 = vmatmul.bf16.gmra.mxu0 %v2076
    %v3155 = vpop.f32.mrf.mxu0
    %v3156 = vadd.f32 %v3107, %v3155
    %v3157 = vpop.f32.mrf.mxu0
    %v3158 = vadd.f32 %v3109, %v3157
    %3159 = vmatmul.bf16.gmra.mxu0 %v2077
    %v3160 = vpop.f32.mrf.mxu0
    %v3161 = vadd.f32 %v3112, %v3160
    %v3162 = vpop.f32.mrf.mxu0
    %v3163 = vadd.f32 %v3114, %v3162
    %3164 = vdwg.mxu0
    %v3165 = vld [vmem:[%s1585] sm:$0xf]
    %v3166 = vld [vmem:[%s1585 + $0x8] sm:$0xf]
    %v3167 = vld [vmem:[%s1585 + $0x10] sm:$0xf]
    %v3168 = vld [vmem:[%s1585 + $0x18] sm:$0xf]
    %v3169 = vld [vmem:[%s1585 + $0x20] sm:$0xf]
    %v3170 = vld [vmem:[%s1585 + $0x28] sm:$0xf]
    %v3171 = vld [vmem:[%s1585 + $0x30] sm:$0xf]
    %v3172 = vld [vmem:[%s1585 + $0x38] sm:$0xf]
    %v3173 = vld [vmem:[%s1585 + $0x48] sm:$0xf]
    %v3174 = vld [vmem:[%s1585 + $0x50] sm:$0xf]
    %v3175 = vld [vmem:[%s1585 + $0x58] sm:$0xf]
    %v3176 = vld [vmem:[%s1585 + $0x60] sm:$0xf]
    %v3177 = vld [vmem:[%s1585 + $0x68] sm:$0xf]
    %v3178 = vld [vmem:[%s1585 + $0x70] sm:$0xf]
    %v3179 = vld [vmem:[%s1585 + $0x78] sm:$0xf]
    %v3180 = vld [vmem:[%s1585 + $0x80] sm:$0xf]
    %v3181 = vld [vmem:[%s1408] sm:$0xf]
    %v3182 = vld [vmem:[%s1408 + $0x8] sm:$0xf]
    %v3183 = vld [vmem:[%s1408 + $0x10] sm:$0xf]
    %v3184 = vld [vmem:[%s1408 + $0x18] sm:$0xf]
    %v3185 = vld [vmem:[%s1408 + $0x20] sm:$0xf]
    %v3186 = vld [vmem:[%s1408 + $0x28] sm:$0xf]
    %v3187 = vld [vmem:[%s1408 + $0x30] sm:$0xf]
    %v3188 = vld [vmem:[%s1408 + $0x38] sm:$0xf]
    %v3189 = vld [vmem:[%s1408 + $0x48] sm:$0xf]
    %v3190 = vld [vmem:[%s1408 + $0x50] sm:$0xf]
    %v3191 = vld [vmem:[%s1408 + $0x58] sm:$0xf]
    %v3192 = vld [vmem:[%s1408 + $0x60] sm:$0xf]
    %v3193 = vld [vmem:[%s1408 + $0x68] sm:$0xf]
    %v3194 = vld [vmem:[%s1408 + $0x70] sm:$0xf]
    %v3195 = vld [vmem:[%s1408 + $0x78] sm:$0xf]
    %v3196 = vld [vmem:[%s1408 + $0x80] sm:$0xf]
    %v3197 = vld [vmem:[%s1585 + $0x4] sm:$0x1]
    %v3198 = vld [vmem:[%s1585 + $0xc] sm:$0x1]
    %v3199 = vld [vmem:[%s1585 + $0x14] sm:$0x1]
    %v3200 = vld [vmem:[%s1585 + $0x1c] sm:$0x1]
    %v3201 = vld [vmem:[%s1585 + $0x24] sm:$0x1]
    %v3202 = vld [vmem:[%s1585 + $0x2c] sm:$0x1]
    %v3203 = vld [vmem:[%s1585 + $0x34] sm:$0x1]
    %v3204 = vld [vmem:[%s1585 + $0x3c] sm:$0x1]
    %v3205 = vld [vmem:[%s1585 + $0x4c] sm:$0x1]
    %v3206 = vld [vmem:[%s1585 + $0x54] sm:$0x1]
    %v3207 = vld [vmem:[%s1585 + $0x5c] sm:$0x1]
    %v3208 = vld [vmem:[%s1585 + $0x64] sm:$0x1]
    %v3209 = vld [vmem:[%s1585 + $0x6c] sm:$0x1]
    %v3210 = vld [vmem:[%s1585 + $0x74] sm:$0x1]
    %v3211 = vld [vmem:[%s1585 + $0x7c] sm:$0x1]
    %v3212 = vld [vmem:[%s1585 + $0x84] sm:$0x1]
    %v3214 = vshrl.u32 %v3165, 16
    %v3216 = vrot.slane %v3214, 4
    %v3217 = vshll.u32 %v3165, 16
    %v3219 = vrot.slane %v3217, 5
    %v3220 = vor.u32 %v3216, %v3219
    %v3221 = vrot.slane %v3220, 4
    %v3223 = vshll.u32 %v3197, 16
    %v3225 = vrot.slane %v3223, 5
    %v3226 = vsel %vm1733, %v3221, %v3225
    %v3228 = vshrl.u32 %v3166, 16
    %v3230 = vrot.slane %v3228, 4
    %v3231 = vshll.u32 %v3166, 16
    %v3233 = vrot.slane %v3231, 5
    %v3234 = vor.u32 %v3230, %v3233
    %v3235 = vrot.slane %v3234, 4
    %v3237 = vshll.u32 %v3198, 16
    %v3239 = vrot.slane %v3237, 5
    %v3240 = vsel %vm1733, %v3235, %v3239
    %v3242 = vshrl.u32 %v3167, 16
    %v3244 = vrot.slane %v3242, 4
    %v3245 = vshll.u32 %v3167, 16
    %v3247 = vrot.slane %v3245, 5
    %v3248 = vor.u32 %v3244, %v3247
    %v3249 = vrot.slane %v3248, 4
    %v3251 = vshll.u32 %v3199, 16
    %v3253 = vrot.slane %v3251, 5
    %v3254 = vsel %vm1733, %v3249, %v3253
    %v3256 = vshrl.u32 %v3168, 16
    %v3258 = vrot.slane %v3256, 4
    %v3259 = vshll.u32 %v3168, 16
    %v3261 = vrot.slane %v3259, 5
    %v3262 = vor.u32 %v3258, %v3261
    %v3263 = vrot.slane %v3262, 4
    %v3265 = vshll.u32 %v3200, 16
    %v3267 = vrot.slane %v3265, 5
    %v3268 = vsel %vm1733, %v3263, %v3267
    %v3270 = vshrl.u32 %v3169, 16
    %v3272 = vrot.slane %v3270, 4
    %v3273 = vshll.u32 %v3169, 16
    %v3275 = vrot.slane %v3273, 5
    %v3276 = vor.u32 %v3272, %v3275
    %v3277 = vrot.slane %v3276, 4
    %v3279 = vshll.u32 %v3201, 16
    %v3281 = vrot.slane %v3279, 5
    %v3282 = vsel %vm1733, %v3277, %v3281
    %v3284 = vshrl.u32 %v3170, 16
    %v3286 = vrot.slane %v3284, 4
    %v3287 = vshll.u32 %v3170, 16
    %v3289 = vrot.slane %v3287, 5
    %v3290 = vor.u32 %v3286, %v3289
    %v3291 = vrot.slane %v3290, 4
    %v3293 = vshll.u32 %v3202, 16
    %v3295 = vrot.slane %v3293, 5
    %v3296 = vsel %vm1733, %v3291, %v3295
    %v3298 = vshrl.u32 %v3171, 16
    %v3300 = vrot.slane %v3298, 4
    %v3301 = vshll.u32 %v3171, 16
    %v3303 = vrot.slane %v3301, 5
    %v3304 = vor.u32 %v3300, %v3303
    %v3305 = vrot.slane %v3304, 4
    %v3307 = vshll.u32 %v3203, 16
    %v3309 = vrot.slane %v3307, 5
    %v3310 = vsel %vm1733, %v3305, %v3309
    %v3312 = vshrl.u32 %v3172, 16
    %v3314 = vrot.slane %v3312, 4
    %v3315 = vshll.u32 %v3172, 16
    %v3317 = vrot.slane %v3315, 5
    %v3318 = vor.u32 %v3314, %v3317
    %v3319 = vrot.slane %v3318, 4
    %v3321 = vshll.u32 %v3204, 16
    %v3323 = vrot.slane %v3321, 5
    %v3324 = vsel %vm1733, %v3319, %v3323
    %v3326 = vshrl.u32 %v3173, 16
    %v3328 = vrot.slane %v3326, 4
    %v3329 = vshll.u32 %v3173, 16
    %v3331 = vrot.slane %v3329, 5
    %v3332 = vor.u32 %v3328, %v3331
    %v3333 = vrot.slane %v3332, 4
    %v3335 = vshll.u32 %v3205, 16
    %v3337 = vrot.slane %v3335, 5
    %v3338 = vsel %vm1733, %v3333, %v3337
    %v3340 = vshrl.u32 %v3174, 16
    %v3342 = vrot.slane %v3340, 4
    %v3343 = vshll.u32 %v3174, 16
    %v3345 = vrot.slane %v3343, 5
    %v3346 = vor.u32 %v3342, %v3345
    %v3347 = vrot.slane %v3346, 4
    %v3349 = vshll.u32 %v3206, 16
    %v3351 = vrot.slane %v3349, 5
    %v3352 = vsel %vm1733, %v3347, %v3351
    %v3354 = vshrl.u32 %v3175, 16
    %v3356 = vrot.slane %v3354, 4
    %v3357 = vshll.u32 %v3175, 16
    %v3359 = vrot.slane %v3357, 5
    %v3360 = vor.u32 %v3356, %v3359
    %v3361 = vrot.slane %v3360, 4
    %v3363 = vshll.u32 %v3207, 16
    %v3365 = vrot.slane %v3363, 5
    %v3366 = vsel %vm1733, %v3361, %v3365
    %v3368 = vshrl.u32 %v3176, 16
    %v3370 = vrot.slane %v3368, 4
    %v3371 = vshll.u32 %v3176, 16
    %v3373 = vrot.slane %v3371, 5
    %v3374 = vor.u32 %v3370, %v3373
    %v3375 = vrot.slane %v3374, 4
    %v3377 = vshll.u32 %v3208, 16
    %v3379 = vrot.slane %v3377, 5
    %v3380 = vsel %vm1733, %v3375, %v3379
    %v3382 = vshrl.u32 %v3177, 16
    %v3384 = vrot.slane %v3382, 4
    %v3385 = vshll.u32 %v3177, 16
    %v3387 = vrot.slane %v3385, 5
    %v3388 = vor.u32 %v3384, %v3387
    %v3389 = vrot.slane %v3388, 4
    %v3391 = vshll.u32 %v3209, 16
    %v3393 = vrot.slane %v3391, 5
    %v3394 = vsel %vm1733, %v3389, %v3393
    %v3396 = vshrl.u32 %v3178, 16
    %v3398 = vrot.slane %v3396, 4
    %v3399 = vshll.u32 %v3178, 16
    %v3401 = vrot.slane %v3399, 5
    %v3402 = vor.u32 %v3398, %v3401
    %v3403 = vrot.slane %v3402, 4
    %v3405 = vshll.u32 %v3210, 16
    %v3407 = vrot.slane %v3405, 5
    %v3408 = vsel %vm1733, %v3403, %v3407
    %v3410 = vshrl.u32 %v3179, 16
    %v3412 = vrot.slane %v3410, 4
    %v3413 = vshll.u32 %v3179, 16
    %v3415 = vrot.slane %v3413, 5
    %v3416 = vor.u32 %v3412, %v3415
    %v3417 = vrot.slane %v3416, 4
    %v3419 = vshll.u32 %v3211, 16
    %v3421 = vrot.slane %v3419, 5
    %v3422 = vsel %vm1733, %v3417, %v3421
    %v3424 = vshrl.u32 %v3180, 16
    %v3426 = vrot.slane %v3424, 4
    %v3427 = vshll.u32 %v3180, 16
    %v3429 = vrot.slane %v3427, 5
    %v3430 = vor.u32 %v3426, %v3429
    %v3431 = vrot.slane %v3430, 4
    %v3433 = vshll.u32 %v3212, 16
    %v3435 = vrot.slane %v3433, 5
    %v3436 = vsel %vm1733, %v3431, %v3435
    %v3453 = vunpack.c.l.b16 %v3165
    %v3454 = vunpack.c.l.b16 %v3166
    %v3455 = vunpack.c.l.b16 %v3167
    %v3456 = vunpack.c.l.b16 %v3168
    %v3457 = vunpack.c.l.b16 %v3169
    %v3458 = vunpack.c.l.b16 %v3170
    %v3459 = vunpack.c.l.b16 %v3171
    %v3460 = vunpack.c.l.b16 %v3172
    %v3461 = vunpack.c.l.b16 %v3173
    %v3462 = vunpack.c.l.b16 %v3174
    %v3463 = vunpack.c.l.b16 %v3175
    %v3464 = vunpack.c.l.b16 %v3176
    %v3465 = vunpack.c.l.b16 %v3177
    %v3466 = vunpack.c.l.b16 %v3178
    %v3467 = vunpack.c.l.b16 %v3179
    %v3468 = vunpack.c.l.b16 %v3180
    %v3469 = vpack.c.b16 %v3454, %v3453
    %v3470 = vpack.c.b16 %v3456, %v3455
    %v3471 = vpack.c.b16 %v3458, %v3457
    %v3472 = vpack.c.b16 %v3460, %v3459
    %v3473 = vpack.c.b16 %v3462, %v3461
    %v3474 = vpack.c.b16 %v3464, %v3463
    %v3475 = vpack.c.b16 %v3466, %v3465
    %v3476 = vpack.c.b16 %v3468, %v3467
    %v3501 = vunpack.c.l.b16 %v3181
    %v3502 = vunpack.c.l.b16 %v3182
    %v3503 = vunpack.c.l.b16 %v3183
    %v3504 = vunpack.c.l.b16 %v3184
    %v3505 = vunpack.c.l.b16 %v3185
    %v3506 = vunpack.c.l.b16 %v3186
    %v3507 = vunpack.c.l.b16 %v3187
    %v3508 = vunpack.c.l.b16 %v3188
    %v3509 = vunpack.c.l.b16 %v3189
    %v3510 = vunpack.c.l.b16 %v3190
    %v3511 = vunpack.c.l.b16 %v3191
    %v3512 = vunpack.c.l.b16 %v3192
    %v3513 = vunpack.c.l.b16 %v3193
    %v3514 = vunpack.c.l.b16 %v3194
    %v3515 = vunpack.c.l.b16 %v3195
    %v3516 = vunpack.c.l.b16 %v3196
    %v3517 = vpack.c.b16 %v3502, %v3501
    %v3518 = vpack.c.b16 %v3504, %v3503
    %v3519 = vpack.c.b16 %v3506, %v3505
    %v3520 = vpack.c.b16 %v3508, %v3507
    %v3521 = vpack.c.b16 %v3510, %v3509
    %v3522 = vpack.c.b16 %v3512, %v3511
    %v3523 = vpack.c.b16 %v3514, %v3513
    %v3524 = vpack.c.b16 %v3516, %v3515
    %v3533 = vunpack.c.l.b16 %v3226
    %v3534 = vunpack.c.l.b16 %v3240
    %v3535 = vunpack.c.l.b16 %v3254
    %v3536 = vunpack.c.l.b16 %v3268
    %v3537 = vunpack.c.l.b16 %v3282
    %v3538 = vunpack.c.l.b16 %v3296
    %v3539 = vunpack.c.l.b16 %v3310
    %v3540 = vunpack.c.l.b16 %v3324
    %v3541 = vunpack.c.l.b16 %v3338
    %v3542 = vunpack.c.l.b16 %v3352
    %v3543 = vunpack.c.l.b16 %v3366
    %v3544 = vunpack.c.l.b16 %v3380
    %v3545 = vunpack.c.l.b16 %v3394
    %v3546 = vunpack.c.l.b16 %v3408
    %v3547 = vunpack.c.l.b16 %v3422
    %v3548 = vunpack.c.l.b16 %v3436
    %v3549 = vpack.c.b16 %v3534, %v3533
    %v3550 = vpack.c.b16 %v3536, %v3535
    %v3551 = vpack.c.b16 %v3538, %v3537
    %v3552 = vpack.c.b16 %v3540, %v3539
    %v3553 = vpack.c.b16 %v3542, %v3541
    %v3554 = vpack.c.b16 %v3544, %v3543
    %v3555 = vpack.c.b16 %v3546, %v3545
    %v3556 = vpack.c.b16 %v3548, %v3547
    %s3565 = scalar_lea.vmem [#allocation8], 384
    %v3566 = vld [vmem:[%s3565] sm:$0xf]
    %v3567 = vld [vmem:[%s3565 + $0x4] sm:$0xf]
    %v3568 = vld [vmem:[%s3565 + $0x8] sm:$0xf]
    %v3569 = vld [vmem:[%s3565 + $0xc] sm:$0xf]
    %v3570 = vld [vmem:[%s3565 + $0x10] sm:$0xf]
    %v3571 = vld [vmem:[%s3565 + $0x14] sm:$0xf]
    %v3572 = vld [vmem:[%s3565 + $0x18] sm:$0xf]
    %v3573 = vld [vmem:[%s3565 + $0x1c] sm:$0xf]
    %v3574 = vld [vmem:[%s3565 + $0x20] sm:$0xf]
    %v3575 = vld [vmem:[%s3565 + $0x24] sm:$0xf]
    %v3576 = vld [vmem:[%s3565 + $0x28] sm:$0xf]
    %v3577 = vld [vmem:[%s3565 + $0x2c] sm:$0xf]
    %v3578 = vld [vmem:[%s3565 + $0x30] sm:$0xf]
    %v3579 = vld [vmem:[%s3565 + $0x34] sm:$0xf]
    %v3580 = vld [vmem:[%s3565 + $0x38] sm:$0xf]
    %v3581 = vld [vmem:[%s3565 + $0x3c] sm:$0xf]
    %v3582 = vld [vmem:[%s3565 + $0x40] sm:$0xf]
    %v3583 = vld [vmem:[%s3565 + $0x44] sm:$0xf]
    %v3584 = vld [vmem:[%s3565 + $0x48] sm:$0xf]
    %v3585 = vld [vmem:[%s3565 + $0x4c] sm:$0xf]
    %v3586 = vld [vmem:[%s3565 + $0x50] sm:$0xf]
    %v3587 = vld [vmem:[%s3565 + $0x54] sm:$0xf]
    %v3588 = vld [vmem:[%s3565 + $0x58] sm:$0xf]
    %v3589 = vld [vmem:[%s3565 + $0x5c] sm:$0xf]
    %v3590 = vld [vmem:[%s3565 + $0x60] sm:$0xf]
    %v3591 = vld [vmem:[%s3565 + $0x64] sm:$0xf]
    %v3592 = vld [vmem:[%s3565 + $0x68] sm:$0xf]
    %v3593 = vld [vmem:[%s3565 + $0x6c] sm:$0xf]
    %v3594 = vld [vmem:[%s3565 + $0x70] sm:$0xf]
    %v3595 = vld [vmem:[%s3565 + $0x74] sm:$0xf]
    %v3596 = vld [vmem:[%s3565 + $0x78] sm:$0xf]
    %v3597 = vld [vmem:[%s3565 + $0x7c] sm:$0xf]
    %v3598 = vld [vmem:[%s3565 + $0x80] sm:$0xf]
    %v3599 = vld [vmem:[%s3565 + $0x84] sm:$0xf]
    %v3600 = vld [vmem:[%s3565 + $0x88] sm:$0xf]
    %v3601 = vld [vmem:[%s3565 + $0x8c] sm:$0xf]
    %v3602 = vld [vmem:[%s3565 + $0x90] sm:$0xf]
    %v3603 = vld [vmem:[%s3565 + $0x94] sm:$0xf]
    %v3604 = vld [vmem:[%s3565 + $0x98] sm:$0xf]
    %v3605 = vld [vmem:[%s3565 + $0x9c] sm:$0xf]
    %v3606 = vld [vmem:[%s3565 + $0xa0] sm:$0xf]
    %v3607 = vld [vmem:[%s3565 + $0xa4] sm:$0xf]
    %v3608 = vld [vmem:[%s3565 + $0xa8] sm:$0xf]
    %v3609 = vld [vmem:[%s3565 + $0xac] sm:$0xf]
    %v3610 = vld [vmem:[%s3565 + $0xb0] sm:$0xf]
    %v3611 = vld [vmem:[%s3565 + $0xb4] sm:$0xf]
    %v3612 = vld [vmem:[%s3565 + $0xb8] sm:$0xf]
    %v3613 = vld [vmem:[%s3565 + $0xbc] sm:$0xf]
    %v3662 = vunpack.c.l.b16 %v3566
    %v3663 = vunpack.c.l.b16 %v3567
    %v3664 = vunpack.c.l.b16 %v3568
    %v3665 = vunpack.c.l.b16 %v3569
    %v3666 = vunpack.c.l.b16 %v3570
    %v3667 = vunpack.c.l.b16 %v3571
    %v3668 = vunpack.c.l.b16 %v3572
    %v3669 = vunpack.c.l.b16 %v3573
    %v3670 = vunpack.c.l.b16 %v3574
    %v3671 = vunpack.c.l.b16 %v3575
    %v3672 = vunpack.c.l.b16 %v3576
    %v3673 = vunpack.c.l.b16 %v3577
    %v3674 = vunpack.c.l.b16 %v3578
    %v3675 = vunpack.c.l.b16 %v3579
    %v3676 = vunpack.c.l.b16 %v3580
    %v3677 = vunpack.c.l.b16 %v3581
    %v3678 = vunpack.c.l.b16 %v3582
    %v3679 = vunpack.c.l.b16 %v3583
    %v3680 = vunpack.c.l.b16 %v3584
    %v3681 = vunpack.c.l.b16 %v3585
    %v3682 = vunpack.c.l.b16 %v3586
    %v3683 = vunpack.c.l.b16 %v3587
    %v3684 = vunpack.c.l.b16 %v3588
    %v3685 = vunpack.c.l.b16 %v3589
    %v3686 = vunpack.c.l.b16 %v3590
    %v3687 = vunpack.c.l.b16 %v3591
    %v3688 = vunpack.c.l.b16 %v3592
    %v3689 = vunpack.c.l.b16 %v3593
    %v3690 = vunpack.c.l.b16 %v3594
    %v3691 = vunpack.c.l.b16 %v3595
    %v3692 = vunpack.c.l.b16 %v3596
    %v3693 = vunpack.c.l.b16 %v3597
    %v3694 = vunpack.c.l.b16 %v3598
    %v3695 = vunpack.c.l.b16 %v3599
    %v3696 = vunpack.c.l.b16 %v3600
    %v3697 = vunpack.c.l.b16 %v3601
    %v3698 = vunpack.c.l.b16 %v3602
    %v3699 = vunpack.c.l.b16 %v3603
    %v3700 = vunpack.c.l.b16 %v3604
    %v3701 = vunpack.c.l.b16 %v3605
    %v3702 = vunpack.c.l.b16 %v3606
    %v3703 = vunpack.c.l.b16 %v3607
    %v3704 = vunpack.c.l.b16 %v3608
    %v3705 = vunpack.c.l.b16 %v3609
    %v3706 = vunpack.c.l.b16 %v3610
    %v3707 = vunpack.c.l.b16 %v3611
    %v3708 = vunpack.c.l.b16 %v3612
    %v3709 = vunpack.c.l.b16 %v3613
    %v3710 = vpack.c.b16 %v3663, %v3662
    %v3711 = vpack.c.b16 %v3665, %v3664
    %v3712 = vpack.c.b16 %v3667, %v3666
    %v3713 = vpack.c.b16 %v3669, %v3668
    %v3714 = vpack.c.b16 %v3671, %v3670
    %v3715 = vpack.c.b16 %v3673, %v3672
    %v3716 = vpack.c.b16 %v3675, %v3674
    %v3717 = vpack.c.b16 %v3677, %v3676
    %v3718 = vpack.c.b16 %v3679, %v3678
    %v3719 = vpack.c.b16 %v3681, %v3680
    %v3720 = vpack.c.b16 %v3683, %v3682
    %v3721 = vpack.c.b16 %v3685, %v3684
    %v3722 = vpack.c.b16 %v3687, %v3686
    %v3723 = vpack.c.b16 %v3689, %v3688
    %v3724 = vpack.c.b16 %v3691, %v3690
    %v3725 = vpack.c.b16 %v3693, %v3692
    %v3726 = vpack.c.b16 %v3695, %v3694
    %v3727 = vpack.c.b16 %v3697, %v3696
    %v3728 = vpack.c.b16 %v3699, %v3698
    %v3729 = vpack.c.b16 %v3701, %v3700
    %v3730 = vpack.c.b16 %v3703, %v3702
    %v3731 = vpack.c.b16 %v3705, %v3704
    %v3732 = vpack.c.b16 %v3707, %v3706
    %v3733 = vpack.c.b16 %v3709, %v3708
    %3758 = vmatpush.bf16.msra.mxu0 %v3717
    %3759 = vmatpush.bf16.msra.mxu0 %v3716
    %3760 = vmatpush.bf16.msra.mxu0 %v3715
    %3761 = vmatpush.bf16.msra.mxu0 %v3714
    %3762 = vmatpush.bf16.msra.mxu0 %v3713
    %3763 = vmatpush.bf16.msra.mxu0 %v3712
    %3764 = vmatpush.bf16.msra.mxu0 %v3711
    %3765 = vmatpush.bf16.msra.mxu0 %v3710
    %3766 = vmatmul.bf16.gmra.mxu0 %v3469
    %v3767 = vpop.f32.mrf.mxu0
    %v3768 = vadd.f32 0.0, %v3767
    %v3769 = vpop.f32.mrf.mxu0
    %v3770 = vadd.f32 0.0, %v3769
    %3771 = vmatmul.bf16.gmra.mxu0 %v3470
    %v3772 = vpop.f32.mrf.mxu0
    %v3773 = vadd.f32 0.0, %v3772
    %v3774 = vpop.f32.mrf.mxu0
    %v3775 = vadd.f32 0.0, %v3774
    %3776 = vmatmul.bf16.gmra.mxu0 %v3471
    %v3777 = vpop.f32.mrf.mxu0
    %v3778 = vadd.f32 0.0, %v3777
    %v3779 = vpop.f32.mrf.mxu0
    %v3780 = vadd.f32 0.0, %v3779
    %3781 = vmatmul.bf16.gmra.mxu0 %v3472
    %v3782 = vpop.f32.mrf.mxu0
    %v3783 = vadd.f32 0.0, %v3782
    %v3784 = vpop.f32.mrf.mxu0
    %v3785 = vadd.f32 0.0, %v3784
    %3786 = vmatmul.bf16.gmra.mxu0 %v3473
    %v3787 = vpop.f32.mrf.mxu0
    %v3788 = vadd.f32 0.0, %v3787
    %v3789 = vpop.f32.mrf.mxu0
    %v3790 = vadd.f32 0.0, %v3789
    %3791 = vmatmul.bf16.gmra.mxu0 %v3474
    %v3792 = vpop.f32.mrf.mxu0
    %v3793 = vadd.f32 0.0, %v3792
    %v3794 = vpop.f32.mrf.mxu0
    %v3795 = vadd.f32 0.0, %v3794
    %3796 = vmatmul.bf16.gmra.mxu0 %v3475
    %v3797 = vpop.f32.mrf.mxu0
    %v3798 = vadd.f32 0.0, %v3797
    %v3799 = vpop.f32.mrf.mxu0
    %v3800 = vadd.f32 0.0, %v3799
    %3801 = vmatmul.bf16.gmra.mxu0 %v3476
    %v3802 = vpop.f32.mrf.mxu0
    %v3803 = vadd.f32 0.0, %v3802
    %v3804 = vpop.f32.mrf.mxu0
    %v3805 = vadd.f32 0.0, %v3804
    %3806 = vdwg.mxu0
    %3807 = vmatpush.bf16.msra.mxu0 %v3725
    %3808 = vmatpush.bf16.msra.mxu0 %v3724
    %3809 = vmatpush.bf16.msra.mxu0 %v3723
    %3810 = vmatpush.bf16.msra.mxu0 %v3722
    %3811 = vmatpush.bf16.msra.mxu0 %v3721
    %3812 = vmatpush.bf16.msra.mxu0 %v3720
    %3813 = vmatpush.bf16.msra.mxu0 %v3719
    %3814 = vmatpush.bf16.msra.mxu0 %v3718
    %3815 = vmatmul.bf16.gmra.mxu0 %v3517
    %v3816 = vpop.f32.mrf.mxu0
    %v3817 = vadd.f32 %v3768, %v3816
    %v3818 = vpop.f32.mrf.mxu0
    %v3819 = vadd.f32 %v3770, %v3818
    %3820 = vmatmul.bf16.gmra.mxu0 %v3518
    %v3821 = vpop.f32.mrf.mxu0
    %v3822 = vadd.f32 %v3773, %v3821
    %v3823 = vpop.f32.mrf.mxu0
    %v3824 = vadd.f32 %v3775, %v3823
    %3825 = vmatmul.bf16.gmra.mxu0 %v3519
    %v3826 = vpop.f32.mrf.mxu0
    %v3827 = vadd.f32 %v3778, %v3826
    %v3828 = vpop.f32.mrf.mxu0
    %v3829 = vadd.f32 %v3780, %v3828
    %3830 = vmatmul.bf16.gmra.mxu0 %v3520
    %v3831 = vpop.f32.mrf.mxu0
    %v3832 = vadd.f32 %v3783, %v3831
    %v3833 = vpop.f32.mrf.mxu0
    %v3834 = vadd.f32 %v3785, %v3833
    %3835 = vmatmul.bf16.gmra.mxu0 %v3521
    %v3836 = vpop.f32.mrf.mxu0
    %v3837 = vadd.f32 %v3788, %v3836
    %v3838 = vpop.f32.mrf.mxu0
    %v3839 = vadd.f32 %v3790, %v3838
    %3840 = vmatmul.bf16.gmra.mxu0 %v3522
    %v3841 = vpop.f32.mrf.mxu0
    %v3842 = vadd.f32 %v3793, %v3841
    %v3843 = vpop.f32.mrf.mxu0
    %v3844 = vadd.f32 %v3795, %v3843
    %3845 = vmatmul.bf16.gmra.mxu0 %v3523
    %v3846 = vpop.f32.mrf.mxu0
    %v3847 = vadd.f32 %v3798, %v3846
    %v3848 = vpop.f32.mrf.mxu0
    %v3849 = vadd.f32 %v3800, %v3848
    %3850 = vmatmul.bf16.gmra.mxu0 %v3524
    %v3851 = vpop.f32.mrf.mxu0
    %v3852 = vadd.f32 %v3803, %v3851
    %v3853 = vpop.f32.mrf.mxu0
    %v3854 = vadd.f32 %v3805, %v3853
    %3855 = vdwg.mxu0
    %3856 = vmatpush.bf16.msra.mxu0 %v3733
    %3857 = vmatpush.bf16.msra.mxu0 %v3732
    %3858 = vmatpush.bf16.msra.mxu0 %v3731
    %3859 = vmatpush.bf16.msra.mxu0 %v3730
    %3860 = vmatpush.bf16.msra.mxu0 %v3729
    %3861 = vmatpush.bf16.msra.mxu0 %v3728
    %3862 = vmatpush.bf16.msra.mxu0 %v3727
    %3863 = vmatpush.bf16.msra.mxu0 %v3726
    %3864 = vmatmul.bf16.gmra.mxu0 %v3549
    %v3865 = vpop.f32.mrf.mxu0
    %v3866 = vadd.f32 %v3817, %v3865
    %v3867 = vpop.f32.mrf.mxu0
    %v3868 = vadd.f32 %v3819, %v3867
    %3869 = vmatmul.bf16.gmra.mxu0 %v3550
    %v3870 = vpop.f32.mrf.mxu0
    %v3871 = vadd.f32 %v3822, %v3870
    %v3872 = vpop.f32.mrf.mxu0
    %v3873 = vadd.f32 %v3824, %v3872
    %3874 = vmatmul.bf16.gmra.mxu0 %v3551
    %v3875 = vpop.f32.mrf.mxu0
    %v3876 = vadd.f32 %v3827, %v3875
    %v3877 = vpop.f32.mrf.mxu0
    %v3878 = vadd.f32 %v3829, %v3877
    %3879 = vmatmul.bf16.gmra.mxu0 %v3552
    %v3880 = vpop.f32.mrf.mxu0
    %v3881 = vadd.f32 %v3832, %v3880
    %v3882 = vpop.f32.mrf.mxu0
    %v3883 = vadd.f32 %v3834, %v3882
    %3884 = vmatmul.bf16.gmra.mxu0 %v3553
    %v3885 = vpop.f32.mrf.mxu0
    %v3886 = vadd.f32 %v3837, %v3885
    %v3887 = vpop.f32.mrf.mxu0
    %v3888 = vadd.f32 %v3839, %v3887
    %3889 = vmatmul.bf16.gmra.mxu0 %v3554
    %v3890 = vpop.f32.mrf.mxu0
    %v3891 = vadd.f32 %v3842, %v3890
    %v3892 = vpop.f32.mrf.mxu0
    %v3893 = vadd.f32 %v3844, %v3892
    %3894 = vmatmul.bf16.gmra.mxu0 %v3555
    %v3895 = vpop.f32.mrf.mxu0
    %v3896 = vadd.f32 %v3847, %v3895
    %v3897 = vpop.f32.mrf.mxu0
    %v3898 = vadd.f32 %v3849, %v3897
    %3899 = vmatmul.bf16.gmra.mxu0 %v3556
    %v3900 = vpop.f32.mrf.mxu0
    %v3901 = vadd.f32 %v3852, %v3900
    %v3902 = vpop.f32.mrf.mxu0
    %v3903 = vadd.f32 %v3854, %v3902
    %3904 = vdwg.mxu0
    %v3905 = vadd.f32 %v3126, %v3866
    %v3906 = vadd.f32 %v3128, %v3868
    %v3907 = vadd.f32 %v3131, %v3871
    %v3908 = vadd.f32 %v3133, %v3873
    %v3909 = vadd.f32 %v3136, %v3876
    %v3910 = vadd.f32 %v3138, %v3878
    %v3911 = vadd.f32 %v3141, %v3881
    %v3912 = vadd.f32 %v3143, %v3883
    %v3913 = vadd.f32 %v3146, %v3886
    %v3914 = vadd.f32 %v3148, %v3888
    %v3915 = vadd.f32 %v3151, %v3891
    %v3916 = vadd.f32 %v3153, %v3893
    %v3917 = vadd.f32 %v3156, %v3896
    %v3918 = vadd.f32 %v3158, %v3898
    %v3919 = vadd.f32 %v3161, %v3901
    %v3920 = vadd.f32 %v3163, %v3903
    %v3921 = vld [vmem:[%s7] sm:$0x1]
    %v3922 = vld [vmem:[%s8] sm:$0x1]
    %v3923 = vadd.f32 %v3905, %v3906
    %v3924 = vadd.f32 %v3923, %v3907
    %v3925 = vadd.f32 %v3924, %v3908
    %v3926 = vadd.f32 %v3925, %v3909
    %v3927 = vadd.f32 %v3926, %v3910
    %v3928 = vadd.f32 %v3927, %v3911
    %v3929 = vadd.f32 %v3928, %v3912
    %v3930 = vadd.f32 %v3929, %v3913
    %v3931 = vadd.f32 %v3930, %v3914
    %v3932 = vadd.f32 %v3931, %v3915
    %v3933 = vadd.f32 %v3932, %v3916
    %v3934 = vadd.f32 %v3933, %v3917
    %v3935 = vadd.f32 %v3934, %v3918
    %v3936 = vadd.f32 %v3935, %v3919
    %v3937 = vadd.f32 %v3936, %v3920
    %v3938 = vrot.slane %v3937, 4
    %v3939 = vadd.f32 %v3937, %v3938
    %v3940 = vrot.slane %v3939, 2
    %v3941 = vadd.f32 %v3939, %v3940
    %v3942 = vrot.slane %v3941, 1
    %v3943 = vadd.f32 %v3941, %v3942
    %v3944 = vrcp.pop 128.0
    %v3945 = vmul.f32 128.0, %v3944
    %v3946 = vsub.f32 1.0, %v3945
    %v3947 = vmul.f32 %v3944, %v3946
    %v3948 = vadd.f32 %v3944, %v3947
    %vm3949 = vweird.f32 %v3944
    %v3950 = vsel %vm3949, %v3944, %v3948
    %v3951 = vmul.f32 %v3943, %v3950
    %v3952 = vsub.f32 %v3905, %v3951
    %v3953 = vsub.f32 %v3906, %v3951
    %v3954 = vsub.f32 %v3907, %v3951
    %v3955 = vsub.f32 %v3908, %v3951
    %v3956 = vsub.f32 %v3909, %v3951
    %v3957 = vsub.f32 %v3910, %v3951
    %v3958 = vsub.f32 %v3911, %v3951
    %v3959 = vsub.f32 %v3912, %v3951
    %v3960 = vsub.f32 %v3913, %v3951
    %v3961 = vsub.f32 %v3914, %v3951
    %v3962 = vsub.f32 %v3915, %v3951
    %v3963 = vsub.f32 %v3916, %v3951
    %v3964 = vsub.f32 %v3917, %v3951
    %v3965 = vsub.f32 %v3918, %v3951
    %v3966 = vsub.f32 %v3919, %v3951
    %v3967 = vsub.f32 %v3920, %v3951
    %v3968 = vmul.f32 %v3952, %v3952
    %v3969 = vmul.f32 %v3953, %v3953
    %v3970 = vmul.f32 %v3954, %v3954
    %v3971 = vmul.f32 %v3955, %v3955
    %v3972 = vmul.f32 %v3956, %v3956
    %v3973 = vmul.f32 %v3957, %v3957
    %v3974 = vmul.f32 %v3958, %v3958
    %v3975 = vmul.f32 %v3959, %v3959
    %v3976 = vmul.f32 %v3960, %v3960
    %v3977 = vmul.f32 %v3961, %v3961
    %v3978 = vmul.f32 %v3962, %v3962
    %v3979 = vmul.f32 %v3963, %v3963
    %v3980 = vmul.f32 %v3964, %v3964
    %v3981 = vmul.f32 %v3965, %v3965
    %v3982 = vmul.f32 %v3966, %v3966
    %v3983 = vmul.f32 %v3967, %v3967
    %v3984 = vadd.f32 %v3968, %v3969
    %v3985 = vadd.f32 %v3984, %v3970
    %v3986 = vadd.f32 %v3985, %v3971
    %v3987 = vadd.f32 %v3986, %v3972
    %v3988 = vadd.f32 %v3987, %v3973
    %v3989 = vadd.f32 %v3988, %v3974
    %v3990 = vadd.f32 %v3989, %v3975
    %v3991 = vadd.f32 %v3990, %v3976
    %v3992 = vadd.f32 %v3991, %v3977
    %v3993 = vadd.f32 %v3992, %v3978
    %v3994 = vadd.f32 %v3993, %v3979
    %v3995 = vadd.f32 %v3994, %v3980
    %v3996 = vadd.f32 %v3995, %v3981
    %v3997 = vadd.f32 %v3996, %v3982
    %v3998 = vadd.f32 %v3997, %v3983
    %v3999 = vrot.slane %v3998, 4
    %v4000 = vadd.f32 %v3998, %v3999
    %v4001 = vrot.slane %v4000, 2
    %v4002 = vadd.f32 %v4000, %v4001
    %v4003 = vrot.slane %v4002, 1
    %v4004 = vadd.f32 %v4002, %v4003
    %v4005 = vmul.f32 %v4004, %v3950
    %v4006 = vadd.f32 %v4005, 1e-05
    %v4007 = vrsqrt.pop %v4006
    %v4008 = vmul.f32 %v4007, %v4006
    %v4009 = vmul.f32 %v4008, %v4007
    %v4010 = vmul.f32 0.5, %v4009
    %v4011 = vsub.f32 1.5, %v4010
    %v4012 = vmul.f32 %v4007, %v4011
    %vm4013 = vweird.f32 %v4006
    %vm4014 = vweird.f32 %v4007
    %vm4015 = vmor %vm4013, %vm4014
    %v4016 = vsel %vm4015, %v4007, %v4012
    %v4017 = vmul.f32 %v3921, %v4016
    %v4019 = vperm.slane %v4017, 0
    %v4021 = vmul.f32 %v3952, %v4019
    %v4022 = vmul.f32 %v3953, %v4019
    %v4023 = vmul.f32 %v3954, %v4019
    %v4024 = vmul.f32 %v3955, %v4019
    %v4025 = vmul.f32 %v3956, %v4019
    %v4026 = vmul.f32 %v3957, %v4019
    %v4027 = vmul.f32 %v3958, %v4019
    %v4028 = vmul.f32 %v3959, %v4019
    %v4029 = vmul.f32 %v3960, %v4019
    %v4030 = vmul.f32 %v3961, %v4019
    %v4031 = vmul.f32 %v3962, %v4019
    %v4032 = vmul.f32 %v3963, %v4019
    %v4033 = vmul.f32 %v3964, %v4019
    %v4034 = vmul.f32 %v3965, %v4019
    %v4035 = vmul.f32 %v3966, %v4019
    %v4036 = vmul.f32 %v3967, %v4019
    %v4038 = vperm.slane %v3922, 0
    %v4040 = vadd.f32 %v4021, %v4038
    %v4041 = vadd.f32 %v4022, %v4038
    %v4042 = vadd.f32 %v4023, %v4038
    %v4043 = vadd.f32 %v4024, %v4038
    %v4044 = vadd.f32 %v4025, %v4038
    %v4045 = vadd.f32 %v4026, %v4038
    %v4046 = vadd.f32 %v4027, %v4038
    %v4047 = vadd.f32 %v4028, %v4038
    %v4048 = vadd.f32 %v4029, %v4038
    %v4049 = vadd.f32 %v4030, %v4038
    %v4050 = vadd.f32 %v4031, %v4038
    %v4051 = vadd.f32 %v4032, %v4038
    %v4052 = vadd.f32 %v4033, %v4038
    %v4053 = vadd.f32 %v4034, %v4038
    %v4054 = vadd.f32 %v4035, %v4038
    %v4055 = vadd.f32 %v4036, %v4038
    %v4056 = vmax.f32 %v4040, 0.0
    %v4057 = vmax.f32 %v4041, 0.0
    %v4058 = vmax.f32 %v4042, 0.0
    %v4059 = vmax.f32 %v4043, 0.0
    %v4060 = vmax.f32 %v4044, 0.0
    %v4061 = vmax.f32 %v4045, 0.0
    %v4062 = vmax.f32 %v4046, 0.0
    %v4063 = vmax.f32 %v4047, 0.0
    %v4064 = vmax.f32 %v4048, 0.0
    %v4065 = vmax.f32 %v4049, 0.0
    %v4066 = vmax.f32 %v4050, 0.0
    %v4067 = vmax.f32 %v4051, 0.0
    %v4068 = vmax.f32 %v4052, 0.0
    %v4069 = vmax.f32 %v4053, 0.0
    %v4070 = vmax.f32 %v4054, 0.0
    %v4071 = vmax.f32 %v4055, 0.0
    %v4072 = vpack.c.bf16 %v4057, %v4056
    %v4073 = vpack.c.bf16 %v4059, %v4058
    %v4074 = vpack.c.bf16 %v4061, %v4060
    %v4075 = vpack.c.bf16 %v4063, %v4062
    %v4076 = vpack.c.bf16 %v4065, %v4064
    %v4077 = vpack.c.bf16 %v4067, %v4066
    %v4078 = vpack.c.bf16 %v4069, %v4068
    %v4079 = vpack.c.bf16 %v4071, %v4070
    %v4080 = vld [vmem:[#allocation9] sm:$0xf]
    %v4081 = vld [vmem:[#allocation9 + $0x4] sm:$0xf]
    %v4082 = vld [vmem:[#allocation9 + $0x8] sm:$0xf]
    %v4083 = vld [vmem:[#allocation9 + $0xc] sm:$0xf]
    %v4084 = vld [vmem:[#allocation9 + $0x10] sm:$0xf]
    %v4085 = vld [vmem:[#allocation9 + $0x14] sm:$0xf]
    %v4086 = vld [vmem:[#allocation9 + $0x18] sm:$0xf]
    %v4087 = vld [vmem:[#allocation9 + $0x1c] sm:$0xf]
    %v4088 = vld [vmem:[#allocation9 + $0x20] sm:$0xf]
    %v4089 = vld [vmem:[#allocation9 + $0x24] sm:$0xf]
    %v4090 = vld [vmem:[#allocation9 + $0x28] sm:$0xf]
    %v4091 = vld [vmem:[#allocation9 + $0x2c] sm:$0xf]
    %v4092 = vld [vmem:[#allocation9 + $0x30] sm:$0xf]
    %v4093 = vld [vmem:[#allocation9 + $0x34] sm:$0xf]
    %v4094 = vld [vmem:[#allocation9 + $0x38] sm:$0xf]
    %v4095 = vld [vmem:[#allocation9 + $0x3c] sm:$0xf]
    %v4112 = vunpack.c.l.b16 %v4080
    %v4113 = vunpack.c.l.b16 %v4081
    %v4114 = vunpack.c.l.b16 %v4082
    %v4115 = vunpack.c.l.b16 %v4083
    %v4116 = vunpack.c.l.b16 %v4084
    %v4117 = vunpack.c.l.b16 %v4085
    %v4118 = vunpack.c.l.b16 %v4086
    %v4119 = vunpack.c.l.b16 %v4087
    %v4120 = vunpack.c.l.b16 %v4088
    %v4121 = vunpack.c.l.b16 %v4089
    %v4122 = vunpack.c.l.b16 %v4090
    %v4123 = vunpack.c.l.b16 %v4091
    %v4124 = vunpack.c.l.b16 %v4092
    %v4125 = vunpack.c.l.b16 %v4093
    %v4126 = vunpack.c.l.b16 %v4094
    %v4127 = vunpack.c.l.b16 %v4095
    %v4128 = vpack.c.b16 %v4113, %v4112
    %v4129 = vpack.c.b16 %v4115, %v4114
    %v4130 = vpack.c.b16 %v4117, %v4116
    %v4131 = vpack.c.b16 %v4119, %v4118
    %v4132 = vpack.c.b16 %v4121, %v4120
    %v4133 = vpack.c.b16 %v4123, %v4122
    %v4134 = vpack.c.b16 %v4125, %v4124
    %v4135 = vpack.c.b16 %v4127, %v4126
    %4144 = vmatpush.bf16.msra.mxu0 %v4135
    %4145 = vmatpush.bf16.msra.mxu0 %v4134
    %4146 = vmatpush.bf16.msra.mxu0 %v4133
    %4147 = vmatpush.bf16.msra.mxu0 %v4132
    %4148 = vmatpush.bf16.msra.mxu0 %v4131
    %4149 = vmatpush.bf16.msra.mxu0 %v4130
    %4150 = vmatpush.bf16.msra.mxu0 %v4129
    %4151 = vmatpush.bf16.msra.mxu0 %v4128
    %4152 = vmatmul.bf16.gmra.mxu0 %v4072
    %v4153 = vpop.f32.mrf.mxu0
    %v4154 = vadd.f32 0.0, %v4153
    %v4155 = vpop.f32.mrf.mxu0
    %v4156 = vadd.f32 0.0, %v4155
    %4157 = vmatmul.bf16.gmra.mxu0 %v4073
    %v4158 = vpop.f32.mrf.mxu0
    %v4159 = vadd.f32 0.0, %v4158
    %v4160 = vpop.f32.mrf.mxu0
    %v4161 = vadd.f32 0.0, %v4160
    %4162 = vmatmul.bf16.gmra.mxu0 %v4074
    %v4163 = vpop.f32.mrf.mxu0
    %v4164 = vadd.f32 0.0, %v4163
    %v4165 = vpop.f32.mrf.mxu0
    %v4166 = vadd.f32 0.0, %v4165
    %4167 = vmatmul.bf16.gmra.mxu0 %v4075
    %v4168 = vpop.f32.mrf.mxu0
    %v4169 = vadd.f32 0.0, %v4168
    %v4170 = vpop.f32.mrf.mxu0
    %v4171 = vadd.f32 0.0, %v4170
    %4172 = vmatmul.bf16.gmra.mxu0 %v4076
    %v4173 = vpop.f32.mrf.mxu0
    %v4174 = vadd.f32 0.0, %v4173
    %v4175 = vpop.f32.mrf.mxu0
    %v4176 = vadd.f32 0.0, %v4175
    %4177 = vmatmul.bf16.gmra.mxu0 %v4077
    %v4178 = vpop.f32.mrf.mxu0
    %v4179 = vadd.f32 0.0, %v4178
    %v4180 = vpop.f32.mrf.mxu0
    %v4181 = vadd.f32 0.0, %v4180
    %4182 = vmatmul.bf16.gmra.mxu0 %v4078
    %v4183 = vpop.f32.mrf.mxu0
    %v4184 = vadd.f32 0.0, %v4183
    %v4185 = vpop.f32.mrf.mxu0
    %v4186 = vadd.f32 0.0, %v4185
    %4187 = vmatmul.bf16.gmra.mxu0 %v4079
    %v4188 = vpop.f32.mrf.mxu0
    %v4189 = vadd.f32 0.0, %v4188
    %v4190 = vpop.f32.mrf.mxu0
    %v4191 = vadd.f32 0.0, %v4190
    %4192 = vdwg.mxu0
    %v4193 = vld [vmem:[%s9] sm:$0x1]
    %v4194 = vld [vmem:[%s10] sm:$0x1]
    %v4195 = vadd.f32 %v4154, %v4156
    %v4196 = vadd.f32 %v4195, %v4159
    %v4197 = vadd.f32 %v4196, %v4161
    %v4198 = vadd.f32 %v4197, %v4164
    %v4199 = vadd.f32 %v4198, %v4166
    %v4200 = vadd.f32 %v4199, %v4169
    %v4201 = vadd.f32 %v4200, %v4171
    %v4202 = vadd.f32 %v4201, %v4174
    %v4203 = vadd.f32 %v4202, %v4176
    %v4204 = vadd.f32 %v4203, %v4179
    %v4205 = vadd.f32 %v4204, %v4181
    %v4206 = vadd.f32 %v4205, %v4184
    %v4207 = vadd.f32 %v4206, %v4186
    %v4208 = vadd.f32 %v4207, %v4189
    %v4209 = vadd.f32 %v4208, %v4191
    %v4210 = vrot.slane %v4209, 4
    %v4211 = vadd.f32 %v4209, %v4210
    %v4212 = vrot.slane %v4211, 2
    %v4213 = vadd.f32 %v4211, %v4212
    %v4214 = vrot.slane %v4213, 1
    %v4215 = vadd.f32 %v4213, %v4214
    %v4216 = vmul.f32 %v4215, %v3950
    %v4217 = vsub.f32 %v4154, %v4216
    %v4218 = vsub.f32 %v4156, %v4216
    %v4219 = vsub.f32 %v4159, %v4216
    %v4220 = vsub.f32 %v4161, %v4216
    %v4221 = vsub.f32 %v4164, %v4216
    %v4222 = vsub.f32 %v4166, %v4216
    %v4223 = vsub.f32 %v4169, %v4216
    %v4224 = vsub.f32 %v4171, %v4216
    %v4225 = vsub.f32 %v4174, %v4216
    %v4226 = vsub.f32 %v4176, %v4216
    %v4227 = vsub.f32 %v4179, %v4216
    %v4228 = vsub.f32 %v4181, %v4216
    %v4229 = vsub.f32 %v4184, %v4216
    %v4230 = vsub.f32 %v4186, %v4216
    %v4231 = vsub.f32 %v4189, %v4216
    %v4232 = vsub.f32 %v4191, %v4216
    %v4233 = vmul.f32 %v4217, %v4217
    %v4234 = vmul.f32 %v4218, %v4218
    %v4235 = vmul.f32 %v4219, %v4219
    %v4236 = vmul.f32 %v4220, %v4220
    %v4237 = vmul.f32 %v4221, %v4221
    %v4238 = vmul.f32 %v4222, %v4222
    %v4239 = vmul.f32 %v4223, %v4223
    %v4240 = vmul.f32 %v4224, %v4224
    %v4241 = vmul.f32 %v4225, %v4225
    %v4242 = vmul.f32 %v4226, %v4226
    %v4243 = vmul.f32 %v4227, %v4227
    %v4244 = vmul.f32 %v4228, %v4228
    %v4245 = vmul.f32 %v4229, %v4229
    %v4246 = vmul.f32 %v4230, %v4230
    %v4247 = vmul.f32 %v4231, %v4231
    %v4248 = vmul.f32 %v4232, %v4232
    %v4249 = vadd.f32 %v4233, %v4234
    %v4250 = vadd.f32 %v4249, %v4235
    %v4251 = vadd.f32 %v4250, %v4236
    %v4252 = vadd.f32 %v4251, %v4237
    %v4253 = vadd.f32 %v4252, %v4238
    %v4254 = vadd.f32 %v4253, %v4239
    %v4255 = vadd.f32 %v4254, %v4240
    %v4256 = vadd.f32 %v4255, %v4241
    %v4257 = vadd.f32 %v4256, %v4242
    %v4258 = vadd.f32 %v4257, %v4243
    %v4259 = vadd.f32 %v4258, %v4244
    %v4260 = vadd.f32 %v4259, %v4245
    %v4261 = vadd.f32 %v4260, %v4246
    %v4262 = vadd.f32 %v4261, %v4247
    %v4263 = vadd.f32 %v4262, %v4248
    %v4264 = vrot.slane %v4263, 4
    %v4265 = vadd.f32 %v4263, %v4264
    %v4266 = vrot.slane %v4265, 2
    %v4267 = vadd.f32 %v4265, %v4266
    %v4268 = vrot.slane %v4267, 1
    %v4269 = vadd.f32 %v4267, %v4268
    %v4270 = vmul.f32 %v4269, %v3950
    %v4271 = vadd.f32 %v4270, 1e-05
    %v4272 = vrsqrt.pop %v4271
    %v4273 = vmul.f32 %v4272, %v4271
    %v4274 = vmul.f32 %v4273, %v4272
    %v4275 = vmul.f32 0.5, %v4274
    %v4276 = vsub.f32 1.5, %v4275
    %v4277 = vmul.f32 %v4272, %v4276
    %vm4278 = vweird.f32 %v4271
    %vm4279 = vweird.f32 %v4272
    %vm4280 = vmor %vm4278, %vm4279
    %v4281 = vsel %vm4280, %v4272, %v4277
    %v4282 = vmul.f32 %v4193, %v4281
    %v4284 = vperm.slane %v4282, 0
    %v4286 = vmul.f32 %v4217, %v4284
    %v4287 = vmul.f32 %v4218, %v4284
    %v4288 = vmul.f32 %v4219, %v4284
    %v4289 = vmul.f32 %v4220, %v4284
    %v4290 = vmul.f32 %v4221, %v4284
    %v4291 = vmul.f32 %v4222, %v4284
    %v4292 = vmul.f32 %v4223, %v4284
    %v4293 = vmul.f32 %v4224, %v4284
    %v4294 = vmul.f32 %v4225, %v4284
    %v4295 = vmul.f32 %v4226, %v4284
    %v4296 = vmul.f32 %v4227, %v4284
    %v4297 = vmul.f32 %v4228, %v4284
    %v4298 = vmul.f32 %v4229, %v4284
    %v4299 = vmul.f32 %v4230, %v4284
    %v4300 = vmul.f32 %v4231, %v4284
    %v4301 = vmul.f32 %v4232, %v4284
    %v4303 = vperm.slane %v4194, 0
    %v4305 = vadd.f32 %v4286, %v4303
    %v4306 = vadd.f32 %v4287, %v4303
    %v4307 = vadd.f32 %v4288, %v4303
    %v4308 = vadd.f32 %v4289, %v4303
    %v4309 = vadd.f32 %v4290, %v4303
    %v4310 = vadd.f32 %v4291, %v4303
    %v4311 = vadd.f32 %v4292, %v4303
    %v4312 = vadd.f32 %v4293, %v4303
    %v4313 = vadd.f32 %v4294, %v4303
    %v4314 = vadd.f32 %v4295, %v4303
    %v4315 = vadd.f32 %v4296, %v4303
    %v4316 = vadd.f32 %v4297, %v4303
    %v4317 = vadd.f32 %v4298, %v4303
    %v4318 = vadd.f32 %v4299, %v4303
    %v4319 = vadd.f32 %v4300, %v4303
    %v4320 = vadd.f32 %v4301, %v4303
    %v4321 = vld [vmem:[#allocation3] sm:$0xff]
    %v4322 = vld [vmem:[#allocation3 + $0x10] sm:$0xff]
    %v4323 = vld [vmem:[#allocation3 + $0x20] sm:$0xff]
    %v4324 = vld [vmem:[#allocation3 + $0x30] sm:$0xff]
    %v4325 = vld [vmem:[#allocation3 + $0x40] sm:$0xff]
    %v4326 = vld [vmem:[#allocation3 + $0x50] sm:$0xff]
    %v4327 = vld [vmem:[#allocation3 + $0x60] sm:$0xff]
    %v4328 = vld [vmem:[#allocation3 + $0x70] sm:$0xff]
    %v4329 = vld [vmem:[#allocation3 + $0x100] sm:$0xff]
    %v4330 = vld [vmem:[#allocation3 + $0x110] sm:$0xff]
    %v4331 = vld [vmem:[#allocation3 + $0x120] sm:$0xff]
    %v4332 = vld [vmem:[#allocation3 + $0x130] sm:$0xff]
    %v4333 = vld [vmem:[#allocation3 + $0x140] sm:$0xff]
    %v4334 = vld [vmem:[#allocation3 + $0x150] sm:$0xff]
    %v4335 = vld [vmem:[#allocation3 + $0x160] sm:$0xff]
    %v4336 = vld [vmem:[#allocation3 + $0x170] sm:$0xff]
    %v4337 = vpack.c.bf16 %v4322, %v4321
    %v4338 = vpack.c.bf16 %v4324, %v4323
    %v4339 = vpack.c.bf16 %v4326, %v4325
    %v4340 = vpack.c.bf16 %v4328, %v4327
    %v4341 = vpack.c.bf16 %v4330, %v4329
    %v4342 = vpack.c.bf16 %v4332, %v4331
    %v4343 = vpack.c.bf16 %v4334, %v4333
    %v4344 = vpack.c.bf16 %v4336, %v4335
    %v4345 = vld [vmem:[#allocation11] sm:$0xf]
    %v4346 = vld [vmem:[#allocation11 + $0x4] sm:$0xf]
    %v4347 = vld [vmem:[#allocation11 + $0x8] sm:$0xf]
    %v4348 = vld [vmem:[#allocation11 + $0xc] sm:$0xf]
    %v4349 = vld [vmem:[#allocation11 + $0x10] sm:$0xf]
    %v4350 = vld [vmem:[#allocation11 + $0x14] sm:$0xf]
    %v4351 = vld [vmem:[#allocation11 + $0x18] sm:$0xf]
    %v4352 = vld [vmem:[#allocation11 + $0x1c] sm:$0xf]
    %v4353 = vld [vmem:[#allocation11 + $0x20] sm:$0xf]
    %v4354 = vld [vmem:[#allocation11 + $0x24] sm:$0xf]
    %v4355 = vld [vmem:[#allocation11 + $0x28] sm:$0xf]
    %v4356 = vld [vmem:[#allocation11 + $0x2c] sm:$0xf]
    %v4357 = vld [vmem:[#allocation11 + $0x30] sm:$0xf]
    %v4358 = vld [vmem:[#allocation11 + $0x34] sm:$0xf]
    %v4359 = vld [vmem:[#allocation11 + $0x38] sm:$0xf]
    %v4360 = vld [vmem:[#allocation11 + $0x3c] sm:$0xf]
    %v4377 = vunpack.c.l.b16 %v4345
    %v4378 = vunpack.c.l.b16 %v4346
    %v4379 = vunpack.c.l.b16 %v4347
    %v4380 = vunpack.c.l.b16 %v4348
    %v4381 = vunpack.c.l.b16 %v4349
    %v4382 = vunpack.c.l.b16 %v4350
    %v4383 = vunpack.c.l.b16 %v4351
    %v4384 = vunpack.c.l.b16 %v4352
    %v4385 = vunpack.c.l.b16 %v4353
    %v4386 = vunpack.c.l.b16 %v4354
    %v4387 = vunpack.c.l.b16 %v4355
    %v4388 = vunpack.c.l.b16 %v4356
    %v4389 = vunpack.c.l.b16 %v4357
    %v4390 = vunpack.c.l.b16 %v4358
    %v4391 = vunpack.c.l.b16 %v4359
    %v4392 = vunpack.c.l.b16 %v4360
    %v4393 = vpack.c.b16 %v4378, %v4377
    %v4394 = vpack.c.b16 %v4380, %v4379
    %v4395 = vpack.c.b16 %v4382, %v4381
    %v4396 = vpack.c.b16 %v4384, %v4383
    %v4397 = vpack.c.b16 %v4386, %v4385
    %v4398 = vpack.c.b16 %v4388, %v4387
    %v4399 = vpack.c.b16 %v4390, %v4389
    %v4400 = vpack.c.b16 %v4392, %v4391
    %4409 = vmatpush.bf16.msra.mxu0 %v4400
    %4410 = vmatpush.bf16.msra.mxu0 %v4399
    %4411 = vmatpush.bf16.msra.mxu0 %v4398
    %4412 = vmatpush.bf16.msra.mxu0 %v4397
    %4413 = vmatpush.bf16.msra.mxu0 %v4396
    %4414 = vmatpush.bf16.msra.mxu0 %v4395
    %4415 = vmatpush.bf16.msra.mxu0 %v4394
    %4416 = vmatpush.bf16.msra.mxu0 %v4393
    %4417 = vmatmul.bf16.gmra.mxu0 %v4337
    %v4418 = vpop.f32.mrf.mxu0
    %v4419 = vadd.f32 0.0, %v4418
    %v4420 = vpop.f32.mrf.mxu0
    %v4421 = vadd.f32 0.0, %v4420
    %4422 = vmatmul.bf16.gmra.mxu0 %v4338
    %v4423 = vpop.f32.mrf.mxu0
    %v4424 = vadd.f32 0.0, %v4423
    %v4425 = vpop.f32.mrf.mxu0
    %v4426 = vadd.f32 0.0, %v4425
    %4427 = vmatmul.bf16.gmra.mxu0 %v4339
    %v4428 = vpop.f32.mrf.mxu0
    %v4429 = vadd.f32 0.0, %v4428
    %v4430 = vpop.f32.mrf.mxu0
    %v4431 = vadd.f32 0.0, %v4430
    %4432 = vmatmul.bf16.gmra.mxu0 %v4340
    %v4433 = vpop.f32.mrf.mxu0
    %v4434 = vadd.f32 0.0, %v4433
    %v4435 = vpop.f32.mrf.mxu0
    %v4436 = vadd.f32 0.0, %v4435
    %4437 = vmatmul.bf16.gmra.mxu0 %v4341
    %v4438 = vpop.f32.mrf.mxu0
    %v4439 = vadd.f32 0.0, %v4438
    %v4440 = vpop.f32.mrf.mxu0
    %v4441 = vadd.f32 0.0, %v4440
    %4442 = vmatmul.bf16.gmra.mxu0 %v4342
    %v4443 = vpop.f32.mrf.mxu0
    %v4444 = vadd.f32 0.0, %v4443
    %v4445 = vpop.f32.mrf.mxu0
    %v4446 = vadd.f32 0.0, %v4445
    %4447 = vmatmul.bf16.gmra.mxu0 %v4343
    %v4448 = vpop.f32.mrf.mxu0
    %v4449 = vadd.f32 0.0, %v4448
    %v4450 = vpop.f32.mrf.mxu0
    %v4451 = vadd.f32 0.0, %v4450
    %4452 = vmatmul.bf16.gmra.mxu0 %v4344
    %v4453 = vpop.f32.mrf.mxu0
    %v4454 = vadd.f32 0.0, %v4453
    %v4455 = vpop.f32.mrf.mxu0
    %v4456 = vadd.f32 0.0, %v4455
    %4457 = vdwg.mxu0
    %v4458 = vld [vmem:[%s11] sm:$0x1]
    %v4459 = vld [vmem:[%s12] sm:$0x1]
    %v4460 = vadd.f32 %v4419, %v4421
    %v4461 = vadd.f32 %v4460, %v4424
    %v4462 = vadd.f32 %v4461, %v4426
    %v4463 = vadd.f32 %v4462, %v4429
    %v4464 = vadd.f32 %v4463, %v4431
    %v4465 = vadd.f32 %v4464, %v4434
    %v4466 = vadd.f32 %v4465, %v4436
    %v4467 = vadd.f32 %v4466, %v4439
    %v4468 = vadd.f32 %v4467, %v4441
    %v4469 = vadd.f32 %v4468, %v4444
    %v4470 = vadd.f32 %v4469, %v4446
    %v4471 = vadd.f32 %v4470, %v4449
    %v4472 = vadd.f32 %v4471, %v4451
    %v4473 = vadd.f32 %v4472, %v4454
    %v4474 = vadd.f32 %v4473, %v4456
    %v4475 = vrot.slane %v4474, 4
    %v4476 = vadd.f32 %v4474, %v4475
    %v4477 = vrot.slane %v4476, 2
    %v4478 = vadd.f32 %v4476, %v4477
    %v4479 = vrot.slane %v4478, 1
    %v4480 = vadd.f32 %v4478, %v4479
    %v4481 = vmul.f32 %v4480, %v3950
    %v4482 = vsub.f32 %v4419, %v4481
    %v4483 = vsub.f32 %v4421, %v4481
    %v4484 = vsub.f32 %v4424, %v4481
    %v4485 = vsub.f32 %v4426, %v4481
    %v4486 = vsub.f32 %v4429, %v4481
    %v4487 = vsub.f32 %v4431, %v4481
    %v4488 = vsub.f32 %v4434, %v4481
    %v4489 = vsub.f32 %v4436, %v4481
    %v4490 = vsub.f32 %v4439, %v4481
    %v4491 = vsub.f32 %v4441, %v4481
    %v4492 = vsub.f32 %v4444, %v4481
    %v4493 = vsub.f32 %v4446, %v4481
    %v4494 = vsub.f32 %v4449, %v4481
    %v4495 = vsub.f32 %v4451, %v4481
    %v4496 = vsub.f32 %v4454, %v4481
    %v4497 = vsub.f32 %v4456, %v4481
    %v4498 = vmul.f32 %v4482, %v4482
    %v4499 = vmul.f32 %v4483, %v4483
    %v4500 = vmul.f32 %v4484, %v4484
    %v4501 = vmul.f32 %v4485, %v4485
    %v4502 = vmul.f32 %v4486, %v4486
    %v4503 = vmul.f32 %v4487, %v4487
    %v4504 = vmul.f32 %v4488, %v4488
    %v4505 = vmul.f32 %v4489, %v4489
    %v4506 = vmul.f32 %v4490, %v4490
    %v4507 = vmul.f32 %v4491, %v4491
    %v4508 = vmul.f32 %v4492, %v4492
    %v4509 = vmul.f32 %v4493, %v4493
    %v4510 = vmul.f32 %v4494, %v4494
    %v4511 = vmul.f32 %v4495, %v4495
    %v4512 = vmul.f32 %v4496, %v4496
    %v4513 = vmul.f32 %v4497, %v4497
    %v4514 = vadd.f32 %v4498, %v4499
    %v4515 = vadd.f32 %v4514, %v4500
    %v4516 = vadd.f32 %v4515, %v4501
    %v4517 = vadd.f32 %v4516, %v4502
    %v4518 = vadd.f32 %v4517, %v4503
    %v4519 = vadd.f32 %v4518, %v4504
    %v4520 = vadd.f32 %v4519, %v4505
    %v4521 = vadd.f32 %v4520, %v4506
    %v4522 = vadd.f32 %v4521, %v4507
    %v4523 = vadd.f32 %v4522, %v4508
    %v4524 = vadd.f32 %v4523, %v4509
    %v4525 = vadd.f32 %v4524, %v4510
    %v4526 = vadd.f32 %v4525, %v4511
    %v4527 = vadd.f32 %v4526, %v4512
    %v4528 = vadd.f32 %v4527, %v4513
    %v4529 = vrot.slane %v4528, 4
    %v4530 = vadd.f32 %v4528, %v4529
    %v4531 = vrot.slane %v4530, 2
    %v4532 = vadd.f32 %v4530, %v4531
    %v4533 = vrot.slane %v4532, 1
    %v4534 = vadd.f32 %v4532, %v4533
    %v4535 = vmul.f32 %v4534, %v3950
    %v4536 = vadd.f32 %v4535, 1e-05
    %v4537 = vrsqrt.pop %v4536
    %v4538 = vmul.f32 %v4537, %v4536
    %v4539 = vmul.f32 %v4538, %v4537
    %v4540 = vmul.f32 0.5, %v4539
    %v4541 = vsub.f32 1.5, %v4540
    %v4542 = vmul.f32 %v4537, %v4541
    %vm4543 = vweird.f32 %v4536
    %vm4544 = vweird.f32 %v4537
    %vm4545 = vmor %vm4543, %vm4544
    %v4546 = vsel %vm4545, %v4537, %v4542
    %v4547 = vmul.f32 %v4458, %v4546
    %v4549 = vperm.slane %v4547, 0
    %v4551 = vmul.f32 %v4482, %v4549
    %v4552 = vmul.f32 %v4483, %v4549
    %v4553 = vmul.f32 %v4484, %v4549
    %v4554 = vmul.f32 %v4485, %v4549
    %v4555 = vmul.f32 %v4486, %v4549
    %v4556 = vmul.f32 %v4487, %v4549
    %v4557 = vmul.f32 %v4488, %v4549
    %v4558 = vmul.f32 %v4489, %v4549
    %v4559 = vmul.f32 %v4490, %v4549
    %v4560 = vmul.f32 %v4491, %v4549
    %v4561 = vmul.f32 %v4492, %v4549
    %v4562 = vmul.f32 %v4493, %v4549
    %v4563 = vmul.f32 %v4494, %v4549
    %v4564 = vmul.f32 %v4495, %v4549
    %v4565 = vmul.f32 %v4496, %v4549
    %v4566 = vmul.f32 %v4497, %v4549
    %v4568 = vperm.slane %v4459, 0
    %v4570 = vadd.f32 %v4551, %v4568
    %v4571 = vadd.f32 %v4552, %v4568
    %v4572 = vadd.f32 %v4553, %v4568
    %v4573 = vadd.f32 %v4554, %v4568
    %v4574 = vadd.f32 %v4555, %v4568
    %v4575 = vadd.f32 %v4556, %v4568
    %v4576 = vadd.f32 %v4557, %v4568
    %v4577 = vadd.f32 %v4558, %v4568
    %v4578 = vadd.f32 %v4559, %v4568
    %v4579 = vadd.f32 %v4560, %v4568
    %v4580 = vadd.f32 %v4561, %v4568
    %v4581 = vadd.f32 %v4562, %v4568
    %v4582 = vadd.f32 %v4563, %v4568
    %v4583 = vadd.f32 %v4564, %v4568
    %v4584 = vadd.f32 %v4565, %v4568
    %v4585 = vadd.f32 %v4566, %v4568
    %v4586 = vadd.f32 %v4305, %v4570
    %v4587 = vadd.f32 %v4306, %v4571
    %v4588 = vadd.f32 %v4307, %v4572
    %v4589 = vadd.f32 %v4308, %v4573
    %v4590 = vadd.f32 %v4309, %v4574
    %v4591 = vadd.f32 %v4310, %v4575
    %v4592 = vadd.f32 %v4311, %v4576
    %v4593 = vadd.f32 %v4312, %v4577
    %v4594 = vadd.f32 %v4313, %v4578
    %v4595 = vadd.f32 %v4314, %v4579
    %v4596 = vadd.f32 %v4315, %v4580
    %v4597 = vadd.f32 %v4316, %v4581
    %v4598 = vadd.f32 %v4317, %v4582
    %v4599 = vadd.f32 %v4318, %v4583
    %v4600 = vadd.f32 %v4319, %v4584
    %v4601 = vadd.f32 %v4320, %v4585
    %v4602 = vmax.f32 %v4586, 0.0
    %v4603 = vmax.f32 %v4587, 0.0
    %v4604 = vmax.f32 %v4588, 0.0
    %v4605 = vmax.f32 %v4589, 0.0
    %v4606 = vmax.f32 %v4590, 0.0
    %v4607 = vmax.f32 %v4591, 0.0
    %v4608 = vmax.f32 %v4592, 0.0
    %v4609 = vmax.f32 %v4593, 0.0
    %v4610 = vmax.f32 %v4594, 0.0
    %v4611 = vmax.f32 %v4595, 0.0
    %v4612 = vmax.f32 %v4596, 0.0
    %v4613 = vmax.f32 %v4597, 0.0
    %v4614 = vmax.f32 %v4598, 0.0
    %v4615 = vmax.f32 %v4599, 0.0
    %v4616 = vmax.f32 %v4600, 0.0
    %v4617 = vmax.f32 %v4601, 0.0
    %4618 = vst [vmem:[#allocation12] sm:$0xff] %v4602
    %4619 = vst [vmem:[#allocation12 + $0x8] sm:$0xff] %v4603
    %4620 = vst [vmem:[#allocation12 + $0x10] sm:$0xff] %v4604
    %4621 = vst [vmem:[#allocation12 + $0x18] sm:$0xff] %v4605
    %4622 = vst [vmem:[#allocation12 + $0x20] sm:$0xff] %v4606
    %4623 = vst [vmem:[#allocation12 + $0x28] sm:$0xff] %v4607
    %4624 = vst [vmem:[#allocation12 + $0x30] sm:$0xff] %v4608
    %4625 = vst [vmem:[#allocation12 + $0x38] sm:$0xff] %v4609
    %4626 = vst [vmem:[#allocation12 + $0x40] sm:$0xff] %v4610
    %4627 = vst [vmem:[#allocation12 + $0x48] sm:$0xff] %v4611
    %4628 = vst [vmem:[#allocation12 + $0x50] sm:$0xff] %v4612
    %4629 = vst [vmem:[#allocation12 + $0x58] sm:$0xff] %v4613
    %4630 = vst [vmem:[#allocation12 + $0x60] sm:$0xff] %v4614
    %4631 = vst [vmem:[#allocation12 + $0x68] sm:$0xff] %v4615
    %4632 = vst [vmem:[#allocation12 + $0x70] sm:$0xff] %v4616
    %4633 = vst [vmem:[#allocation12 + $0x78] sm:$0xff] %v4617
    // Predicated region
    $region74: #{tpu_custom_call.1} parent=1 // pred_check
      _
    $region75: #{tpu_custom_call.1} parent=1 // pred_check_branch
      %4635 = sbr.rel (0) target = $region77
    $region76: #{tpu_custom_call.1} parent=1 // pred_region
      %4637 = vsyncadd [#allocation5], 0
      %s4638 = sshll.u32 [#allocation12], 4
      %s4639 = int_to_ptr.vmem [resolvable:$true] %s4638
      %s4640 = sshll.u32 %s13, 4
      %s4641 = int_to_ptr.hbm [resolvable:$true] %s4640
      %4646 = dma.vmem_to_hbm [thread:$0]  %s4639, 2048, %s4641, [#allocation5], 128, 128, 8
    $region77: #{tpu_custom_call.1} parent=1 // pred_fallthru
      _
    // Predicated region
    $region78: #{tpu_custom_call.1} parent=1 // pred_check
      _
    $region79: #{tpu_custom_call.1} parent=1 // pred_check_branch
      %4648 = sbr.rel (0) target = $region81
    $region80: #{tpu_custom_call.1} parent=1 // pred_region
      %4650 = dma.done [#allocation5], 2048
    $region81: #{tpu_custom_call.1} parent=1 // pred_fallthru
      _
    %4651 = vsyncpa [#allocation4], 1
    %4652 = vsyncpa [#allocation7], 1
    %4653 = vsyncpa [#allocation10], 1
    %4654 = vsyncpa [#allocation5], 1

</llo_original>
